<compile_context>
chip_gen: v6e
topology: v6e:2x2x1
jax: 0.10.0
libtpu: 0.0.40
codegen_flags: <defaults>
</compile_context>

<pallas_src>
import functools

import jax
import jax.numpy as jnp
from jax.experimental import pallas as pl
from jax.experimental.pallas import tpu as pltpu


# ----------------------------------------------------------------------------
# Kernel helpers
# ----------------------------------------------------------------------------

def _layernorm(x, g, b, eps):
    mean = jnp.mean(x, axis=-1, keepdims=True)
    xc = x - mean
    var = jnp.mean(xc * xc, axis=-1, keepdims=True)
    return xc * jax.lax.rsqrt(var + eps) * g + b


def _gelu_tanh(x):
    # TODO(synk): torchvision swin3d uses exact erf-GELU; tanh approximation here.
    c = jnp.float32(0.7978845608028654)  # sqrt(2/pi)
    return 0.5 * x * (1.0 + jnp.tanh(c * (x + 0.044715 * x * x * x)))


# ----------------------------------------------------------------------------
# Single fused kernel: whole VideoEncoder forward for one batch element
# ----------------------------------------------------------------------------

def _video_encoder_kernel(tokens_ref, patch_w_ref, patch_vec_ref,
                          qkv_w_ref, qkv_b_ref, bias_ref, seg_ref,
                          proj_w_ref, fc1_w_ref, fc1_b_ref, fc2_w_ref,
                          blk_vec_ref, head_vec_ref, *head_and_out,
                          depth, num_heads, eps, scale, n_proj):
    o_ref = head_and_out[-1]
    head_wb = head_and_out[:-1]
    D = patch_w_ref.shape[1]

    seg = seg_ref[...]           # (H*N, D) block-diagonal head-segment mask (f32)
    pvec = patch_vec_ref[...]    # (3, D): conv bias, patch-LN gamma, patch-LN beta

    # ---- patch embed: patchify matmul + bias + LayerNorm ---------------------
    x = tokens_ref[0].astype(jnp.bfloat16)                               # (N, Kpad)
    y = jnp.dot(x, patch_w_ref[...], preferred_element_type=jnp.float32)
    y = y + pvec[0:1]
    h = _layernorm(y, pvec[1:2], pvec[2:3], eps)                         # (N, D) f32

    # ---- transformer blocks (window == full token grid, shift = 0) -----------
    for d in range(depth):
        vec = blk_vec_ref[d]     # (6, D): ln1_g, ln1_b, proj_b, ln2_g, ln2_b, fc2_b

        # LN1 -> fused QKV projection (resident in VMEM, no HBM round trip)
        a = _layernorm(h, vec[0:1], vec[1:2], eps)
        qkv = jnp.dot(a.astype(jnp.bfloat16), qkv_w_ref[d],
                      preferred_element_type=jnp.float32) + qkv_b_ref[d]
        q = qkv[:, 0 * D:1 * D]          # 128-lane-aligned slices only
        k = qkv[:, 1 * D:2 * D]
        v = qkv[:, 2 * D:3 * D]

        # Lane-dense all-head attention: every head's scores are columns of one
        # (N, H*N) slab produced by one full-K matmul against a block-diagonal
        # key matrix.  The shared row max is a valid stabilizer for every head;
        # per-head denominators come out of the MXU via the segment mask.
        k_bd = jnp.concatenate([k] * num_heads, axis=0) * seg            # (H*N, D)
        s = jax.lax.dot_general(q, k_bd, (((1,), (1,)), ((), ())),
                                preferred_element_type=jnp.float32)      # (N, H*N)
        s = s * scale + bias_ref[d]
        m = jnp.max(s, axis=-1, keepdims=True)
        p = jnp.exp(s - m)
        v_bd = jnp.concatenate([v] * num_heads, axis=0) * seg            # (H*N, D)
        o_un = jnp.dot(p, v_bd, preferred_element_type=jnp.float32)      # (N, D)
        den = jnp.dot(p, seg, preferred_element_type=jnp.float32)        # (N, D)
        attn = o_un * pl.reciprocal(den, approx=True)

        # single full-K output projection + residual
        # (dropout / stochastic depth = identity in eval mode)
        h = h + jnp.dot(attn.astype(jnp.bfloat16), proj_w_ref[d],
                        preferred_element_type=jnp.float32) + vec[2:3]

        # LN2 -> FC1 + GELU -> FC2 -> residual
        a2 = _layernorm(h, vec[3:4], vec[4:5], eps)
        g1 = jnp.dot(a2.astype(jnp.bfloat16), fc1_w_ref[d],
                     preferred_element_type=jnp.float32) + fc1_b_ref[d]
        g1 = _gelu_tanh(g1)
        g2 = jnp.dot(g1.astype(jnp.bfloat16), fc2_w_ref[d],
                     preferred_element_type=jnp.float32) + vec[5:6]
        h = h + g2

    # ---- epilogue: backbone norm -> token mean pool -> proj_norm -> head MLP -
    hv = head_vec_ref[...]       # (4, D): backbone norm g/b, proj_norm g/b
    hn = _layernorm(h, hv[0:1], hv[1:2], eps)
    z = jnp.mean(hn, axis=0, keepdims=True)                              # (1, D)
    z = _layernorm(z, hv[2:3], hv[3:4], eps)
    for i in range(n_proj):
        w = head_wb[2 * i][...]
        b = head_wb[2 * i + 1][...]
        z = jnp.dot(z.astype(jnp.bfloat16), w,
                    preferred_element_type=jnp.float32) + b
        if i < n_proj - 1:
            # TODO(synk): create_mlp's exact activation/dropout placement is not
            # in the reference source; ReLU between Linears, dropout = identity.
            z = jnp.maximum(z, 0.0)
    o_ref[0] = z.astype(o_ref.dtype)


# ----------------------------------------------------------------------------
# Wrapper: layout plumbing in JAX, all hot compute inside the fused kernel
# ----------------------------------------------------------------------------

def video_encoder_forward(params, x, *, patch, embed_dim, num_heads, depth,
                          out_dim):
    # x: (B, T, C, H, W) -> (B, C, T, H, W)   (x.permute(0, 2, 1, 3, 4))
    x = jnp.transpose(x, (0, 2, 1, 3, 4))
    B, C, T, H, W = x.shape
    pt, ph, pw = patch
    Tn, Hn, Wn = T // pt, H // ph, W // pw
    N = Tn * Hn * Wn
    D = embed_dim

    # Patchify (Conv3d kernel == stride == patch as a matmul); zero-pad the
    # contraction dim C*pt*ph*pw (96) up to the lane multiple used by patch_w.
    xp = x.reshape(B, C, Tn, pt, Hn, ph, Wn, pw)
    xp = jnp.transpose(xp, (0, 2, 4, 6, 1, 3, 5, 7))
    tokens = xp.reshape(B, N, C * pt * ph * pw)
    kpad = params["patch_w"].shape[0]
    tokens = jnp.pad(tokens, ((0, 0), (0, 0), (0, kpad - tokens.shape[-1])))

    hd = params["fc1_w"].shape[2]
    hn_tok = num_heads * N
    n_proj = len(params["head_w"])
    out_pad = params["head_b"][-1].shape[1]
    dh = D // num_heads

    c2 = lambda b: (0, 0)
    c3 = lambda b: (0, 0, 0)
    in_specs = [
        pl.BlockSpec((1, N, kpad), lambda b: (b, 0, 0)),   # tokens, per batch elem
        pl.BlockSpec((kpad, D), c2),                       # weights: constant maps
        pl.BlockSpec((3, D), c2),                          #   -> stay VMEM-resident
        pl.BlockSpec((depth, D, 3 * D), c3),
        pl.BlockSpec((depth, 1, 3 * D), c3),
        pl.BlockSpec((depth, N, hn_tok), c3),
        pl.BlockSpec((hn_tok, D), c2),
        pl.BlockSpec((depth, D, D), c3),
        pl.BlockSpec((depth, D, hd), c3),
        pl.BlockSpec((depth, 1, hd), c3),
        pl.BlockSpec((depth, hd, D), c3),
        pl.BlockSpec((depth, 6, D), c3),
        pl.BlockSpec((4, D), c2),
    ]
    args = [tokens, params["patch_w"], params["patch_vec"],
            params["qkv_w"], params["qkv_b"], params["bias_slab"], params["seg"],
            params["proj_w"], params["fc1_w"], params["fc1_b"], params["fc2_w"],
            params["blk_vec"], params["head_vec"]]
    for w, b in zip(params["head_w"], params["head_b"]):
        in_specs.append(pl.BlockSpec(w.shape, c2))
        args.append(w)
        in_specs.append(pl.BlockSpec(b.shape, c2))
        args.append(b)

    out = pl.pallas_call(
        functools.partial(_video_encoder_kernel, depth=depth,
                          num_heads=num_heads, eps=1e-5,
                          scale=1.0 / float(dh) ** 0.5, n_proj=n_proj),
        out_shape=jax.ShapeDtypeStruct((B, 1, out_pad), jnp.float32),
        grid=(B,),
        in_specs=in_specs,
        out_specs=pl.BlockSpec((1, 1, out_pad), lambda b: (b, 0, 0)),
        compiler_params=pltpu.CompilerParams(dimension_semantics=("parallel",)),
    )(*args)
    return out[:, 0, :out_dim]


# ----------------------------------------------------------------------------
# Parameter construction (deterministic, synthetic, kernel-ready packing)
# ----------------------------------------------------------------------------

def _trunc_normal(key, shape, std=0.02):
    return jax.random.truncated_normal(key, -2.0, 2.0, shape, jnp.float32) * std


def init_params(key, *, in_ch, patch, embed_dim, num_heads, depth,
                n_tokens, mlp_ratio, mlp_layers):
    D, N, Hh = embed_dim, n_tokens, num_heads
    dh = D // Hh
    hidden = D * mlp_ratio
    k_raw = in_ch * patch[0] * patch[1] * patch[2]
    kpad = ((k_raw + 127) // 128) * 128
    keys = iter(jax.random.split(key, 8 * depth + 16))
    params = {}

    # patch embedding (Conv3d kernel==stride -> matmul) + LayerNorm
    pw = _trunc_normal(next(keys), (k_raw, D))
    params["patch_w"] = jnp.pad(pw, ((0, kpad - k_raw), (0, 0))).astype(jnp.bfloat16)
    params["patch_vec"] = jnp.stack([
        jnp.zeros((D,), jnp.float32),     # conv bias
        jnp.ones((D,), jnp.float32),      # patch LN gamma
        jnp.zeros((D,), jnp.float32),     # patch LN beta
    ])

    # transformer blocks, stacked along a leading depth axis
    qkv_w, qkv_b, bias_slab, proj_w = [], [], [], []
    fc1_w, fc1_b, fc2_w, blk_vec = [], [], [], []
    for _ in range(depth):
        qkv_w.append(_trunc_normal(next(keys), (D, 3 * D)))
        qkv_b.append(jnp.zeros((1, 3 * D), jnp.float32))
        # per-head additive attention bias (relative-position-bias table gathered
        # for the fixed full-grid window), pre-packed to the lane-dense
        # (N, H*N) slab layout used by the kernel.
        rel = _trunc_normal(next(keys), (Hh, N, N))
        bias_slab.append(jnp.transpose(rel, (1, 0, 2)).reshape(N, Hh * N))
        proj_w.append(_trunc_normal(next(keys), (D, D)))
        fc1_w.append(_trunc_normal(next(keys), (D, hidden)))
        fc1_b.append(jnp.zeros((1, hidden), jnp.float32))
        fc2_w.append(_trunc_normal(next(keys), (hidden, D)))
        blk_vec.append(jnp.stack([
            jnp.ones((D,), jnp.float32), jnp.zeros((D,), jnp.float32),   # ln1
            jnp.zeros((D,), jnp.float32),                                # proj_b
            jnp.ones((D,), jnp.float32), jnp.zeros((D,), jnp.float32),   # ln2
            jnp.zeros((D,), jnp.float32),                                # fc2_b
        ]))
    params["qkv_w"] = jnp.stack(qkv_w).astype(jnp.bfloat16)
    params["qkv_b"] = jnp.stack(qkv_b)
    params["bias_slab"] = jnp.stack(bias_slab)
    params["proj_w"] = jnp.stack(proj_w).astype(jnp.bfloat16)
    params["fc1_w"] = jnp.stack(fc1_w).astype(jnp.bfloat16)
    params["fc1_b"] = jnp.stack(fc1_b)
    params["fc2_w"] = jnp.stack(fc2_w).astype(jnp.bfloat16)
    params["blk_vec"] = jnp.stack(blk_vec)

    # block-diagonal head-segment mask (H*N, D): 1 where row's head == column's head
    row_h = jnp.arange(Hh * N)[:, None] // N
    col_h = jnp.arange(D)[None, :] // dh
    params["seg"] = (row_h == col_h).astype(jnp.float32)

    # final backbone norm + VideoEncoder proj_norm (LayerNorm)
    params["head_vec"] = jnp.stack([
        jnp.ones((D,), jnp.float32), jnp.zeros((D,), jnp.float32),
        jnp.ones((D,), jnp.float32), jnp.zeros((D,), jnp.float32),
    ])

    # VideoEncoder head (create_mlp): trunc-normal weights, zero bias, dims
    # lane-padded to 128 so every kernel store is lane-dense (sliced in wrapper).
    head_w, head_b = [], []
    d_in = D
    for d_out in mlp_layers:
        w = _trunc_normal(next(keys), (d_in, d_out))      # nn.init.trunc_normal_(std=0.02)
        in_pad = ((d_in + 127) // 128) * 128
        out_pad = ((d_out + 127) // 128) * 128
        w = jnp.pad(w, ((0, in_pad - d_in), (0, out_pad - d_out)))
        head_w.append(w.astype(jnp.bfloat16))
        head_b.append(jnp.zeros((1, out_pad), jnp.float32))  # nn.init.zeros_
        d_in = d_out
    params["head_w"] = head_w
    params["head_b"] = head_b
    return params


# ----------------------------------------------------------------------------
# Main
# ----------------------------------------------------------------------------

if __name__ == "__main__":
    # Small shapes consistent with the module's video input (B, T, C, H, W).
    B, T, C, H, W = 2, 4, 3, 16, 16
    patch = (2, 4, 4)                 # swin3d patch size
    embed_dim = 128                   # scaled backbone: lane-dense features
    num_heads = 4
    depth = 2                         # scaled down from swin3d_b depths [2,2,18,2]
    mlp_ratio = 4
    mlp_layers = [64, 32]             # config['mlp_layers']
    n_tokens = (T // patch[0]) * (H // patch[1]) * (W // patch[2])   # 32

    key = jax.random.PRNGKey(0)
    k_param, k_x = jax.random.split(key)
    params = init_params(
        k_param, in_ch=C, patch=patch, embed_dim=embed_dim, num_heads=num_heads,
        depth=depth, n_tokens=n_tokens, mlp_ratio=mlp_ratio, mlp_layers=mlp_layers)

    x = jax.random.normal(k_x, (B, T, C, H, W), jnp.float32)

    fwd = jax.jit(functools.partial(
        video_encoder_forward, patch=patch, embed_dim=embed_dim,
        num_heads=num_heads, depth=depth, out_dim=mlp_layers[-1]))
    out = fwd(params, x)
    jax.block_until_ready(out)

    assert out.shape == (B, mlp_layers[-1]), out.shape
    assert out.dtype == jnp.float32
    print("KERNEL_OK")
</pallas_src>

<mosaic_0001>
module attributes {stable_mosaic.version = 11 : i64} {
  func.func @_video_encoder_kernel(%arg0: i32, %arg1: memref<1x32x128xf32, #tpu.memory_space<vmem>>, %arg2: memref<128x128xbf16, #tpu.memory_space<vmem>>, %arg3: memref<3x128xf32, #tpu.memory_space<vmem>>, %arg4: memref<2x128x384xbf16, #tpu.memory_space<vmem>>, %arg5: memref<2x1x384xf32, #tpu.memory_space<vmem>>, %arg6: memref<2x32x128xf32, #tpu.memory_space<vmem>>, %arg7: memref<128x128xf32, #tpu.memory_space<vmem>>, %arg8: memref<2x128x128xbf16, #tpu.memory_space<vmem>>, %arg9: memref<2x128x512xbf16, #tpu.memory_space<vmem>>, %arg10: memref<2x1x512xf32, #tpu.memory_space<vmem>>, %arg11: memref<2x512x128xbf16, #tpu.memory_space<vmem>>, %arg12: memref<2x6x128xf32, #tpu.memory_space<vmem>>, %arg13: memref<4x128xf32, #tpu.memory_space<vmem>>, %arg14: memref<128x128xbf16, #tpu.memory_space<vmem>>, %arg15: memref<1x128xf32, #tpu.memory_space<vmem>>, %arg16: memref<128x128xbf16, #tpu.memory_space<vmem>>, %arg17: memref<1x128xf32, #tpu.memory_space<vmem>>, %arg18: memref<1x1x128xf32, #tpu.memory_space<vmem>>) attributes {dimension_semantics = [#tpu.dimension_semantics<parallel>], iteration_bounds = array<i64: 2>, scalar_prefetch = 0 : i64, scratch_operands = 0 : i64, tpu.core_type = #tpu.core_type<tc>, window_params = [{transform_indices = @transform_0, window_bounds = array<i64: 1, 32, 128>}, {pipeline_mode = #tpu.pipeline_mode<synchronous>, transform_indices = @transform_1, window_bounds = array<i64: 128, 128>}, {pipeline_mode = #tpu.pipeline_mode<synchronous>, transform_indices = @transform_2, window_bounds = array<i64: 3, 128>}, {pipeline_mode = #tpu.pipeline_mode<synchronous>, transform_indices = @transform_3, window_bounds = array<i64: 2, 128, 384>}, {pipeline_mode = #tpu.pipeline_mode<synchronous>, transform_indices = @transform_4, window_bounds = array<i64: 2, 1, 384>}, {pipeline_mode = #tpu.pipeline_mode<synchronous>, transform_indices = @transform_5, window_bounds = array<i64: 2, 32, 128>}, {pipeline_mode = #tpu.pipeline_mode<synchronous>, transform_indices = @transform_6, window_bounds = array<i64: 128, 128>}, {pipeline_mode = #tpu.pipeline_mode<synchronous>, transform_indices = @transform_7, window_bounds = array<i64: 2, 128, 128>}, {pipeline_mode = #tpu.pipeline_mode<synchronous>, transform_indices = @transform_8, window_bounds = array<i64: 2, 128, 512>}, {pipeline_mode = #tpu.pipeline_mode<synchronous>, transform_indices = @transform_9, window_bounds = array<i64: 2, 1, 512>}, {pipeline_mode = #tpu.pipeline_mode<synchronous>, transform_indices = @transform_10, window_bounds = array<i64: 2, 512, 128>}, {pipeline_mode = #tpu.pipeline_mode<synchronous>, transform_indices = @transform_11, window_bounds = array<i64: 2, 6, 128>}, {pipeline_mode = #tpu.pipeline_mode<synchronous>, transform_indices = @transform_12, window_bounds = array<i64: 4, 128>}, {pipeline_mode = #tpu.pipeline_mode<synchronous>, transform_indices = @transform_13, window_bounds = array<i64: 128, 128>}, {pipeline_mode = #tpu.pipeline_mode<synchronous>, transform_indices = @transform_14, window_bounds = array<i64: 1, 128>}, {pipeline_mode = #tpu.pipeline_mode<synchronous>, transform_indices = @transform_15, window_bounds = array<i64: 128, 128>}, {pipeline_mode = #tpu.pipeline_mode<synchronous>, transform_indices = @transform_16, window_bounds = array<i64: 1, 128>}, {transform_indices = @transform_17, window_bounds = array<i64: 1, 1, 128>}]} {
    %c0 = arith.constant 0 : index
    %c0_0 = arith.constant 0 : index
    %0 = vector.load %arg7[%c0, %c0_0] : memref<128x128xf32, #tpu.memory_space<vmem>>, vector<128x128xf32>
    %c0_1 = arith.constant 0 : index
    %c0_2 = arith.constant 0 : index
    %1 = vector.load %arg3[%c0_1, %c0_2] : memref<3x128xf32, #tpu.memory_space<vmem>>, vector<3x128xf32>
    %c0_3 = arith.constant 0 : index
    %c0_4 = arith.constant 0 : index
    %c0_5 = arith.constant 0 : index
    %2 = vector.load %arg1[%c0_3, %c0_4, %c0_5] : memref<1x32x128xf32, #tpu.memory_space<vmem>>, vector<1x32x128xf32>
    %3 = vector.shape_cast %2 : vector<1x32x128xf32> to vector<32x128xf32>
    %4 = arith.truncf %3 : vector<32x128xf32> to vector<32x128xbf16>
    %c0_6 = arith.constant 0 : index
    %c0_7 = arith.constant 0 : index
    %5 = vector.load %arg2[%c0_6, %c0_7] : memref<128x128xbf16, #tpu.memory_space<vmem>>, vector<128x128xbf16>
    %cst = arith.constant dense<0.000000e+00> : vector<32x128xf32>
    %6 = tpu.matmul %4, %5, %cst {dimension_numbers = #tpu.dot_dimension_numbers<[1], [0], [0], [1], [0, 0, 1, 1], [], []>} : vector<32x128xbf16>, vector<128x128xbf16>, vector<32x128xf32> -> vector<32x128xf32>
    %7 = vector.extract_strided_slice %1 {offsets = [0, 0], sizes = [1, 128], strides = [1, 1]} : vector<3x128xf32> to vector<1x128xf32>
    %8 = vector.broadcast %7 : vector<1x128xf32> to vector<32x128xf32>
    %9 = arith.addf %6, %8 : vector<32x128xf32>
    %10 = vector.extract_strided_slice %1 {offsets = [1, 0], sizes = [1, 128], strides = [1, 1]} : vector<3x128xf32> to vector<1x128xf32>
    %11 = vector.extract_strided_slice %1 {offsets = [2, 0], sizes = [1, 128], strides = [1, 1]} : vector<3x128xf32> to vector<1x128xf32>
    %cst_8 = arith.constant dense<0.000000e+00> : vector<32xf32>
    %12 = vector.multi_reduction <add>, %9, %cst_8 [1] : vector<32x128xf32> to vector<32xf32>
    %13 = vector.shape_cast %12 : vector<32xf32> to vector<32x1xf32>
    %cst_9 = arith.constant 1.280000e+02 : f32
    %14 = vector.broadcast %cst_9 : f32 to vector<32x1xf32>
    %15 = arith.divf %13, %14 : vector<32x1xf32>
    %16 = vector.broadcast %15 : vector<32x1xf32> to vector<32x128xf32>
    %17 = arith.subf %9, %16 : vector<32x128xf32>
    %18 = arith.mulf %17, %17 : vector<32x128xf32>
    %cst_10 = arith.constant dense<0.000000e+00> : vector<32xf32>
    %19 = vector.multi_reduction <add>, %18, %cst_10 [1] : vector<32x128xf32> to vector<32xf32>
    %20 = vector.shape_cast %19 : vector<32xf32> to vector<32x1xf32>
    %cst_11 = arith.constant 1.280000e+02 : f32
    %21 = vector.broadcast %cst_11 : f32 to vector<32x1xf32>
    %22 = arith.divf %20, %21 : vector<32x1xf32>
    %cst_12 = arith.constant 9.99999974E-6 : f32
    %23 = vector.broadcast %cst_12 : f32 to vector<32x1xf32>
    %24 = arith.addf %22, %23 : vector<32x1xf32>
    %25 = math.rsqrt %24 : vector<32x1xf32>
    %26 = vector.broadcast %25 : vector<32x1xf32> to vector<32x128xf32>
    %27 = arith.mulf %17, %26 : vector<32x128xf32>
    %28 = vector.broadcast %10 : vector<1x128xf32> to vector<32x128xf32>
    %29 = arith.mulf %27, %28 : vector<32x128xf32>
    %30 = vector.broadcast %11 : vector<1x128xf32> to vector<32x128xf32>
    %31 = arith.addf %29, %30 : vector<32x128xf32>
    %c0_13 = arith.constant 0 : index
    %c0_14 = arith.constant 0 : index
    %c0_15 = arith.constant 0 : index
    %32 = vector.load %arg12[%c0_13, %c0_14, %c0_15] : memref<2x6x128xf32, #tpu.memory_space<vmem>>, vector<1x6x128xf32>
    %33 = vector.shape_cast %32 : vector<1x6x128xf32> to vector<6x128xf32>
    %34 = vector.extract_strided_slice %33 {offsets = [0, 0], sizes = [1, 128], strides = [1, 1]} : vector<6x128xf32> to vector<1x128xf32>
    %35 = vector.extract_strided_slice %33 {offsets = [1, 0], sizes = [1, 128], strides = [1, 1]} : vector<6x128xf32> to vector<1x128xf32>
    %cst_16 = arith.constant dense<0.000000e+00> : vector<32xf32>
    %36 = vector.multi_reduction <add>, %31, %cst_16 [1] : vector<32x128xf32> to vector<32xf32>
    %37 = vector.shape_cast %36 : vector<32xf32> to vector<32x1xf32>
    %cst_17 = arith.constant 1.280000e+02 : f32
    %38 = vector.broadcast %cst_17 : f32 to vector<32x1xf32>
    %39 = arith.divf %37, %38 : vector<32x1xf32>
    %40 = vector.broadcast %39 : vector<32x1xf32> to vector<32x128xf32>
    %41 = arith.subf %31, %40 : vector<32x128xf32>
    %42 = arith.mulf %41, %41 : vector<32x128xf32>
    %cst_18 = arith.constant dense<0.000000e+00> : vector<32xf32>
    %43 = vector.multi_reduction <add>, %42, %cst_18 [1] : vector<32x128xf32> to vector<32xf32>
    %44 = vector.shape_cast %43 : vector<32xf32> to vector<32x1xf32>
    %cst_19 = arith.constant 1.280000e+02 : f32
    %45 = vector.broadcast %cst_19 : f32 to vector<32x1xf32>
    %46 = arith.divf %44, %45 : vector<32x1xf32>
    %cst_20 = arith.constant 9.99999974E-6 : f32
    %47 = vector.broadcast %cst_20 : f32 to vector<32x1xf32>
    %48 = arith.addf %46, %47 : vector<32x1xf32>
    %49 = math.rsqrt %48 : vector<32x1xf32>
    %50 = vector.broadcast %49 : vector<32x1xf32> to vector<32x128xf32>
    %51 = arith.mulf %41, %50 : vector<32x128xf32>
    %52 = vector.broadcast %34 : vector<1x128xf32> to vector<32x128xf32>
    %53 = arith.mulf %51, %52 : vector<32x128xf32>
    %54 = vector.broadcast %35 : vector<1x128xf32> to vector<32x128xf32>
    %55 = arith.addf %53, %54 : vector<32x128xf32>
    %56 = arith.truncf %55 : vector<32x128xf32> to vector<32x128xbf16>
    %c0_21 = arith.constant 0 : index
    %c0_22 = arith.constant 0 : index
    %c0_23 = arith.constant 0 : index
    %57 = vector.load %arg4[%c0_21, %c0_22, %c0_23] : memref<2x128x384xbf16, #tpu.memory_space<vmem>>, vector<1x128x384xbf16>
    %58 = vector.shape_cast %57 : vector<1x128x384xbf16> to vector<128x384xbf16>
    %cst_24 = arith.constant dense<0.000000e+00> : vector<32x384xf32>
    %59 = tpu.matmul %56, %58, %cst_24 {dimension_numbers = #tpu.dot_dimension_numbers<[1], [0], [0], [1], [0, 0, 1, 1], [], []>} : vector<32x128xbf16>, vector<128x384xbf16>, vector<32x384xf32> -> vector<32x384xf32>
    %c0_25 = arith.constant 0 : index
    %c0_26 = arith.constant 0 : index
    %c0_27 = arith.constant 0 : index
    %60 = vector.load %arg5[%c0_25, %c0_26, %c0_27] : memref<2x1x384xf32, #tpu.memory_space<vmem>>, vector<1x1x384xf32>
    %61 = vector.shape_cast %60 : vector<1x1x384xf32> to vector<1x384xf32>
    %62 = vector.broadcast %61 : vector<1x384xf32> to vector<32x384xf32>
    %63 = arith.addf %59, %62 : vector<32x384xf32>
    %64 = vector.extract_strided_slice %63 {offsets = [0, 0], sizes = [32, 128], strides = [1, 1]} : vector<32x384xf32> to vector<32x128xf32>
    %65 = vector.extract_strided_slice %63 {offsets = [0, 128], sizes = [32, 128], strides = [1, 1]} : vector<32x384xf32> to vector<32x128xf32>
    %66 = vector.extract_strided_slice %63 {offsets = [0, 256], sizes = [32, 128], strides = [1, 1]} : vector<32x384xf32> to vector<32x128xf32>
    %67 = tpu.concatenate %65, %65, %65, %65 in 0 : vector<32x128xf32>, vector<32x128xf32>, vector<32x128xf32>, vector<32x128xf32> -> vector<128x128xf32>
    %68 = arith.mulf %67, %0 : vector<128x128xf32>
    %cst_28 = arith.constant dense<0.000000e+00> : vector<32x128xf32>
    %69 = tpu.matmul %64, %68, %cst_28 {dimension_numbers = #tpu.dot_dimension_numbers<[1], [1], [0], [0], [0, 0, 1, 0], [], []>} : vector<32x128xf32>, vector<128x128xf32>, vector<32x128xf32> -> vector<32x128xf32>
    %cst_29 = arith.constant 0.176776692 : f32
    %70 = vector.broadcast %cst_29 : f32 to vector<32x128xf32>
    %71 = arith.mulf %69, %70 : vector<32x128xf32>
    %c0_30 = arith.constant 0 : index
    %c0_31 = arith.constant 0 : index
    %c0_32 = arith.constant 0 : index
    %72 = vector.load %arg6[%c0_30, %c0_31, %c0_32] : memref<2x32x128xf32, #tpu.memory_space<vmem>>, vector<1x32x128xf32>
    %73 = vector.shape_cast %72 : vector<1x32x128xf32> to vector<32x128xf32>
    %74 = arith.addf %71, %73 : vector<32x128xf32>
    %cst_33 = arith.constant dense<0xFF800000> : vector<32xf32>
    %75 = vector.multi_reduction <maximumf>, %74, %cst_33 [1] : vector<32x128xf32> to vector<32xf32>
    %76 = vector.shape_cast %75 : vector<32xf32> to vector<32x1xf32>
    %77 = vector.broadcast %76 : vector<32x1xf32> to vector<32x128xf32>
    %78 = arith.subf %74, %77 : vector<32x128xf32>
    %79 = math.exp %78 : vector<32x128xf32>
    %80 = tpu.concatenate %66, %66, %66, %66 in 0 : vector<32x128xf32>, vector<32x128xf32>, vector<32x128xf32>, vector<32x128xf32> -> vector<128x128xf32>
    %81 = arith.mulf %80, %0 : vector<128x128xf32>
    %cst_34 = arith.constant dense<0.000000e+00> : vector<32x128xf32>
    %82 = tpu.matmul %79, %81, %cst_34 {dimension_numbers = #tpu.dot_dimension_numbers<[1], [0], [0], [1], [0, 0, 1, 1], [], []>} : vector<32x128xf32>, vector<128x128xf32>, vector<32x128xf32> -> vector<32x128xf32>
    %cst_35 = arith.constant dense<0.000000e+00> : vector<32x128xf32>
    %83 = tpu.matmul %79, %0, %cst_35 {dimension_numbers = #tpu.dot_dimension_numbers<[1], [0], [0], [1], [0, 0, 1, 1], [], []>} : vector<32x128xf32>, vector<128x128xf32>, vector<32x128xf32> -> vector<32x128xf32>
    %84 = tpu.reciprocal %83 {approx = true} : vector<32x128xf32> -> vector<32x128xf32>
    %85 = arith.mulf %82, %84 : vector<32x128xf32>
    %86 = arith.truncf %85 : vector<32x128xf32> to vector<32x128xbf16>
    %c0_36 = arith.constant 0 : index
    %c0_37 = arith.constant 0 : index
    %c0_38 = arith.constant 0 : index
    %87 = vector.load %arg8[%c0_36, %c0_37, %c0_38] : memref<2x128x128xbf16, #tpu.memory_space<vmem>>, vector<1x128x128xbf16>
    %88 = vector.shape_cast %87 : vector<1x128x128xbf16> to vector<128x128xbf16>
    %cst_39 = arith.constant dense<0.000000e+00> : vector<32x128xf32>
    %89 = tpu.matmul %86, %88, %cst_39 {dimension_numbers = #tpu.dot_dimension_numbers<[1], [0], [0], [1], [0, 0, 1, 1], [], []>} : vector<32x128xbf16>, vector<128x128xbf16>, vector<32x128xf32> -> vector<32x128xf32>
    %90 = arith.addf %31, %89 : vector<32x128xf32>
    %91 = vector.extract_strided_slice %33 {offsets = [2, 0], sizes = [1, 128], strides = [1, 1]} : vector<6x128xf32> to vector<1x128xf32>
    %92 = vector.broadcast %91 : vector<1x128xf32> to vector<32x128xf32>
    %93 = arith.addf %90, %92 : vector<32x128xf32>
    %94 = vector.extract_strided_slice %33 {offsets = [3, 0], sizes = [1, 128], strides = [1, 1]} : vector<6x128xf32> to vector<1x128xf32>
    %95 = vector.extract_strided_slice %33 {offsets = [4, 0], sizes = [1, 128], strides = [1, 1]} : vector<6x128xf32> to vector<1x128xf32>
    %cst_40 = arith.constant dense<0.000000e+00> : vector<32xf32>
    %96 = vector.multi_reduction <add>, %93, %cst_40 [1] : vector<32x128xf32> to vector<32xf32>
    %97 = vector.shape_cast %96 : vector<32xf32> to vector<32x1xf32>
    %cst_41 = arith.constant 1.280000e+02 : f32
    %98 = vector.broadcast %cst_41 : f32 to vector<32x1xf32>
    %99 = arith.divf %97, %98 : vector<32x1xf32>
    %100 = vector.broadcast %99 : vector<32x1xf32> to vector<32x128xf32>
    %101 = arith.subf %93, %100 : vector<32x128xf32>
    %102 = arith.mulf %101, %101 : vector<32x128xf32>
    %cst_42 = arith.constant dense<0.000000e+00> : vector<32xf32>
    %103 = vector.multi_reduction <add>, %102, %cst_42 [1] : vector<32x128xf32> to vector<32xf32>
    %104 = vector.shape_cast %103 : vector<32xf32> to vector<32x1xf32>
    %cst_43 = arith.constant 1.280000e+02 : f32
    %105 = vector.broadcast %cst_43 : f32 to vector<32x1xf32>
    %106 = arith.divf %104, %105 : vector<32x1xf32>
    %cst_44 = arith.constant 9.99999974E-6 : f32
    %107 = vector.broadcast %cst_44 : f32 to vector<32x1xf32>
    %108 = arith.addf %106, %107 : vector<32x1xf32>
    %109 = math.rsqrt %108 : vector<32x1xf32>
    %110 = vector.broadcast %109 : vector<32x1xf32> to vector<32x128xf32>
    %111 = arith.mulf %101, %110 : vector<32x128xf32>
    %112 = vector.broadcast %94 : vector<1x128xf32> to vector<32x128xf32>
    %113 = arith.mulf %111, %112 : vector<32x128xf32>
    %114 = vector.broadcast %95 : vector<1x128xf32> to vector<32x128xf32>
    %115 = arith.addf %113, %114 : vector<32x128xf32>
    %116 = arith.truncf %115 : vector<32x128xf32> to vector<32x128xbf16>
    %c0_45 = arith.constant 0 : index
    %c0_46 = arith.constant 0 : index
    %c0_47 = arith.constant 0 : index
    %117 = vector.load %arg9[%c0_45, %c0_46, %c0_47] : memref<2x128x512xbf16, #tpu.memory_space<vmem>>, vector<1x128x512xbf16>
    %118 = vector.shape_cast %117 : vector<1x128x512xbf16> to vector<128x512xbf16>
    %cst_48 = arith.constant dense<0.000000e+00> : vector<32x512xf32>
    %119 = tpu.matmul %116, %118, %cst_48 {dimension_numbers = #tpu.dot_dimension_numbers<[1], [0], [0], [1], [0, 0, 1, 1], [], []>} : vector<32x128xbf16>, vector<128x512xbf16>, vector<32x512xf32> -> vector<32x512xf32>
    %c0_49 = arith.constant 0 : index
    %c0_50 = arith.constant 0 : index
    %c0_51 = arith.constant 0 : index
    %120 = vector.load %arg10[%c0_49, %c0_50, %c0_51] : memref<2x1x512xf32, #tpu.memory_space<vmem>>, vector<1x1x512xf32>
    %121 = vector.shape_cast %120 : vector<1x1x512xf32> to vector<1x512xf32>
    %122 = vector.broadcast %121 : vector<1x512xf32> to vector<32x512xf32>
    %123 = arith.addf %119, %122 : vector<32x512xf32>
    %cst_52 = arith.constant 5.000000e-01 : f32
    %124 = vector.broadcast %cst_52 : f32 to vector<32x512xf32>
    %125 = arith.mulf %124, %123 : vector<32x512xf32>
    %cst_53 = arith.constant 4.471500e-02 : f32
    %126 = vector.broadcast %cst_53 : f32 to vector<32x512xf32>
    %127 = arith.mulf %126, %123 : vector<32x512xf32>
    %128 = arith.mulf %127, %123 : vector<32x512xf32>
    %129 = arith.mulf %128, %123 : vector<32x512xf32>
    %130 = arith.addf %123, %129 : vector<32x512xf32>
    %cst_54 = arith.constant 0.797884583 : f32
    %131 = vector.broadcast %cst_54 : f32 to vector<32x512xf32>
    %132 = arith.mulf %131, %130 : vector<32x512xf32>
    %133 = math.tanh %132 : vector<32x512xf32>
    %cst_55 = arith.constant 1.000000e+00 : f32
    %134 = vector.broadcast %cst_55 : f32 to vector<32x512xf32>
    %135 = arith.addf %134, %133 : vector<32x512xf32>
    %136 = arith.mulf %125, %135 : vector<32x512xf32>
    %137 = arith.truncf %136 : vector<32x512xf32> to vector<32x512xbf16>
    %c0_56 = arith.constant 0 : index
    %c0_57 = arith.constant 0 : index
    %c0_58 = arith.constant 0 : index
    %138 = vector.load %arg11[%c0_56, %c0_57, %c0_58] : memref<2x512x128xbf16, #tpu.memory_space<vmem>>, vector<1x512x128xbf16>
    %139 = vector.shape_cast %138 : vector<1x512x128xbf16> to vector<512x128xbf16>
    %cst_59 = arith.constant dense<0.000000e+00> : vector<32x128xf32>
    %140 = tpu.matmul %137, %139, %cst_59 {dimension_numbers = #tpu.dot_dimension_numbers<[1], [0], [0], [1], [0, 0, 1, 1], [], []>} : vector<32x512xbf16>, vector<512x128xbf16>, vector<32x128xf32> -> vector<32x128xf32>
    %141 = vector.extract_strided_slice %33 {offsets = [5, 0], sizes = [1, 128], strides = [1, 1]} : vector<6x128xf32> to vector<1x128xf32>
    %142 = vector.broadcast %141 : vector<1x128xf32> to vector<32x128xf32>
    %143 = arith.addf %140, %142 : vector<32x128xf32>
    %144 = arith.addf %93, %143 : vector<32x128xf32>
    %c1 = arith.constant 1 : index
    %c0_60 = arith.constant 0 : index
    %c0_61 = arith.constant 0 : index
    %145 = vector.load %arg12[%c1, %c0_60, %c0_61] : memref<2x6x128xf32, #tpu.memory_space<vmem>>, vector<1x6x128xf32>
    %146 = vector.shape_cast %145 : vector<1x6x128xf32> to vector<6x128xf32>
    %147 = vector.extract_strided_slice %146 {offsets = [0, 0], sizes = [1, 128], strides = [1, 1]} : vector<6x128xf32> to vector<1x128xf32>
    %148 = vector.extract_strided_slice %146 {offsets = [1, 0], sizes = [1, 128], strides = [1, 1]} : vector<6x128xf32> to vector<1x128xf32>
    %cst_62 = arith.constant dense<0.000000e+00> : vector<32xf32>
    %149 = vector.multi_reduction <add>, %144, %cst_62 [1] : vector<32x128xf32> to vector<32xf32>
    %150 = vector.shape_cast %149 : vector<32xf32> to vector<32x1xf32>
    %cst_63 = arith.constant 1.280000e+02 : f32
    %151 = vector.broadcast %cst_63 : f32 to vector<32x1xf32>
    %152 = arith.divf %150, %151 : vector<32x1xf32>
    %153 = vector.broadcast %152 : vector<32x1xf32> to vector<32x128xf32>
    %154 = arith.subf %144, %153 : vector<32x128xf32>
    %155 = arith.mulf %154, %154 : vector<32x128xf32>
    %cst_64 = arith.constant dense<0.000000e+00> : vector<32xf32>
    %156 = vector.multi_reduction <add>, %155, %cst_64 [1] : vector<32x128xf32> to vector<32xf32>
    %157 = vector.shape_cast %156 : vector<32xf32> to vector<32x1xf32>
    %cst_65 = arith.constant 1.280000e+02 : f32
    %158 = vector.broadcast %cst_65 : f32 to vector<32x1xf32>
    %159 = arith.divf %157, %158 : vector<32x1xf32>
    %cst_66 = arith.constant 9.99999974E-6 : f32
    %160 = vector.broadcast %cst_66 : f32 to vector<32x1xf32>
    %161 = arith.addf %159, %160 : vector<32x1xf32>
    %162 = math.rsqrt %161 : vector<32x1xf32>
    %163 = vector.broadcast %162 : vector<32x1xf32> to vector<32x128xf32>
    %164 = arith.mulf %154, %163 : vector<32x128xf32>
    %165 = vector.broadcast %147 : vector<1x128xf32> to vector<32x128xf32>
    %166 = arith.mulf %164, %165 : vector<32x128xf32>
    %167 = vector.broadcast %148 : vector<1x128xf32> to vector<32x128xf32>
    %168 = arith.addf %166, %167 : vector<32x128xf32>
    %169 = arith.truncf %168 : vector<32x128xf32> to vector<32x128xbf16>
    %c1_67 = arith.constant 1 : index
    %c0_68 = arith.constant 0 : index
    %c0_69 = arith.constant 0 : index
    %170 = vector.load %arg4[%c1_67, %c0_68, %c0_69] : memref<2x128x384xbf16, #tpu.memory_space<vmem>>, vector<1x128x384xbf16>
    %171 = vector.shape_cast %170 : vector<1x128x384xbf16> to vector<128x384xbf16>
    %cst_70 = arith.constant dense<0.000000e+00> : vector<32x384xf32>
    %172 = tpu.matmul %169, %171, %cst_70 {dimension_numbers = #tpu.dot_dimension_numbers<[1], [0], [0], [1], [0, 0, 1, 1], [], []>} : vector<32x128xbf16>, vector<128x384xbf16>, vector<32x384xf32> -> vector<32x384xf32>
    %c1_71 = arith.constant 1 : index
    %c0_72 = arith.constant 0 : index
    %c0_73 = arith.constant 0 : index
    %173 = vector.load %arg5[%c1_71, %c0_72, %c0_73] : memref<2x1x384xf32, #tpu.memory_space<vmem>>, vector<1x1x384xf32>
    %174 = vector.shape_cast %173 : vector<1x1x384xf32> to vector<1x384xf32>
    %175 = vector.broadcast %174 : vector<1x384xf32> to vector<32x384xf32>
    %176 = arith.addf %172, %175 : vector<32x384xf32>
    %177 = vector.extract_strided_slice %176 {offsets = [0, 0], sizes = [32, 128], strides = [1, 1]} : vector<32x384xf32> to vector<32x128xf32>
    %178 = vector.extract_strided_slice %176 {offsets = [0, 128], sizes = [32, 128], strides = [1, 1]} : vector<32x384xf32> to vector<32x128xf32>
    %179 = vector.extract_strided_slice %176 {offsets = [0, 256], sizes = [32, 128], strides = [1, 1]} : vector<32x384xf32> to vector<32x128xf32>
    %180 = tpu.concatenate %178, %178, %178, %178 in 0 : vector<32x128xf32>, vector<32x128xf32>, vector<32x128xf32>, vector<32x128xf32> -> vector<128x128xf32>
    %181 = arith.mulf %180, %0 : vector<128x128xf32>
    %cst_74 = arith.constant dense<0.000000e+00> : vector<32x128xf32>
    %182 = tpu.matmul %177, %181, %cst_74 {dimension_numbers = #tpu.dot_dimension_numbers<[1], [1], [0], [0], [0, 0, 1, 0], [], []>} : vector<32x128xf32>, vector<128x128xf32>, vector<32x128xf32> -> vector<32x128xf32>
    %cst_75 = arith.constant 0.176776692 : f32
    %183 = vector.broadcast %cst_75 : f32 to vector<32x128xf32>
    %184 = arith.mulf %182, %183 : vector<32x128xf32>
    %c1_76 = arith.constant 1 : index
    %c0_77 = arith.constant 0 : index
    %c0_78 = arith.constant 0 : index
    %185 = vector.load %arg6[%c1_76, %c0_77, %c0_78] : memref<2x32x128xf32, #tpu.memory_space<vmem>>, vector<1x32x128xf32>
    %186 = vector.shape_cast %185 : vector<1x32x128xf32> to vector<32x128xf32>
    %187 = arith.addf %184, %186 : vector<32x128xf32>
    %cst_79 = arith.constant dense<0xFF800000> : vector<32xf32>
    %188 = vector.multi_reduction <maximumf>, %187, %cst_79 [1] : vector<32x128xf32> to vector<32xf32>
    %189 = vector.shape_cast %188 : vector<32xf32> to vector<32x1xf32>
    %190 = vector.broadcast %189 : vector<32x1xf32> to vector<32x128xf32>
    %191 = arith.subf %187, %190 : vector<32x128xf32>
    %192 = math.exp %191 : vector<32x128xf32>
    %193 = tpu.concatenate %179, %179, %179, %179 in 0 : vector<32x128xf32>, vector<32x128xf32>, vector<32x128xf32>, vector<32x128xf32> -> vector<128x128xf32>
    %194 = arith.mulf %193, %0 : vector<128x128xf32>
    %cst_80 = arith.constant dense<0.000000e+00> : vector<32x128xf32>
    %195 = tpu.matmul %192, %194, %cst_80 {dimension_numbers = #tpu.dot_dimension_numbers<[1], [0], [0], [1], [0, 0, 1, 1], [], []>} : vector<32x128xf32>, vector<128x128xf32>, vector<32x128xf32> -> vector<32x128xf32>
    %cst_81 = arith.constant dense<0.000000e+00> : vector<32x128xf32>
    %196 = tpu.matmul %192, %0, %cst_81 {dimension_numbers = #tpu.dot_dimension_numbers<[1], [0], [0], [1], [0, 0, 1, 1], [], []>} : vector<32x128xf32>, vector<128x128xf32>, vector<32x128xf32> -> vector<32x128xf32>
    %197 = tpu.reciprocal %196 {approx = true} : vector<32x128xf32> -> vector<32x128xf32>
    %198 = arith.mulf %195, %197 : vector<32x128xf32>
    %199 = arith.truncf %198 : vector<32x128xf32> to vector<32x128xbf16>
    %c1_82 = arith.constant 1 : index
    %c0_83 = arith.constant 0 : index
    %c0_84 = arith.constant 0 : index
    %200 = vector.load %arg8[%c1_82, %c0_83, %c0_84] : memref<2x128x128xbf16, #tpu.memory_space<vmem>>, vector<1x128x128xbf16>
    %201 = vector.shape_cast %200 : vector<1x128x128xbf16> to vector<128x128xbf16>
    %cst_85 = arith.constant dense<0.000000e+00> : vector<32x128xf32>
    %202 = tpu.matmul %199, %201, %cst_85 {dimension_numbers = #tpu.dot_dimension_numbers<[1], [0], [0], [1], [0, 0, 1, 1], [], []>} : vector<32x128xbf16>, vector<128x128xbf16>, vector<32x128xf32> -> vector<32x128xf32>
    %203 = arith.addf %144, %202 : vector<32x128xf32>
    %204 = vector.extract_strided_slice %146 {offsets = [2, 0], sizes = [1, 128], strides = [1, 1]} : vector<6x128xf32> to vector<1x128xf32>
    %205 = vector.broadcast %204 : vector<1x128xf32> to vector<32x128xf32>
    %206 = arith.addf %203, %205 : vector<32x128xf32>
    %207 = vector.extract_strided_slice %146 {offsets = [3, 0], sizes = [1, 128], strides = [1, 1]} : vector<6x128xf32> to vector<1x128xf32>
    %208 = vector.extract_strided_slice %146 {offsets = [4, 0], sizes = [1, 128], strides = [1, 1]} : vector<6x128xf32> to vector<1x128xf32>
    %cst_86 = arith.constant dense<0.000000e+00> : vector<32xf32>
    %209 = vector.multi_reduction <add>, %206, %cst_86 [1] : vector<32x128xf32> to vector<32xf32>
    %210 = vector.shape_cast %209 : vector<32xf32> to vector<32x1xf32>
    %cst_87 = arith.constant 1.280000e+02 : f32
    %211 = vector.broadcast %cst_87 : f32 to vector<32x1xf32>
    %212 = arith.divf %210, %211 : vector<32x1xf32>
    %213 = vector.broadcast %212 : vector<32x1xf32> to vector<32x128xf32>
    %214 = arith.subf %206, %213 : vector<32x128xf32>
    %215 = arith.mulf %214, %214 : vector<32x128xf32>
    %cst_88 = arith.constant dense<0.000000e+00> : vector<32xf32>
    %216 = vector.multi_reduction <add>, %215, %cst_88 [1] : vector<32x128xf32> to vector<32xf32>
    %217 = vector.shape_cast %216 : vector<32xf32> to vector<32x1xf32>
    %cst_89 = arith.constant 1.280000e+02 : f32
    %218 = vector.broadcast %cst_89 : f32 to vector<32x1xf32>
    %219 = arith.divf %217, %218 : vector<32x1xf32>
    %cst_90 = arith.constant 9.99999974E-6 : f32
    %220 = vector.broadcast %cst_90 : f32 to vector<32x1xf32>
    %221 = arith.addf %219, %220 : vector<32x1xf32>
    %222 = math.rsqrt %221 : vector<32x1xf32>
    %223 = vector.broadcast %222 : vector<32x1xf32> to vector<32x128xf32>
    %224 = arith.mulf %214, %223 : vector<32x128xf32>
    %225 = vector.broadcast %207 : vector<1x128xf32> to vector<32x128xf32>
    %226 = arith.mulf %224, %225 : vector<32x128xf32>
    %227 = vector.broadcast %208 : vector<1x128xf32> to vector<32x128xf32>
    %228 = arith.addf %226, %227 : vector<32x128xf32>
    %229 = arith.truncf %228 : vector<32x128xf32> to vector<32x128xbf16>
    %c1_91 = arith.constant 1 : index
    %c0_92 = arith.constant 0 : index
    %c0_93 = arith.constant 0 : index
    %230 = vector.load %arg9[%c1_91, %c0_92, %c0_93] : memref<2x128x512xbf16, #tpu.memory_space<vmem>>, vector<1x128x512xbf16>
    %231 = vector.shape_cast %230 : vector<1x128x512xbf16> to vector<128x512xbf16>
    %cst_94 = arith.constant dense<0.000000e+00> : vector<32x512xf32>
    %232 = tpu.matmul %229, %231, %cst_94 {dimension_numbers = #tpu.dot_dimension_numbers<[1], [0], [0], [1], [0, 0, 1, 1], [], []>} : vector<32x128xbf16>, vector<128x512xbf16>, vector<32x512xf32> -> vector<32x512xf32>
    %c1_95 = arith.constant 1 : index
    %c0_96 = arith.constant 0 : index
    %c0_97 = arith.constant 0 : index
    %233 = vector.load %arg10[%c1_95, %c0_96, %c0_97] : memref<2x1x512xf32, #tpu.memory_space<vmem>>, vector<1x1x512xf32>
    %234 = vector.shape_cast %233 : vector<1x1x512xf32> to vector<1x512xf32>
    %235 = vector.broadcast %234 : vector<1x512xf32> to vector<32x512xf32>
    %236 = arith.addf %232, %235 : vector<32x512xf32>
    %cst_98 = arith.constant 5.000000e-01 : f32
    %237 = vector.broadcast %cst_98 : f32 to vector<32x512xf32>
    %238 = arith.mulf %237, %236 : vector<32x512xf32>
    %cst_99 = arith.constant 4.471500e-02 : f32
    %239 = vector.broadcast %cst_99 : f32 to vector<32x512xf32>
    %240 = arith.mulf %239, %236 : vector<32x512xf32>
    %241 = arith.mulf %240, %236 : vector<32x512xf32>
    %242 = arith.mulf %241, %236 : vector<32x512xf32>
    %243 = arith.addf %236, %242 : vector<32x512xf32>
    %cst_100 = arith.constant 0.797884583 : f32
    %244 = vector.broadcast %cst_100 : f32 to vector<32x512xf32>
    %245 = arith.mulf %244, %243 : vector<32x512xf32>
    %246 = math.tanh %245 : vector<32x512xf32>
    %cst_101 = arith.constant 1.000000e+00 : f32
    %247 = vector.broadcast %cst_101 : f32 to vector<32x512xf32>
    %248 = arith.addf %247, %246 : vector<32x512xf32>
    %249 = arith.mulf %238, %248 : vector<32x512xf32>
    %250 = arith.truncf %249 : vector<32x512xf32> to vector<32x512xbf16>
    %c1_102 = arith.constant 1 : index
    %c0_103 = arith.constant 0 : index
    %c0_104 = arith.constant 0 : index
    %251 = vector.load %arg11[%c1_102, %c0_103, %c0_104] : memref<2x512x128xbf16, #tpu.memory_space<vmem>>, vector<1x512x128xbf16>
    %252 = vector.shape_cast %251 : vector<1x512x128xbf16> to vector<512x128xbf16>
    %cst_105 = arith.constant dense<0.000000e+00> : vector<32x128xf32>
    %253 = tpu.matmul %250, %252, %cst_105 {dimension_numbers = #tpu.dot_dimension_numbers<[1], [0], [0], [1], [0, 0, 1, 1], [], []>} : vector<32x512xbf16>, vector<512x128xbf16>, vector<32x128xf32> -> vector<32x128xf32>
    %254 = vector.extract_strided_slice %146 {offsets = [5, 0], sizes = [1, 128], strides = [1, 1]} : vector<6x128xf32> to vector<1x128xf32>
    %255 = vector.broadcast %254 : vector<1x128xf32> to vector<32x128xf32>
    %256 = arith.addf %253, %255 : vector<32x128xf32>
    %257 = arith.addf %206, %256 : vector<32x128xf32>
    %c0_106 = arith.constant 0 : index
    %c0_107 = arith.constant 0 : index
    %258 = vector.load %arg13[%c0_106, %c0_107] : memref<4x128xf32, #tpu.memory_space<vmem>>, vector<4x128xf32>
    %259 = vector.extract_strided_slice %258 {offsets = [0, 0], sizes = [1, 128], strides = [1, 1]} : vector<4x128xf32> to vector<1x128xf32>
    %260 = vector.extract_strided_slice %258 {offsets = [1, 0], sizes = [1, 128], strides = [1, 1]} : vector<4x128xf32> to vector<1x128xf32>
    %cst_108 = arith.constant dense<0.000000e+00> : vector<32xf32>
    %261 = vector.multi_reduction <add>, %257, %cst_108 [1] : vector<32x128xf32> to vector<32xf32>
    %262 = vector.shape_cast %261 : vector<32xf32> to vector<32x1xf32>
    %cst_109 = arith.constant 1.280000e+02 : f32
    %263 = vector.broadcast %cst_109 : f32 to vector<32x1xf32>
    %264 = arith.divf %262, %263 : vector<32x1xf32>
    %265 = vector.broadcast %264 : vector<32x1xf32> to vector<32x128xf32>
    %266 = arith.subf %257, %265 : vector<32x128xf32>
    %267 = arith.mulf %266, %266 : vector<32x128xf32>
    %cst_110 = arith.constant dense<0.000000e+00> : vector<32xf32>
    %268 = vector.multi_reduction <add>, %267, %cst_110 [1] : vector<32x128xf32> to vector<32xf32>
    %269 = vector.shape_cast %268 : vector<32xf32> to vector<32x1xf32>
    %cst_111 = arith.constant 1.280000e+02 : f32
    %270 = vector.broadcast %cst_111 : f32 to vector<32x1xf32>
    %271 = arith.divf %269, %270 : vector<32x1xf32>
    %cst_112 = arith.constant 9.99999974E-6 : f32
    %272 = vector.broadcast %cst_112 : f32 to vector<32x1xf32>
    %273 = arith.addf %271, %272 : vector<32x1xf32>
    %274 = math.rsqrt %273 : vector<32x1xf32>
    %275 = vector.broadcast %274 : vector<32x1xf32> to vector<32x128xf32>
    %276 = arith.mulf %266, %275 : vector<32x128xf32>
    %277 = vector.broadcast %259 : vector<1x128xf32> to vector<32x128xf32>
    %278 = arith.mulf %276, %277 : vector<32x128xf32>
    %279 = vector.broadcast %260 : vector<1x128xf32> to vector<32x128xf32>
    %280 = arith.addf %278, %279 : vector<32x128xf32>
    %cst_113 = arith.constant dense<0.000000e+00> : vector<128xf32>
    %281 = vector.multi_reduction <add>, %280, %cst_113 [0] : vector<32x128xf32> to vector<128xf32>
    %282 = vector.shape_cast %281 : vector<128xf32> to vector<1x128xf32>
    %cst_114 = arith.constant 3.200000e+01 : f32
    %283 = vector.broadcast %cst_114 : f32 to vector<1x128xf32>
    %284 = arith.divf %282, %283 : vector<1x128xf32>
    %285 = vector.extract_strided_slice %258 {offsets = [2, 0], sizes = [1, 128], strides = [1, 1]} : vector<4x128xf32> to vector<1x128xf32>
    %286 = vector.extract_strided_slice %258 {offsets = [3, 0], sizes = [1, 128], strides = [1, 1]} : vector<4x128xf32> to vector<1x128xf32>
    %cst_115 = arith.constant dense<0.000000e+00> : vector<1xf32>
    %287 = vector.multi_reduction <add>, %284, %cst_115 [1] : vector<1x128xf32> to vector<1xf32>
    %288 = vector.shape_cast %287 : vector<1xf32> to vector<1x1xf32>
    %cst_116 = arith.constant 1.280000e+02 : f32
    %289 = vector.broadcast %cst_116 : f32 to vector<1x1xf32>
    %290 = arith.divf %288, %289 : vector<1x1xf32>
    %291 = vector.broadcast %290 : vector<1x1xf32> to vector<1x128xf32>
    %292 = arith.subf %284, %291 : vector<1x128xf32>
    %293 = arith.mulf %292, %292 : vector<1x128xf32>
    %cst_117 = arith.constant dense<0.000000e+00> : vector<1xf32>
    %294 = vector.multi_reduction <add>, %293, %cst_117 [1] : vector<1x128xf32> to vector<1xf32>
    %295 = vector.shape_cast %294 : vector<1xf32> to vector<1x1xf32>
    %cst_118 = arith.constant 1.280000e+02 : f32
    %296 = vector.broadcast %cst_118 : f32 to vector<1x1xf32>
    %297 = arith.divf %295, %296 : vector<1x1xf32>
    %cst_119 = arith.constant 9.99999974E-6 : f32
    %298 = vector.broadcast %cst_119 : f32 to vector<1x1xf32>
    %299 = arith.addf %297, %298 : vector<1x1xf32>
    %300 = math.rsqrt %299 : vector<1x1xf32>
    %301 = vector.broadcast %300 : vector<1x1xf32> to vector<1x128xf32>
    %302 = arith.mulf %292, %301 : vector<1x128xf32>
    %303 = arith.mulf %302, %285 : vector<1x128xf32>
    %304 = arith.addf %303, %286 : vector<1x128xf32>
    %c0_120 = arith.constant 0 : index
    %c0_121 = arith.constant 0 : index
    %305 = vector.load %arg14[%c0_120, %c0_121] : memref<128x128xbf16, #tpu.memory_space<vmem>>, vector<128x128xbf16>
    %c0_122 = arith.constant 0 : index
    %c0_123 = arith.constant 0 : index
    %306 = vector.load %arg15[%c0_122, %c0_123] : memref<1x128xf32, #tpu.memory_space<vmem>>, vector<1x128xf32>
    %307 = arith.truncf %304 : vector<1x128xf32> to vector<1x128xbf16>
    %cst_124 = arith.constant dense<0.000000e+00> : vector<1x128xf32>
    %308 = tpu.matmul %307, %305, %cst_124 {dimension_numbers = #tpu.dot_dimension_numbers<[1], [0], [0], [1], [0, 0, 1, 1], [], []>} : vector<1x128xbf16>, vector<128x128xbf16>, vector<1x128xf32> -> vector<1x128xf32>
    %309 = arith.addf %308, %306 : vector<1x128xf32>
    %cst_125 = arith.constant 0.000000e+00 : f32
    %310 = vector.broadcast %cst_125 : f32 to vector<1x128xf32>
    %311 = arith.maximumf %309, %310 : vector<1x128xf32>
    %c0_126 = arith.constant 0 : index
    %c0_127 = arith.constant 0 : index
    %312 = vector.load %arg16[%c0_126, %c0_127] : memref<128x128xbf16, #tpu.memory_space<vmem>>, vector<128x128xbf16>
    %c0_128 = arith.constant 0 : index
    %c0_129 = arith.constant 0 : index
    %313 = vector.load %arg17[%c0_128, %c0_129] : memref<1x128xf32, #tpu.memory_space<vmem>>, vector<1x128xf32>
    %314 = arith.truncf %311 : vector<1x128xf32> to vector<1x128xbf16>
    %cst_130 = arith.constant dense<0.000000e+00> : vector<1x128xf32>
    %315 = tpu.matmul %314, %312, %cst_130 {dimension_numbers = #tpu.dot_dimension_numbers<[1], [0], [0], [1], [0, 0, 1, 1], [], []>} : vector<1x128xbf16>, vector<128x128xbf16>, vector<1x128xf32> -> vector<1x128xf32>
    %316 = arith.addf %315, %313 : vector<1x128xf32>
    %c0_131 = arith.constant 0 : index
    %c0_132 = arith.constant 0 : index
    %c0_133 = arith.constant 0 : index
    %317 = vector.load %arg18[%c0_131, %c0_132, %c0_133] : memref<1x1x128xf32, #tpu.memory_space<vmem>>, vector<1x1x128xf32>
    %318 = vector.shape_cast %317 : vector<1x1x128xf32> to vector<1x128xf32>
    %319 = vector.shape_cast %316 : vector<1x128xf32> to vector<1x1x128xf32>
    tpu.vector_store %arg18[%c0_131, %c0_132, %c0_133], %319 {strides = array<i32>} : memref<1x1x128xf32, #tpu.memory_space<vmem>>, vector<1x1x128xf32>,
    return
  }
  func.func @transform_0(%arg0: i32) -> (i32, i32, i32) {
    %c0_i32 = arith.constant 0 : i32
    %c0_i32_0 = arith.constant 0 : i32
    %c0_i32_1 = arith.constant 0 : i32
    return %arg0, %c0_i32, %c0_i32_0 : i32, i32, i32
  }
  func.func @transform_1(%arg0: i32) -> (i32, i32) {
    %c0_i32 = arith.constant 0 : i32
    %c0_i32_0 = arith.constant 0 : i32
    %c0_i32_1 = arith.constant 0 : i32
    return %c0_i32, %c0_i32_0 : i32, i32
  }
  func.func @transform_2(%arg0: i32) -> (i32, i32) {
    %c0_i32 = arith.constant 0 : i32
    %c0_i32_0 = arith.constant 0 : i32
    %c0_i32_1 = arith.constant 0 : i32
    return %c0_i32, %c0_i32_0 : i32, i32
  }
  func.func @transform_3(%arg0: i32) -> (i32, i32, i32) {
    %c0_i32 = arith.constant 0 : i32
    %c0_i32_0 = arith.constant 0 : i32
    %c0_i32_1 = arith.constant 0 : i32
    %c0_i32_2 = arith.constant 0 : i32
    return %c0_i32, %c0_i32_0, %c0_i32_1 : i32, i32, i32
  }
  func.func @transform_4(%arg0: i32) -> (i32, i32, i32) {
    %c0_i32 = arith.constant 0 : i32
    %c0_i32_0 = arith.constant 0 : i32
    %c0_i32_1 = arith.constant 0 : i32
    %c0_i32_2 = arith.constant 0 : i32
    return %c0_i32, %c0_i32_0, %c0_i32_1 : i32, i32, i32
  }
  func.func @transform_5(%arg0: i32) -> (i32, i32, i32) {
    %c0_i32 = arith.constant 0 : i32
    %c0_i32_0 = arith.constant 0 : i32
    %c0_i32_1 = arith.constant 0 : i32
    %c0_i32_2 = arith.constant 0 : i32
    return %c0_i32, %c0_i32_0, %c0_i32_1 : i32, i32, i32
  }
  func.func @transform_6(%arg0: i32) -> (i32, i32) {
    %c0_i32 = arith.constant 0 : i32
    %c0_i32_0 = arith.constant 0 : i32
    %c0_i32_1 = arith.constant 0 : i32
    return %c0_i32, %c0_i32_0 : i32, i32
  }
  func.func @transform_7(%arg0: i32) -> (i32, i32, i32) {
    %c0_i32 = arith.constant 0 : i32
    %c0_i32_0 = arith.constant 0 : i32
    %c0_i32_1 = arith.constant 0 : i32
    %c0_i32_2 = arith.constant 0 : i32
    return %c0_i32, %c0_i32_0, %c0_i32_1 : i32, i32, i32
  }
  func.func @transform_8(%arg0: i32) -> (i32, i32, i32) {
    %c0_i32 = arith.constant 0 : i32
    %c0_i32_0 = arith.constant 0 : i32
    %c0_i32_1 = arith.constant 0 : i32
    %c0_i32_2 = arith.constant 0 : i32
    return %c0_i32, %c0_i32_0, %c0_i32_1 : i32, i32, i32
  }
  func.func @transform_9(%arg0: i32) -> (i32, i32, i32) {
    %c0_i32 = arith.constant 0 : i32
    %c0_i32_0 = arith.constant 0 : i32
    %c0_i32_1 = arith.constant 0 : i32
    %c0_i32_2 = arith.constant 0 : i32
    return %c0_i32, %c0_i32_0, %c0_i32_1 : i32, i32, i32
  }
  func.func @transform_10(%arg0: i32) -> (i32, i32, i32) {
    %c0_i32 = arith.constant 0 : i32
    %c0_i32_0 = arith.constant 0 : i32
    %c0_i32_1 = arith.constant 0 : i32
    %c0_i32_2 = arith.constant 0 : i32
    return %c0_i32, %c0_i32_0, %c0_i32_1 : i32, i32, i32
  }
  func.func @transform_11(%arg0: i32) -> (i32, i32, i32) {
    %c0_i32 = arith.constant 0 : i32
    %c0_i32_0 = arith.constant 0 : i32
    %c0_i32_1 = arith.constant 0 : i32
    %c0_i32_2 = arith.constant 0 : i32
    return %c0_i32, %c0_i32_0, %c0_i32_1 : i32, i32, i32
  }
  func.func @transform_12(%arg0: i32) -> (i32, i32) {
    %c0_i32 = arith.constant 0 : i32
    %c0_i32_0 = arith.constant 0 : i32
    %c0_i32_1 = arith.constant 0 : i32
    return %c0_i32, %c0_i32_0 : i32, i32
  }
  func.func @transform_13(%arg0: i32) -> (i32, i32) {
    %c0_i32 = arith.constant 0 : i32
    %c0_i32_0 = arith.constant 0 : i32
    %c0_i32_1 = arith.constant 0 : i32
    return %c0_i32, %c0_i32_0 : i32, i32
  }
  func.func @transform_14(%arg0: i32) -> (i32, i32) {
    %c0_i32 = arith.constant 0 : i32
    %c0_i32_0 = arith.constant 0 : i32
    %c0_i32_1 = arith.constant 0 : i32
    return %c0_i32, %c0_i32_0 : i32, i32
  }
  func.func @transform_15(%arg0: i32) -> (i32, i32) {
    %c0_i32 = arith.constant 0 : i32
    %c0_i32_0 = arith.constant 0 : i32
    %c0_i32_1 = arith.constant 0 : i32
    return %c0_i32, %c0_i32_0 : i32, i32
  }
  func.func @transform_16(%arg0: i32) -> (i32, i32) {
    %c0_i32 = arith.constant 0 : i32
    %c0_i32_0 = arith.constant 0 : i32
    %c0_i32_1 = arith.constant 0 : i32
    return %c0_i32, %c0_i32_0 : i32, i32
  }
  func.func @transform_17(%arg0: i32) -> (i32, i32, i32) {
    %c0_i32 = arith.constant 0 : i32
    %c0_i32_0 = arith.constant 0 : i32
    %c0_i32_1 = arith.constant 0 : i32
    return %arg0, %c0_i32, %c0_i32_0 : i32, i32, i32
  }
}

</mosaic_0001>

<llo_original>
// kernel: video_encoder_forward.1
$region0: #{video_encoder_forward.1}
  #allocation0 [shape = 'u32[]', space=smem, size = 0x4, offset = 0x4, fixed_abs, tag = 'smem constant byte address 0x4 - core index']
  #allocation1 [shape = 'u32[144,128]{1,0:T(1,128)}', space=vmem, size = 0x12000, scoped, tag = 'internal scratch']
  %s0 = inlined_call_operand.vmem [shape: f32[2,32,128], index: 0, kind: input, shape index: {}]
  %s1 = inlined_call_operand.vmem [shape: bf16[128,128], index: 1, kind: input, shape index: {}]
  %s2 = inlined_call_operand.vmem [shape: f32[3,128], index: 2, kind: input, shape index: {}]
  %s3 = inlined_call_operand.vmem [shape: bf16[2,128,384], index: 3, kind: input, shape index: {}]
  %s4 = inlined_call_operand.vmem [shape: f32[2,1,384], index: 4, kind: input, shape index: {}]
  %s5 = inlined_call_operand.vmem [shape: f32[2,32,128], index: 5, kind: input, shape index: {}]
  %s6 = inlined_call_operand.vmem [shape: f32[128,128], index: 6, kind: input, shape index: {}]
  %s7 = inlined_call_operand.vmem [shape: bf16[2,128,128], index: 7, kind: input, shape index: {}]
  %s8 = inlined_call_operand.vmem [shape: bf16[2,128,512], index: 8, kind: input, shape index: {}]
  %s9 = inlined_call_operand.vmem [shape: f32[2,1,512], index: 9, kind: input, shape index: {}]
  %s10 = inlined_call_operand.vmem [shape: bf16[2,512,128], index: 10, kind: input, shape index: {}]
  %s11 = inlined_call_operand.vmem [shape: f32[2,6,128], index: 11, kind: input, shape index: {}]
  %s12 = inlined_call_operand.vmem [shape: f32[4,128], index: 12, kind: input, shape index: {}]
  %s13 = inlined_call_operand.vmem [shape: bf16[128,128], index: 13, kind: input, shape index: {}]
  %s14 = inlined_call_operand.vmem [shape: f32[1,128], index: 14, kind: input, shape index: {}]
  %s15 = inlined_call_operand.vmem [shape: bf16[128,128], index: 15, kind: input, shape index: {}]
  %s16 = inlined_call_operand.vmem [shape: f32[1,128], index: 16, kind: input, shape index: {}]
  %s17 = inlined_call_operand.hbm [shape: f32[2,1,128], index: 17, kind: output, shape index: {}]
  %s18 = sld [smem:[#allocation0]]
  $region101: #{video_encoder_forward.1} parent=0
    _
  %s20 = ssub.s32 1, %s18
  %s21 = scalar_select 0, %s20, %s18
  $region1: #{video_encoder_forward.1} parent=0
    #allocation2 [shape = 'u8[1024]{0}', space=vmem, size = 0x400, scoped, tag = 'output window, operand 0']
    #allocation3 [shape = 's32[2]{0}', space=sflag, size = 0x8, scoped, tag = 'scoped memory for video_encoder_forward.1']
    %22 = vsyncpa [#allocation3], 0
    %s23 = scalar_lea.sflag [#allocation3], 1
    %24 = vsyncpa %s23, 0
    loop: start=0, step=1, limit=4
    $region2: #{video_encoder_forward.1} parent=1 // loop_pre_header
      _
    $region3: #{video_encoder_forward.1} parent=1 // loop_header
      %s26 = sphi 0, %s30
      %p27 = scmp.ge.s32.totalorder %s26, 4
      %s36 = sphi 0, %s38
      %s39 = sphi 0, %s36
      %s40 = sphi 0, %s39
      %s56 = sphi 0, %s40
      %s60 = sphi 0, %s60
      %s62 = sphi 0, %s60
      %s63 = sphi 0, %s62
      %s77 = sphi 0, %s63
      %s81 = sphi 0, %s81
      %s83 = sphi 0, %s81
      %s84 = sphi 0, %s83
      %s98 = sphi 0, %s84
      %s102 = sphi 0, %s102
      %s104 = sphi 0, %s102
      %s105 = sphi 0, %s104
      %s119 = sphi 0, %s105
      %s123 = sphi 0, %s123
      %s125 = sphi 0, %s123
      %s126 = sphi 0, %s125
      %s140 = sphi 0, %s126
      %s144 = sphi 0, %s144
      %s146 = sphi 0, %s144
      %s147 = sphi 0, %s146
      %s161 = sphi 0, %s147
      %s165 = sphi 0, %s165
      %s167 = sphi 0, %s165
      %s168 = sphi 0, %s167
      %s182 = sphi 0, %s168
      %s186 = sphi 0, %s186
      %s188 = sphi 0, %s186
      %s189 = sphi 0, %s188
      %s203 = sphi 0, %s189
      %s207 = sphi 0, %s207
      %s209 = sphi 0, %s207
      %s210 = sphi 0, %s209
      %s224 = sphi 0, %s210
      %s228 = sphi 0, %s228
      %s230 = sphi 0, %s228
      %s231 = sphi 0, %s230
      %s245 = sphi 0, %s231
      %s249 = sphi 0, %s249
      %s251 = sphi 0, %s249
      %s252 = sphi 0, %s251
      %s266 = sphi 0, %s252
      %s270 = sphi 0, %s270
      %s272 = sphi 0, %s270
      %s273 = sphi 0, %s272
      %s287 = sphi 0, %s273
      %s291 = sphi 0, %s291
      %s293 = sphi 0, %s291
      %s294 = sphi 0, %s293
      %s308 = sphi 0, %s294
      %s312 = sphi 0, %s312
      %s314 = sphi 0, %s312
      %s315 = sphi 0, %s314
      %s329 = sphi 0, %s315
      %s333 = sphi 0, %s333
      %s335 = sphi 0, %s333
      %s336 = sphi 0, %s335
      %s350 = sphi 0, %s336
      %s354 = sphi 0, %s354
      %s356 = sphi 0, %s354
      %s357 = sphi 0, %s356
      %s371 = sphi 0, %s357
      %s375 = sphi 0, %s375
      %s377 = sphi 0, %s375
      %s378 = sphi 0, %s377
      %s392 = sphi 0, %s378
      %s398 = sphi 0, %s400
      %s401 = sphi 0, %s398
      %s402 = sphi 0, %s401
      %s418 = sphi 0, %s402
    $region4: #{video_encoder_forward.1} parent=1 // loop_header_branch
      %29 = sbr.rel (%p27) target = $region8
    $region5: #{video_encoder_forward.1} parent=1 // loop_body
      %s31 = ssub.s32 %s26, 1
      %s32 = ssub.s32 %s26, 2
      %s33 = sadd.s32 %s26, 1
      %s34 = ssub.s32 %s26, %s33
      %p35 = scmp.eq.s32.totalorder %s34, 0
      %s37 = sadd.s32 %s36, 1
      %s38 = scalar_select %p35, %s36, %s37
      %p41 = pneg %p35
      %p42 = scmp.eq.s32.totalorder %s26, 1
      %p43 = por %p41, %p42
      %p44 = scmp.ne.s32.totalorder %s36, %s39
      %p45 = scmp.eq.s32.totalorder %s26, 0
      %p46 = por %p44, %p45
      %p47 = scmp.ne.s32.totalorder %s36, %s39
      %p48 = scmp.eq.s32.totalorder %s31, 1
      %p49 = por %p47, %p48
      %p50 = scmp.ne.s32.totalorder %s39, %s40
      %p51 = scmp.eq.s32.totalorder %s31, 0
      %p52 = por %p50, %p51
      %p53 = scmp.ne.s32.totalorder %s39, %s40
      %p54 = scmp.eq.s32.totalorder %s32, 1
      %p55 = por %p53, %p54
      %p57 = scmp.ne.s32.totalorder %s40, %s56
      %p58 = scmp.eq.s32.totalorder %s32, 0
      %p59 = por %p57, %p58
      %s61 = sadd.s32 %s60, 1
      %p64 = scmp.eq.s32.totalorder %s26, 1
      %p65 = scmp.ne.s32.totalorder %s60, %s62
      %p66 = scmp.eq.s32.totalorder %s26, 0
      %p67 = por %p65, %p66
      %p68 = scmp.ne.s32.totalorder %s60, %s62
      %p69 = scmp.eq.s32.totalorder %s31, 1
      %p70 = por %p68, %p69
      %p71 = scmp.ne.s32.totalorder %s62, %s63
      %p72 = scmp.eq.s32.totalorder %s31, 0
      %p73 = por %p71, %p72
      %p74 = scmp.ne.s32.totalorder %s62, %s63
      %p75 = scmp.eq.s32.totalorder %s32, 1
      %p76 = por %p74, %p75
      %p78 = scmp.ne.s32.totalorder %s63, %s77
      %p79 = scmp.eq.s32.totalorder %s32, 0
      %p80 = por %p78, %p79
      %s82 = sadd.s32 %s81, 1
      %p85 = scmp.eq.s32.totalorder %s26, 1
      %p86 = scmp.ne.s32.totalorder %s81, %s83
      %p87 = scmp.eq.s32.totalorder %s26, 0
      %p88 = por %p86, %p87
      %p89 = scmp.ne.s32.totalorder %s81, %s83
      %p90 = scmp.eq.s32.totalorder %s31, 1
      %p91 = por %p89, %p90
      %p92 = scmp.ne.s32.totalorder %s83, %s84
      %p93 = scmp.eq.s32.totalorder %s31, 0
      %p94 = por %p92, %p93
      %p95 = scmp.ne.s32.totalorder %s83, %s84
      %p96 = scmp.eq.s32.totalorder %s32, 1
      %p97 = por %p95, %p96
      %p99 = scmp.ne.s32.totalorder %s84, %s98
      %p100 = scmp.eq.s32.totalorder %s32, 0
      %p101 = por %p99, %p100
      %s103 = sadd.s32 %s102, 1
      %p106 = scmp.eq.s32.totalorder %s26, 1
      %p107 = scmp.ne.s32.totalorder %s102, %s104
      %p108 = scmp.eq.s32.totalorder %s26, 0
      %p109 = por %p107, %p108
      %p110 = scmp.ne.s32.totalorder %s102, %s104
      %p111 = scmp.eq.s32.totalorder %s31, 1
      %p112 = por %p110, %p111
      %p113 = scmp.ne.s32.totalorder %s104, %s105
      %p114 = scmp.eq.s32.totalorder %s31, 0
      %p115 = por %p113, %p114
      %p116 = scmp.ne.s32.totalorder %s104, %s105
      %p117 = scmp.eq.s32.totalorder %s32, 1
      %p118 = por %p116, %p117
      %p120 = scmp.ne.s32.totalorder %s105, %s119
      %p121 = scmp.eq.s32.totalorder %s32, 0
      %p122 = por %p120, %p121
      %s124 = sadd.s32 %s123, 1
      %p127 = scmp.eq.s32.totalorder %s26, 1
      %p128 = scmp.ne.s32.totalorder %s123, %s125
      %p129 = scmp.eq.s32.totalorder %s26, 0
      %p130 = por %p128, %p129
      %p131 = scmp.ne.s32.totalorder %s123, %s125
      %p132 = scmp.eq.s32.totalorder %s31, 1
      %p133 = por %p131, %p132
      %p134 = scmp.ne.s32.totalorder %s125, %s126
      %p135 = scmp.eq.s32.totalorder %s31, 0
      %p136 = por %p134, %p135
      %p137 = scmp.ne.s32.totalorder %s125, %s126
      %p138 = scmp.eq.s32.totalorder %s32, 1
      %p139 = por %p137, %p138
      %p141 = scmp.ne.s32.totalorder %s126, %s140
      %p142 = scmp.eq.s32.totalorder %s32, 0
      %p143 = por %p141, %p142
      %s145 = sadd.s32 %s144, 1
      %p148 = scmp.eq.s32.totalorder %s26, 1
      %p149 = scmp.ne.s32.totalorder %s144, %s146
      %p150 = scmp.eq.s32.totalorder %s26, 0
      %p151 = por %p149, %p150
      %p152 = scmp.ne.s32.totalorder %s144, %s146
      %p153 = scmp.eq.s32.totalorder %s31, 1
      %p154 = por %p152, %p153
      %p155 = scmp.ne.s32.totalorder %s146, %s147
      %p156 = scmp.eq.s32.totalorder %s31, 0
      %p157 = por %p155, %p156
      %p158 = scmp.ne.s32.totalorder %s146, %s147
      %p159 = scmp.eq.s32.totalorder %s32, 1
      %p160 = por %p158, %p159
      %p162 = scmp.ne.s32.totalorder %s147, %s161
      %p163 = scmp.eq.s32.totalorder %s32, 0
      %p164 = por %p162, %p163
      %s166 = sadd.s32 %s165, 1
      %p169 = scmp.eq.s32.totalorder %s26, 1
      %p170 = scmp.ne.s32.totalorder %s165, %s167
      %p171 = scmp.eq.s32.totalorder %s26, 0
      %p172 = por %p170, %p171
      %p173 = scmp.ne.s32.totalorder %s165, %s167
      %p174 = scmp.eq.s32.totalorder %s31, 1
      %p175 = por %p173, %p174
      %p176 = scmp.ne.s32.totalorder %s167, %s168
      %p177 = scmp.eq.s32.totalorder %s31, 0
      %p178 = por %p176, %p177
      %p179 = scmp.ne.s32.totalorder %s167, %s168
      %p180 = scmp.eq.s32.totalorder %s32, 1
      %p181 = por %p179, %p180
      %p183 = scmp.ne.s32.totalorder %s168, %s182
      %p184 = scmp.eq.s32.totalorder %s32, 0
      %p185 = por %p183, %p184
      %s187 = sadd.s32 %s186, 1
      %p190 = scmp.eq.s32.totalorder %s26, 1
      %p191 = scmp.ne.s32.totalorder %s186, %s188
      %p192 = scmp.eq.s32.totalorder %s26, 0
      %p193 = por %p191, %p192
      %p194 = scmp.ne.s32.totalorder %s186, %s188
      %p195 = scmp.eq.s32.totalorder %s31, 1
      %p196 = por %p194, %p195
      %p197 = scmp.ne.s32.totalorder %s188, %s189
      %p198 = scmp.eq.s32.totalorder %s31, 0
      %p199 = por %p197, %p198
      %p200 = scmp.ne.s32.totalorder %s188, %s189
      %p201 = scmp.eq.s32.totalorder %s32, 1
      %p202 = por %p200, %p201
      %p204 = scmp.ne.s32.totalorder %s189, %s203
      %p205 = scmp.eq.s32.totalorder %s32, 0
      %p206 = por %p204, %p205
      %s208 = sadd.s32 %s207, 1
      %p211 = scmp.eq.s32.totalorder %s26, 1
      %p212 = scmp.ne.s32.totalorder %s207, %s209
      %p213 = scmp.eq.s32.totalorder %s26, 0
      %p214 = por %p212, %p213
      %p215 = scmp.ne.s32.totalorder %s207, %s209
      %p216 = scmp.eq.s32.totalorder %s31, 1
      %p217 = por %p215, %p216
      %p218 = scmp.ne.s32.totalorder %s209, %s210
      %p219 = scmp.eq.s32.totalorder %s31, 0
      %p220 = por %p218, %p219
      %p221 = scmp.ne.s32.totalorder %s209, %s210
      %p222 = scmp.eq.s32.totalorder %s32, 1
      %p223 = por %p221, %p222
      %p225 = scmp.ne.s32.totalorder %s210, %s224
      %p226 = scmp.eq.s32.totalorder %s32, 0
      %p227 = por %p225, %p226
      %s229 = sadd.s32 %s228, 1
      %p232 = scmp.eq.s32.totalorder %s26, 1
      %p233 = scmp.ne.s32.totalorder %s228, %s230
      %p234 = scmp.eq.s32.totalorder %s26, 0
      %p235 = por %p233, %p234
      %p236 = scmp.ne.s32.totalorder %s228, %s230
      %p237 = scmp.eq.s32.totalorder %s31, 1
      %p238 = por %p236, %p237
      %p239 = scmp.ne.s32.totalorder %s230, %s231
      %p240 = scmp.eq.s32.totalorder %s31, 0
      %p241 = por %p239, %p240
      %p242 = scmp.ne.s32.totalorder %s230, %s231
      %p243 = scmp.eq.s32.totalorder %s32, 1
      %p244 = por %p242, %p243
      %p246 = scmp.ne.s32.totalorder %s231, %s245
      %p247 = scmp.eq.s32.totalorder %s32, 0
      %p248 = por %p246, %p247
      %s250 = sadd.s32 %s249, 1
      %p253 = scmp.eq.s32.totalorder %s26, 1
      %p254 = scmp.ne.s32.totalorder %s249, %s251
      %p255 = scmp.eq.s32.totalorder %s26, 0
      %p256 = por %p254, %p255
      %p257 = scmp.ne.s32.totalorder %s249, %s251
      %p258 = scmp.eq.s32.totalorder %s31, 1
      %p259 = por %p257, %p258
      %p260 = scmp.ne.s32.totalorder %s251, %s252
      %p261 = scmp.eq.s32.totalorder %s31, 0
      %p262 = por %p260, %p261
      %p263 = scmp.ne.s32.totalorder %s251, %s252
      %p264 = scmp.eq.s32.totalorder %s32, 1
      %p265 = por %p263, %p264
      %p267 = scmp.ne.s32.totalorder %s252, %s266
      %p268 = scmp.eq.s32.totalorder %s32, 0
      %p269 = por %p267, %p268
      %s271 = sadd.s32 %s270, 1
      %p274 = scmp.eq.s32.totalorder %s26, 1
      %p275 = scmp.ne.s32.totalorder %s270, %s272
      %p276 = scmp.eq.s32.totalorder %s26, 0
      %p277 = por %p275, %p276
      %p278 = scmp.ne.s32.totalorder %s270, %s272
      %p279 = scmp.eq.s32.totalorder %s31, 1
      %p280 = por %p278, %p279
      %p281 = scmp.ne.s32.totalorder %s272, %s273
      %p282 = scmp.eq.s32.totalorder %s31, 0
      %p283 = por %p281, %p282
      %p284 = scmp.ne.s32.totalorder %s272, %s273
      %p285 = scmp.eq.s32.totalorder %s32, 1
      %p286 = por %p284, %p285
      %p288 = scmp.ne.s32.totalorder %s273, %s287
      %p289 = scmp.eq.s32.totalorder %s32, 0
      %p290 = por %p288, %p289
      %s292 = sadd.s32 %s291, 1
      %p295 = scmp.eq.s32.totalorder %s26, 1
      %p296 = scmp.ne.s32.totalorder %s291, %s293
      %p297 = scmp.eq.s32.totalorder %s26, 0
      %p298 = por %p296, %p297
      %p299 = scmp.ne.s32.totalorder %s291, %s293
      %p300 = scmp.eq.s32.totalorder %s31, 1
      %p301 = por %p299, %p300
      %p302 = scmp.ne.s32.totalorder %s293, %s294
      %p303 = scmp.eq.s32.totalorder %s31, 0
      %p304 = por %p302, %p303
      %p305 = scmp.ne.s32.totalorder %s293, %s294
      %p306 = scmp.eq.s32.totalorder %s32, 1
      %p307 = por %p305, %p306
      %p309 = scmp.ne.s32.totalorder %s294, %s308
      %p310 = scmp.eq.s32.totalorder %s32, 0
      %p311 = por %p309, %p310
      %s313 = sadd.s32 %s312, 1
      %p316 = scmp.eq.s32.totalorder %s26, 1
      %p317 = scmp.ne.s32.totalorder %s312, %s314
      %p318 = scmp.eq.s32.totalorder %s26, 0
      %p319 = por %p317, %p318
      %p320 = scmp.ne.s32.totalorder %s312, %s314
      %p321 = scmp.eq.s32.totalorder %s31, 1
      %p322 = por %p320, %p321
      %p323 = scmp.ne.s32.totalorder %s314, %s315
      %p324 = scmp.eq.s32.totalorder %s31, 0
      %p325 = por %p323, %p324
      %p326 = scmp.ne.s32.totalorder %s314, %s315
      %p327 = scmp.eq.s32.totalorder %s32, 1
      %p328 = por %p326, %p327
      %p330 = scmp.ne.s32.totalorder %s315, %s329
      %p331 = scmp.eq.s32.totalorder %s32, 0
      %p332 = por %p330, %p331
      %s334 = sadd.s32 %s333, 1
      %p337 = scmp.eq.s32.totalorder %s26, 1
      %p338 = scmp.ne.s32.totalorder %s333, %s335
      %p339 = scmp.eq.s32.totalorder %s26, 0
      %p340 = por %p338, %p339
      %p341 = scmp.ne.s32.totalorder %s333, %s335
      %p342 = scmp.eq.s32.totalorder %s31, 1
      %p343 = por %p341, %p342
      %p344 = scmp.ne.s32.totalorder %s335, %s336
      %p345 = scmp.eq.s32.totalorder %s31, 0
      %p346 = por %p344, %p345
      %p347 = scmp.ne.s32.totalorder %s335, %s336
      %p348 = scmp.eq.s32.totalorder %s32, 1
      %p349 = por %p347, %p348
      %p351 = scmp.ne.s32.totalorder %s336, %s350
      %p352 = scmp.eq.s32.totalorder %s32, 0
      %p353 = por %p351, %p352
      %s355 = sadd.s32 %s354, 1
      %p358 = scmp.eq.s32.totalorder %s26, 1
      %p359 = scmp.ne.s32.totalorder %s354, %s356
      %p360 = scmp.eq.s32.totalorder %s26, 0
      %p361 = por %p359, %p360
      %p362 = scmp.ne.s32.totalorder %s354, %s356
      %p363 = scmp.eq.s32.totalorder %s31, 1
      %p364 = por %p362, %p363
      %p365 = scmp.ne.s32.totalorder %s356, %s357
      %p366 = scmp.eq.s32.totalorder %s31, 0
      %p367 = por %p365, %p366
      %p368 = scmp.ne.s32.totalorder %s356, %s357
      %p369 = scmp.eq.s32.totalorder %s32, 1
      %p370 = por %p368, %p369
      %p372 = scmp.ne.s32.totalorder %s357, %s371
      %p373 = scmp.eq.s32.totalorder %s32, 0
      %p374 = por %p372, %p373
      %s376 = sadd.s32 %s375, 1
      %p379 = scmp.eq.s32.totalorder %s26, 1
      %p380 = scmp.ne.s32.totalorder %s375, %s377
      %p381 = scmp.eq.s32.totalorder %s26, 0
      %p382 = por %p380, %p381
      %p383 = scmp.ne.s32.totalorder %s375, %s377
      %p384 = scmp.eq.s32.totalorder %s31, 1
      %p385 = por %p383, %p384
      %p386 = scmp.ne.s32.totalorder %s377, %s378
      %p387 = scmp.eq.s32.totalorder %s31, 0
      %p388 = por %p386, %p387
      %p389 = scmp.ne.s32.totalorder %s377, %s378
      %p390 = scmp.eq.s32.totalorder %s32, 1
      %p391 = por %p389, %p390
      %p393 = scmp.ne.s32.totalorder %s378, %s392
      %p394 = scmp.eq.s32.totalorder %s32, 0
      %p395 = por %p393, %p394
      %s396 = ssub.s32 %s26, %s33
      %p397 = scmp.eq.s32.totalorder %s396, 0
      %s399 = sadd.s32 %s398, 1
      %s400 = scalar_select %p397, %s398, %s399
      %p403 = pneg %p397
      %p404 = scmp.eq.s32.totalorder %s26, 1
      %p405 = por %p403, %p404
      %p406 = scmp.ne.s32.totalorder %s398, %s401
      %p407 = scmp.eq.s32.totalorder %s26, 0
      %p408 = por %p406, %p407
      %p409 = scmp.ne.s32.totalorder %s398, %s401
      %p410 = scmp.eq.s32.totalorder %s31, 1
      %p411 = por %p409, %p410
      %p412 = scmp.ne.s32.totalorder %s401, %s402
      %p413 = scmp.eq.s32.totalorder %s31, 0
      %p414 = por %p412, %p413
      %p415 = scmp.ne.s32.totalorder %s401, %s402
      %p416 = scmp.eq.s32.totalorder %s32, 1
      %p417 = por %p415, %p416
      %p419 = scmp.ne.s32.totalorder %s402, %s418
      %p420 = scmp.eq.s32.totalorder %s32, 0
      %p421 = por %p419, %p420
      %p422 = scmp.le.s32.totalorder 1, %s26
      %p423 = scmp.lt.s32.totalorder %s26, 3
      %p424 = pnand %p422, %p423
      %p425 = pneg %p424
      // Predicated region
      $region9: #{video_encoder_forward.1} parent=5 // pred_check
        _
      $region10: #{video_encoder_forward.1} parent=5 // pred_check_branch
        %427 = sbr.rel (%p424) target = $region12
      $region11: #{video_encoder_forward.1} parent=5 // pred_region
        %s428 = ssub.s32 %s26, 1
        // Predicated region
        $region13: #{video_encoder_forward.1} parent=11 // pred_check
          %p429 = pneg %p73
        $region14: #{video_encoder_forward.1} parent=11 // pred_check_branch
          %431 = sbr.rel (%p429) target = $region16
        $region15: #{video_encoder_forward.1} parent=11 // pred_region
          _
        $region16: #{video_encoder_forward.1} parent=11 // pred_fallthru
          _
        // Predicated region
        $region17: #{video_encoder_forward.1} parent=11 // pred_check
          %p432 = pneg %p94
        $region18: #{video_encoder_forward.1} parent=11 // pred_check_branch
          %434 = sbr.rel (%p432) target = $region20
        $region19: #{video_encoder_forward.1} parent=11 // pred_region
          _
        $region20: #{video_encoder_forward.1} parent=11 // pred_fallthru
          _
        // Predicated region
        $region21: #{video_encoder_forward.1} parent=11 // pred_check
          %p435 = pneg %p115
        $region22: #{video_encoder_forward.1} parent=11 // pred_check_branch
          %437 = sbr.rel (%p435) target = $region24
        $region23: #{video_encoder_forward.1} parent=11 // pred_region
          _
        $region24: #{video_encoder_forward.1} parent=11 // pred_fallthru
          _
        // Predicated region
        $region25: #{video_encoder_forward.1} parent=11 // pred_check
          %p438 = pneg %p136
        $region26: #{video_encoder_forward.1} parent=11 // pred_check_branch
          %440 = sbr.rel (%p438) target = $region28
        $region27: #{video_encoder_forward.1} parent=11 // pred_region
          _
        $region28: #{video_encoder_forward.1} parent=11 // pred_fallthru
          _
        // Predicated region
        $region29: #{video_encoder_forward.1} parent=11 // pred_check
          %p441 = pneg %p157
        $region30: #{video_encoder_forward.1} parent=11 // pred_check_branch
          %443 = sbr.rel (%p441) target = $region32
        $region31: #{video_encoder_forward.1} parent=11 // pred_region
          _
        $region32: #{video_encoder_forward.1} parent=11 // pred_fallthru
          _
        // Predicated region
        $region33: #{video_encoder_forward.1} parent=11 // pred_check
          %p444 = pneg %p178
        $region34: #{video_encoder_forward.1} parent=11 // pred_check_branch
          %446 = sbr.rel (%p444) target = $region36
        $region35: #{video_encoder_forward.1} parent=11 // pred_region
          _
        $region36: #{video_encoder_forward.1} parent=11 // pred_fallthru
          _
        // Predicated region
        $region37: #{video_encoder_forward.1} parent=11 // pred_check
          %p447 = pneg %p199
        $region38: #{video_encoder_forward.1} parent=11 // pred_check_branch
          %449 = sbr.rel (%p447) target = $region40
        $region39: #{video_encoder_forward.1} parent=11 // pred_region
          _
        $region40: #{video_encoder_forward.1} parent=11 // pred_fallthru
          _
        // Predicated region
        $region41: #{video_encoder_forward.1} parent=11 // pred_check
          %p450 = pneg %p220
        $region42: #{video_encoder_forward.1} parent=11 // pred_check_branch
          %452 = sbr.rel (%p450) target = $region44
        $region43: #{video_encoder_forward.1} parent=11 // pred_region
          _
        $region44: #{video_encoder_forward.1} parent=11 // pred_fallthru
          _
        // Predicated region
        $region45: #{video_encoder_forward.1} parent=11 // pred_check
          %p453 = pneg %p241
        $region46: #{video_encoder_forward.1} parent=11 // pred_check_branch
          %455 = sbr.rel (%p453) target = $region48
        $region47: #{video_encoder_forward.1} parent=11 // pred_region
          _
        $region48: #{video_encoder_forward.1} parent=11 // pred_fallthru
          _
        // Predicated region
        $region49: #{video_encoder_forward.1} parent=11 // pred_check
          %p456 = pneg %p262
        $region50: #{video_encoder_forward.1} parent=11 // pred_check_branch
          %458 = sbr.rel (%p456) target = $region52
        $region51: #{video_encoder_forward.1} parent=11 // pred_region
          _
        $region52: #{video_encoder_forward.1} parent=11 // pred_fallthru
          _
        // Predicated region
        $region53: #{video_encoder_forward.1} parent=11 // pred_check
          %p459 = pneg %p283
        $region54: #{video_encoder_forward.1} parent=11 // pred_check_branch
          %461 = sbr.rel (%p459) target = $region56
        $region55: #{video_encoder_forward.1} parent=11 // pred_region
          _
        $region56: #{video_encoder_forward.1} parent=11 // pred_fallthru
          _
        // Predicated region
        $region57: #{video_encoder_forward.1} parent=11 // pred_check
          %p462 = pneg %p304
        $region58: #{video_encoder_forward.1} parent=11 // pred_check_branch
          %464 = sbr.rel (%p462) target = $region60
        $region59: #{video_encoder_forward.1} parent=11 // pred_region
          _
        $region60: #{video_encoder_forward.1} parent=11 // pred_fallthru
          _
        // Predicated region
        $region61: #{video_encoder_forward.1} parent=11 // pred_check
          %p465 = pneg %p325
        $region62: #{video_encoder_forward.1} parent=11 // pred_check_branch
          %467 = sbr.rel (%p465) target = $region64
        $region63: #{video_encoder_forward.1} parent=11 // pred_region
          _
        $region64: #{video_encoder_forward.1} parent=11 // pred_fallthru
          _
        // Predicated region
        $region65: #{video_encoder_forward.1} parent=11 // pred_check
          %p468 = pneg %p346
        $region66: #{video_encoder_forward.1} parent=11 // pred_check_branch
          %470 = sbr.rel (%p468) target = $region68
        $region67: #{video_encoder_forward.1} parent=11 // pred_region
          _
        $region68: #{video_encoder_forward.1} parent=11 // pred_fallthru
          _
        // Predicated region
        $region69: #{video_encoder_forward.1} parent=11 // pred_check
          %p471 = pneg %p367
        $region70: #{video_encoder_forward.1} parent=11 // pred_check_branch
          %473 = sbr.rel (%p471) target = $region72
        $region71: #{video_encoder_forward.1} parent=11 // pred_region
          _
        $region72: #{video_encoder_forward.1} parent=11 // pred_fallthru
          _
        // Predicated region
        $region73: #{video_encoder_forward.1} parent=11 // pred_check
          %p474 = pneg %p388
        $region74: #{video_encoder_forward.1} parent=11 // pred_check_branch
          %476 = sbr.rel (%p474) target = $region76
        $region75: #{video_encoder_forward.1} parent=11 // pred_region
          _
        $region76: #{video_encoder_forward.1} parent=11 // pred_fallthru
          _
      $region12: #{video_encoder_forward.1} parent=5 // pred_fallthru
        _
      %p477 = scmp.lt.s32.totalorder %s26, 2
      // Predicated region
      $region77: #{video_encoder_forward.1} parent=5 // pred_check
        %p478 = pneg %p477
      $region78: #{video_encoder_forward.1} parent=5 // pred_check_branch
        %480 = sbr.rel (%p478) target = $region80
      $region79: #{video_encoder_forward.1} parent=5 // pred_region
        // Predicated region
        $region81: #{video_encoder_forward.1} parent=79 // pred_check
          %p481 = pneg %p46
        $region82: #{video_encoder_forward.1} parent=79 // pred_check_branch
          %483 = sbr.rel (%p481) target = $region84
        $region83: #{video_encoder_forward.1} parent=79 // pred_region
          %p484 = scmp.lt.s32.totalorder %s26, 1
          %s485 = scalar_select %p484, %s26, 1
          %s486 = smul.addr %s485, 4
          %s487 = smul.addr %s486, 8
          %s488 = scalar_lea.vmem %s0, %s487
        $region84: #{video_encoder_forward.1} parent=79 // pred_fallthru
          _
      $region80: #{video_encoder_forward.1} parent=5 // pred_fallthru
        _
      %p489 = scmp.le.s32.totalorder 1, %s26
      %p490 = scmp.lt.s32.totalorder %s26, 3
      %p491 = pnand %p489, %p490
      %p492 = pneg %p491
      // Predicated region
      $region85: #{video_encoder_forward.1} parent=5 // pred_check
        _
      $region86: #{video_encoder_forward.1} parent=5 // pred_check_branch
        %494 = sbr.rel (%p491) target = $region88
      $region87: #{video_encoder_forward.1} parent=5 // pred_region
        %s495 = ssub.s32 %s26, 1
        %p496 = scmp.lt.s32.totalorder %s31, 1
        %s497 = scalar_select %p496, %s31, 1
        %s498 = smul.addr %s497, 4
        %s499 = smul.addr %s498, 8
        %s500 = scalar_lea.vmem %s0, %s499
        %p501 = pneg %p52
        %p502 = pneg %p49
        %p503 = pneg %p73
        %p504 = pneg %p70
        %p505 = pneg %p94
        %p506 = pneg %p91
        %p507 = pneg %p115
        %p508 = pneg %p112
        %p509 = pneg %p136
        %p510 = pneg %p133
        %p511 = pneg %p157
        %p512 = pneg %p154
        %p513 = pneg %p178
        %p514 = pneg %p175
        %p515 = pneg %p199
        %p516 = pneg %p196
        %p517 = pneg %p220
        %p518 = pneg %p217
        %p519 = pneg %p241
        %p520 = pneg %p238
        %p521 = pneg %p262
        %p522 = pneg %p259
        %p523 = pneg %p283
        %p524 = pneg %p280
        %p525 = pneg %p304
        %p526 = pneg %p301
        %p527 = pneg %p325
        %p528 = pneg %p322
        %p529 = pneg %p346
        %p530 = pneg %p343
        %p531 = pneg %p367
        %p532 = pneg %p364
        %p533 = pneg %p388
        %p534 = pneg %p385
        %p535 = pneg %p414
        %p536 = pneg %p411
        %s537 = sand.u32 %s401, 1
        %s538 = scalar_lea.sflag [#allocation3], %s537
        %s539 = sand.u32 %s401, 1
        %s540 = scalar_lea.vmem [#allocation2], %s539
        %p541 = scmp.lt.s32.totalorder %s31, 1
        %s542 = scalar_select %p541, %s31, 1
        %s543 = smul.addr %s542, 4
        %s544 = smul.addr %s543, 8
        %s545 = scalar_lea.vmem %s0, %s544
        %v547 = vld [vmem:[%s6] sm:$0xff]
        %v548 = vld [vmem:[%s6 + $0x8] sm:$0xff]
        %v549 = vld [vmem:[%s6 + $0x10] sm:$0xff]
        %v550 = vld [vmem:[%s6 + $0x18] sm:$0xff]
        %v551 = vld [vmem:[%s6 + $0x20] sm:$0xff]
        %v552 = vld [vmem:[%s6 + $0x28] sm:$0xff]
        %v553 = vld [vmem:[%s6 + $0x30] sm:$0xff]
        %v554 = vld [vmem:[%s6 + $0x38] sm:$0xff]
        %v555 = vld [vmem:[%s6 + $0x40] sm:$0xff]
        %v556 = vld [vmem:[%s6 + $0x48] sm:$0xff]
        %v557 = vld [vmem:[%s6 + $0x50] sm:$0xff]
        %v558 = vld [vmem:[%s6 + $0x58] sm:$0xff]
        %v559 = vld [vmem:[%s6 + $0x60] sm:$0xff]
        %v560 = vld [vmem:[%s6 + $0x68] sm:$0xff]
        %v561 = vld [vmem:[%s6 + $0x70] sm:$0xff]
        %v562 = vld [vmem:[%s6 + $0x78] sm:$0xff]
        %v563 = vld [vmem:[%s2] sm:$0x7]
        %v564 = vld [vmem:[%s545] sm:$0xff]
        %v565 = vld [vmem:[%s545 + $0x8] sm:$0xff]
        %v566 = vld [vmem:[%s545 + $0x10] sm:$0xff]
        %v567 = vld [vmem:[%s545 + $0x18] sm:$0xff]
        %v568 = vpack.c.bf16 %v565, %v564
        %v569 = vpack.c.bf16 %v567, %v566
        %v570 = vld [vmem:[%s1] sm:$0xf]
        %v571 = vld [vmem:[%s1 + $0x4] sm:$0xf]
        %v572 = vld [vmem:[%s1 + $0x8] sm:$0xf]
        %v573 = vld [vmem:[%s1 + $0xc] sm:$0xf]
        %v574 = vld [vmem:[%s1 + $0x10] sm:$0xf]
        %v575 = vld [vmem:[%s1 + $0x14] sm:$0xf]
        %v576 = vld [vmem:[%s1 + $0x18] sm:$0xf]
        %v577 = vld [vmem:[%s1 + $0x1c] sm:$0xf]
        %v578 = vld [vmem:[%s1 + $0x20] sm:$0xf]
        %v579 = vld [vmem:[%s1 + $0x24] sm:$0xf]
        %v580 = vld [vmem:[%s1 + $0x28] sm:$0xf]
        %v581 = vld [vmem:[%s1 + $0x2c] sm:$0xf]
        %v582 = vld [vmem:[%s1 + $0x30] sm:$0xf]
        %v583 = vld [vmem:[%s1 + $0x34] sm:$0xf]
        %v584 = vld [vmem:[%s1 + $0x38] sm:$0xf]
        %v585 = vld [vmem:[%s1 + $0x3c] sm:$0xf]
        %v586 = vlaneseq
        %v587 = vshrl.u32 %v586, 7
        %v588 = vsub.s32 0, %v587
        %v589 = vrot.slane %v563, %v588
        %v606 = vunpack.c.l.b16 %v570
        %v607 = vunpack.c.l.b16 %v571
        %v608 = vunpack.c.l.b16 %v572
        %v609 = vunpack.c.l.b16 %v573
        %v610 = vunpack.c.l.b16 %v574
        %v611 = vunpack.c.l.b16 %v575
        %v612 = vunpack.c.l.b16 %v576
        %v613 = vunpack.c.l.b16 %v577
        %v614 = vunpack.c.l.b16 %v578
        %v615 = vunpack.c.l.b16 %v579
        %v616 = vunpack.c.l.b16 %v580
        %v617 = vunpack.c.l.b16 %v581
        %v618 = vunpack.c.l.b16 %v582
        %v619 = vunpack.c.l.b16 %v583
        %v620 = vunpack.c.l.b16 %v584
        %v621 = vunpack.c.l.b16 %v585
        %v622 = vpack.c.b16 %v607, %v606
        %v623 = vpack.c.b16 %v609, %v608
        %v624 = vpack.c.b16 %v611, %v610
        %v625 = vpack.c.b16 %v613, %v612
        %v626 = vpack.c.b16 %v615, %v614
        %v627 = vpack.c.b16 %v617, %v616
        %v628 = vpack.c.b16 %v619, %v618
        %v629 = vpack.c.b16 %v621, %v620
        %638 = vmatprep.subr.bf16.mxu0 0
        %639 = vmatpush1.bf16.msra.mxu0 %v629
        %640 = vmatprep.subr.bf16.mxu0 0
        %641 = vmatpush1.bf16.msra.mxu0 %v628
        %642 = vmatprep.subr.bf16.mxu0 0
        %643 = vmatpush1.bf16.msra.mxu0 %v627
        %644 = vmatprep.subr.bf16.mxu0 0
        %645 = vmatpush1.bf16.msra.mxu0 %v626
        %646 = vmatprep.subr.bf16.mxu0 0
        %647 = vmatpush1.bf16.msra.mxu0 %v625
        %648 = vmatprep.subr.bf16.mxu0 0
        %649 = vmatpush1.bf16.msra.mxu0 %v624
        %650 = vmatprep.subr.bf16.mxu0 0
        %651 = vmatpush1.bf16.msra.mxu0 %v623
        %652 = vmatprep.subr.bf16.mxu0 0
        %653 = vmatpush1.bf16.msra.mxu0 %v622
        %654 = vmatprep.subr.bf16.mxu0 0
        %655 = vmatpush2.bf16.msra.mxu0 0
        %656 = vmatprep.subr.bf16.mxu0 0
        %657 = vmatpush2.bf16.msra.mxu0 0
        %658 = vmatprep.subr.bf16.mxu0 0
        %659 = vmatpush2.bf16.msra.mxu0 0
        %660 = vmatprep.subr.bf16.mxu0 0
        %661 = vmatpush2.bf16.msra.mxu0 0
        %662 = vmatprep.subr.bf16.mxu0 0
        %663 = vmatpush2.bf16.msra.mxu0 0
        %664 = vmatprep.subr.bf16.mxu0 0
        %665 = vmatpush2.bf16.msra.mxu0 0
        %666 = vmatprep.subr.bf16.mxu0 0
        %667 = vmatpush2.bf16.msra.mxu0 0
        %668 = vmatprep.subr.bf16.mxu0 0
        %669 = vmatpush2.bf16.msra.mxu0 0
        %670 = vmatprep.mubr.bf16.mxu0 0
        %671 = vmatmul.mubr.bf16.gmra.mxu0 %v568
        %v672 = vpop.f32.mrf.mxu0
        %v673 = vadd.f32 %v589, %v672
        %v674 = vpop.f32.mrf.mxu0
        %v675 = vpop.f32.mrf.mxu0
        %v676 = vadd.f32 %v589, %v675
        %v677 = vpop.f32.mrf.mxu0
        %678 = vmatprep.mubr.bf16.mxu0 0
        %679 = vmatmul.mubr.bf16.gmra.mxu0 %v569
        %v680 = vpop.f32.mrf.mxu0
        %v681 = vadd.f32 %v589, %v680
        %v682 = vpop.f32.mrf.mxu0
        %v683 = vpop.f32.mrf.mxu0
        %v684 = vadd.f32 %v589, %v683
        %v685 = vpop.f32.mrf.mxu0
        %686 = vdwg.mxu0
        %687 = vadd.xlane.f32.xlu0 %v673
        %v688 = vpop.xlane.xlu0 %687
        %689 = vadd.xlane.f32.xlu0 %v676
        %v690 = vpop.xlane.xlu0 %689
        %691 = vadd.xlane.f32.xlu0 %v681
        %v692 = vpop.xlane.xlu0 %691
        %693 = vadd.xlane.f32.xlu0 %v684
        %v694 = vpop.xlane.xlu0 %693
        %v695 = vrcp.pop 128.0
        %v696 = vmul.f32 %v688, %v695
        %v697 = vmul.f32 %v690, %v695
        %v698 = vmul.f32 %v692, %v695
        %v699 = vmul.f32 %v694, %v695
        %v700 = vsub.f32 %v673, %v696
        %v701 = vsub.f32 %v676, %v697
        %v702 = vsub.f32 %v681, %v698
        %v703 = vsub.f32 %v684, %v699
        %v704 = vmul.f32 %v700, %v700
        %v705 = vmul.f32 %v701, %v701
        %v706 = vmul.f32 %v702, %v702
        %v707 = vmul.f32 %v703, %v703
        %708 = vadd.xlane.f32.xlu0 %v704
        %v709 = vpop.xlane.xlu0 %708
        %710 = vadd.xlane.f32.xlu0 %v705
        %v711 = vpop.xlane.xlu0 %710
        %712 = vadd.xlane.f32.xlu0 %v706
        %v713 = vpop.xlane.xlu0 %712
        %714 = vadd.xlane.f32.xlu0 %v707
        %v715 = vpop.xlane.xlu0 %714
        %v716 = vmul.f32 %v709, %v695
        %v717 = vmul.f32 %v711, %v695
        %v718 = vmul.f32 %v713, %v695
        %v719 = vmul.f32 %v715, %v695
        %v720 = vadd.f32 %v716, 1e-05
        %v721 = vadd.f32 %v717, 1e-05
        %v722 = vadd.f32 %v718, 1e-05
        %v723 = vadd.f32 %v719, 1e-05
        %v724 = vrsqrt.pop %v720
        %v725 = vrsqrt.pop %v721
        %v726 = vrsqrt.pop %v722
        %v727 = vrsqrt.pop %v723
        %v728 = vmul.f32 %v700, %v724
        %v729 = vmul.f32 %v701, %v725
        %v730 = vmul.f32 %v702, %v726
        %v731 = vmul.f32 %v703, %v727
        %v732 = vlaneseq
        %v733 = vshrl.u32 %v732, 7
        %v734 = vsub.s32 1, %v733
        %v735 = vrot.slane %v563, %v734
        %v736 = vmul.f32 %v728, %v735
        %v737 = vmul.f32 %v729, %v735
        %v738 = vmul.f32 %v730, %v735
        %v739 = vmul.f32 %v731, %v735
        %v740 = vlaneseq
        %v741 = vshrl.u32 %v740, 7
        %v742 = vsub.s32 2, %v741
        %v743 = vrot.slane %v563, %v742
        %v744 = vadd.f32 %v736, %v743
        %v745 = vadd.f32 %v737, %v743
        %v746 = vadd.f32 %v738, %v743
        %v747 = vadd.f32 %v739, %v743
        %v748 = vld [vmem:[%s11] sm:$0x3f]
        %749 = vadd.xlane.f32.xlu0 %v744
        %v750 = vpop.xlane.xlu0 %749
        %751 = vadd.xlane.f32.xlu0 %v745
        %v752 = vpop.xlane.xlu0 %751
        %753 = vadd.xlane.f32.xlu0 %v746
        %v754 = vpop.xlane.xlu0 %753
        %755 = vadd.xlane.f32.xlu0 %v747
        %v756 = vpop.xlane.xlu0 %755
        %v757 = vmul.f32 %v750, %v695
        %v758 = vmul.f32 %v752, %v695
        %v759 = vmul.f32 %v754, %v695
        %v760 = vmul.f32 %v756, %v695
        %v761 = vsub.f32 %v744, %v757
        %v762 = vsub.f32 %v745, %v758
        %v763 = vsub.f32 %v746, %v759
        %v764 = vsub.f32 %v747, %v760
        %v765 = vmul.f32 %v761, %v761
        %v766 = vmul.f32 %v762, %v762
        %v767 = vmul.f32 %v763, %v763
        %v768 = vmul.f32 %v764, %v764
        %769 = vadd.xlane.f32.xlu0 %v765
        %v770 = vpop.xlane.xlu0 %769
        %771 = vadd.xlane.f32.xlu0 %v766
        %v772 = vpop.xlane.xlu0 %771
        %773 = vadd.xlane.f32.xlu0 %v767
        %v774 = vpop.xlane.xlu0 %773
        %775 = vadd.xlane.f32.xlu0 %v768
        %v776 = vpop.xlane.xlu0 %775
        %v777 = vmul.f32 %v770, %v695
        %v778 = vmul.f32 %v772, %v695
        %v779 = vmul.f32 %v774, %v695
        %v780 = vmul.f32 %v776, %v695
        %v781 = vadd.f32 %v777, 1e-05
        %v782 = vadd.f32 %v778, 1e-05
        %v783 = vadd.f32 %v779, 1e-05
        %v784 = vadd.f32 %v780, 1e-05
        %v785 = vrsqrt.pop %v781
        %v786 = vrsqrt.pop %v782
        %v787 = vrsqrt.pop %v783
        %v788 = vrsqrt.pop %v784
        %v789 = vmul.f32 %v761, %v785
        %v790 = vmul.f32 %v762, %v786
        %v791 = vmul.f32 %v763, %v787
        %v792 = vmul.f32 %v764, %v788
        %v793 = vlaneseq
        %v794 = vshrl.u32 %v793, 7
        %v795 = vsub.s32 0, %v794
        %v796 = vrot.slane %v748, %v795
        %v797 = vmul.f32 %v789, %v796
        %v798 = vmul.f32 %v790, %v796
        %v799 = vmul.f32 %v791, %v796
        %v800 = vmul.f32 %v792, %v796
        %v801 = vlaneseq
        %v802 = vshrl.u32 %v801, 7
        %v803 = vsub.s32 1, %v802
        %v804 = vrot.slane %v748, %v803
        %v805 = vadd.f32 %v797, %v804
        %v806 = vadd.f32 %v798, %v804
        %v807 = vadd.f32 %v799, %v804
        %v808 = vadd.f32 %v800, %v804
        %v809 = vpack.c.bf16 %v806, %v805
        %v810 = vpack.c.bf16 %v808, %v807
        %v811 = vld [vmem:[%s3] sm:$0xff]
        %v812 = vld [vmem:[%s3 + $0x8] sm:$0xf]
        %v813 = vld [vmem:[%s3 + $0xc] sm:$0xff]
        %v814 = vld [vmem:[%s3 + $0x14] sm:$0xf]
        %v815 = vld [vmem:[%s3 + $0x18] sm:$0xff]
        %v816 = vld [vmem:[%s3 + $0x20] sm:$0xf]
        %v817 = vld [vmem:[%s3 + $0x24] sm:$0xff]
        %v818 = vld [vmem:[%s3 + $0x2c] sm:$0xf]
        %v819 = vld [vmem:[%s3 + $0x30] sm:$0xff]
        %v820 = vld [vmem:[%s3 + $0x38] sm:$0xf]
        %v821 = vld [vmem:[%s3 + $0x3c] sm:$0xff]
        %v822 = vld [vmem:[%s3 + $0x44] sm:$0xf]
        %v823 = vld [vmem:[%s3 + $0x48] sm:$0xff]
        %v824 = vld [vmem:[%s3 + $0x50] sm:$0xf]
        %v825 = vld [vmem:[%s3 + $0x54] sm:$0xff]
        %v826 = vld [vmem:[%s3 + $0x5c] sm:$0xf]
        %v827 = vld [vmem:[%s3 + $0x60] sm:$0xff]
        %v828 = vld [vmem:[%s3 + $0x68] sm:$0xf]
        %v829 = vld [vmem:[%s3 + $0x6c] sm:$0xff]
        %v830 = vld [vmem:[%s3 + $0x74] sm:$0xf]
        %v831 = vld [vmem:[%s3 + $0x78] sm:$0xff]
        %v832 = vld [vmem:[%s3 + $0x80] sm:$0xf]
        %v833 = vld [vmem:[%s3 + $0x84] sm:$0xff]
        %v834 = vld [vmem:[%s3 + $0x8c] sm:$0xf]
        %v835 = vld [vmem:[%s3 + $0x90] sm:$0xff]
        %v836 = vld [vmem:[%s3 + $0x98] sm:$0xf]
        %v837 = vld [vmem:[%s3 + $0x9c] sm:$0xff]
        %v838 = vld [vmem:[%s3 + $0xa4] sm:$0xf]
        %v839 = vld [vmem:[%s3 + $0xa8] sm:$0xff]
        %v840 = vld [vmem:[%s3 + $0xb0] sm:$0xf]
        %v841 = vld [vmem:[%s3 + $0xb4] sm:$0xff]
        %v842 = vld [vmem:[%s3 + $0xbc] sm:$0xf]
        %v843 = vld [vmem:[%s4] sm:$0x7]
        %v845 = vlaneseq
        %v846 = vshrl.u32 %v845, 7
        %v847 = vsub.s32 0, %v846
        %v848 = vrot.slane %v843, %v847
        %v849 = vlaneseq
        %v850 = vshrl.u32 %v849, 7
        %v851 = vsub.s32 1, %v850
        %v852 = vrot.slane %v843, %v851
        %v853 = vlaneseq
        %v854 = vshrl.u32 %v853, 7
        %v855 = vsub.s32 2, %v854
        %v856 = vrot.slane %v843, %v855
        %v892 = vunpack.c.l.b16 %v811
        %v893 = vunpack.c.h.b16 %v811
        %v894 = vunpack.c.l.b16 %v812
        %v895 = vunpack.c.l.b16 %v813
        %v896 = vunpack.c.h.b16 %v813
        %v897 = vunpack.c.l.b16 %v814
        %v898 = vunpack.c.l.b16 %v815
        %v899 = vunpack.c.h.b16 %v815
        %v900 = vunpack.c.l.b16 %v816
        %v901 = vunpack.c.l.b16 %v817
        %v902 = vunpack.c.h.b16 %v817
        %v903 = vunpack.c.l.b16 %v818
        %v904 = vunpack.c.l.b16 %v819
        %v905 = vunpack.c.h.b16 %v819
        %v906 = vunpack.c.l.b16 %v820
        %v907 = vunpack.c.l.b16 %v821
        %v908 = vunpack.c.h.b16 %v821
        %v909 = vunpack.c.l.b16 %v822
        %v910 = vunpack.c.l.b16 %v823
        %v911 = vunpack.c.h.b16 %v823
        %v912 = vunpack.c.l.b16 %v824
        %v913 = vunpack.c.l.b16 %v825
        %v914 = vunpack.c.h.b16 %v825
        %v915 = vunpack.c.l.b16 %v826
        %v916 = vunpack.c.l.b16 %v827
        %v917 = vunpack.c.h.b16 %v827
        %v918 = vunpack.c.l.b16 %v828
        %v919 = vunpack.c.l.b16 %v829
        %v920 = vunpack.c.h.b16 %v829
        %v921 = vunpack.c.l.b16 %v830
        %v922 = vunpack.c.l.b16 %v831
        %v923 = vunpack.c.h.b16 %v831
        %v924 = vunpack.c.l.b16 %v832
        %v925 = vunpack.c.l.b16 %v833
        %v926 = vunpack.c.h.b16 %v833
        %v927 = vunpack.c.l.b16 %v834
        %v928 = vunpack.c.l.b16 %v835
        %v929 = vunpack.c.h.b16 %v835
        %v930 = vunpack.c.l.b16 %v836
        %v931 = vunpack.c.l.b16 %v837
        %v932 = vunpack.c.h.b16 %v837
        %v933 = vunpack.c.l.b16 %v838
        %v934 = vunpack.c.l.b16 %v839
        %v935 = vunpack.c.h.b16 %v839
        %v936 = vunpack.c.l.b16 %v840
        %v937 = vunpack.c.l.b16 %v841
        %v938 = vunpack.c.h.b16 %v841
        %v939 = vunpack.c.l.b16 %v842
        %v940 = vpack.c.b16 %v895, %v892
        %v941 = vpack.c.b16 %v896, %v893
        %v942 = vpack.c.b16 %v897, %v894
        %v943 = vpack.c.b16 %v901, %v898
        %v944 = vpack.c.b16 %v902, %v899
        %v945 = vpack.c.b16 %v903, %v900
        %v946 = vpack.c.b16 %v907, %v904
        %v947 = vpack.c.b16 %v908, %v905
        %v948 = vpack.c.b16 %v909, %v906
        %v949 = vpack.c.b16 %v913, %v910
        %v950 = vpack.c.b16 %v914, %v911
        %v951 = vpack.c.b16 %v915, %v912
        %v952 = vpack.c.b16 %v919, %v916
        %v953 = vpack.c.b16 %v920, %v917
        %v954 = vpack.c.b16 %v921, %v918
        %v955 = vpack.c.b16 %v925, %v922
        %v956 = vpack.c.b16 %v926, %v923
        %v957 = vpack.c.b16 %v927, %v924
        %v958 = vpack.c.b16 %v931, %v928
        %v959 = vpack.c.b16 %v932, %v929
        %v960 = vpack.c.b16 %v933, %v930
        %v961 = vpack.c.b16 %v937, %v934
        %v962 = vpack.c.b16 %v938, %v935
        %v963 = vpack.c.b16 %v939, %v936
        %988 = vmatprep.subr.bf16.mxu0 %v962
        %989 = vmatpush1.bf16.msra.mxu0 %v961
        %990 = vmatprep.subr.bf16.mxu0 %v959
        %991 = vmatpush1.bf16.msra.mxu0 %v958
        %992 = vmatprep.subr.bf16.mxu0 %v956
        %993 = vmatpush1.bf16.msra.mxu0 %v955
        %994 = vmatprep.subr.bf16.mxu0 %v953
        %995 = vmatpush1.bf16.msra.mxu0 %v952
        %996 = vmatprep.subr.bf16.mxu0 %v950
        %997 = vmatpush1.bf16.msra.mxu0 %v949
        %998 = vmatprep.subr.bf16.mxu0 %v947
        %999 = vmatpush1.bf16.msra.mxu0 %v946
        %1000 = vmatprep.subr.bf16.mxu0 %v944
        %1001 = vmatpush1.bf16.msra.mxu0 %v943
        %1002 = vmatprep.subr.bf16.mxu0 %v941
        %1003 = vmatpush1.bf16.msra.mxu0 %v940
        %1004 = vmatprep.subr.bf16.mxu0 0
        %1005 = vmatpush2.bf16.msra.mxu0 0
        %1006 = vmatprep.subr.bf16.mxu0 0
        %1007 = vmatpush2.bf16.msra.mxu0 0
        %1008 = vmatprep.subr.bf16.mxu0 0
        %1009 = vmatpush2.bf16.msra.mxu0 0
        %1010 = vmatprep.subr.bf16.mxu0 0
        %1011 = vmatpush2.bf16.msra.mxu0 0
        %1012 = vmatprep.subr.bf16.mxu0 0
        %1013 = vmatpush2.bf16.msra.mxu0 0
        %1014 = vmatprep.subr.bf16.mxu0 0
        %1015 = vmatpush2.bf16.msra.mxu0 0
        %1016 = vmatprep.subr.bf16.mxu0 0
        %1017 = vmatpush2.bf16.msra.mxu0 0
        %1018 = vmatprep.subr.bf16.mxu0 0
        %1019 = vmatpush2.bf16.msra.mxu0 0
        %1020 = vmatprep.mubr.bf16.mxu0 0
        %1021 = vmatmul.mubr.bf16.gmra.mxu0 %v809
        %v1022 = vpop.f32.mrf.mxu0
        %v1023 = vadd.f32 %v848, %v1022
        %v1024 = vpop.f32.mrf.mxu0
        %v1025 = vadd.f32 %v852, %v1024
        %v1026 = vpop.f32.mrf.mxu0
        %v1027 = vadd.f32 %v848, %v1026
        %v1028 = vpop.f32.mrf.mxu0
        %v1029 = vadd.f32 %v852, %v1028
        %1030 = vmatprep.mubr.bf16.mxu0 0
        %1031 = vmatmul.mubr.bf16.gmra.mxu0 %v810
        %v1032 = vpop.f32.mrf.mxu0
        %v1033 = vadd.f32 %v848, %v1032
        %v1034 = vpop.f32.mrf.mxu0
        %v1035 = vadd.f32 %v852, %v1034
        %v1036 = vpop.f32.mrf.mxu0
        %v1037 = vadd.f32 %v848, %v1036
        %v1038 = vpop.f32.mrf.mxu0
        %v1039 = vadd.f32 %v852, %v1038
        %1040 = vdwg.mxu0
        %1041 = vmatprep.subr.bf16.mxu0 0
        %1042 = vmatpush1.bf16.msra.mxu0 %v963
        %1043 = vmatprep.subr.bf16.mxu0 0
        %1044 = vmatpush1.bf16.msra.mxu0 %v960
        %1045 = vmatprep.subr.bf16.mxu0 0
        %1046 = vmatpush1.bf16.msra.mxu0 %v957
        %1047 = vmatprep.subr.bf16.mxu0 0
        %1048 = vmatpush1.bf16.msra.mxu0 %v954
        %1049 = vmatprep.subr.bf16.mxu0 0
        %1050 = vmatpush1.bf16.msra.mxu0 %v951
        %1051 = vmatprep.subr.bf16.mxu0 0
        %1052 = vmatpush1.bf16.msra.mxu0 %v948
        %1053 = vmatprep.subr.bf16.mxu0 0
        %1054 = vmatpush1.bf16.msra.mxu0 %v945
        %1055 = vmatprep.subr.bf16.mxu0 0
        %1056 = vmatpush1.bf16.msra.mxu0 %v942
        %1057 = vmatprep.subr.bf16.mxu0 0
        %1058 = vmatpush2.bf16.msra.mxu0 0
        %1059 = vmatprep.subr.bf16.mxu0 0
        %1060 = vmatpush2.bf16.msra.mxu0 0
        %1061 = vmatprep.subr.bf16.mxu0 0
        %1062 = vmatpush2.bf16.msra.mxu0 0
        %1063 = vmatprep.subr.bf16.mxu0 0
        %1064 = vmatpush2.bf16.msra.mxu0 0
        %1065 = vmatprep.subr.bf16.mxu0 0
        %1066 = vmatpush2.bf16.msra.mxu0 0
        %1067 = vmatprep.subr.bf16.mxu0 0
        %1068 = vmatpush2.bf16.msra.mxu0 0
        %1069 = vmatprep.subr.bf16.mxu0 0
        %1070 = vmatpush2.bf16.msra.mxu0 0
        %1071 = vmatprep.subr.bf16.mxu0 0
        %1072 = vmatpush2.bf16.msra.mxu0 0
        %1073 = vmatprep.mubr.bf16.mxu0 0
        %1074 = vmatmul.mubr.bf16.gmra.mxu0 %v809
        %v1075 = vpop.f32.mrf.mxu0
        %v1076 = vadd.f32 %v856, %v1075
        %v1077 = vpop.f32.mrf.mxu0
        %v1078 = vpop.f32.mrf.mxu0
        %v1079 = vadd.f32 %v856, %v1078
        %v1080 = vpop.f32.mrf.mxu0
        %1081 = vmatprep.mubr.bf16.mxu0 0
        %1082 = vmatmul.mubr.bf16.gmra.mxu0 %v810
        %v1083 = vpop.f32.mrf.mxu0
        %v1084 = vadd.f32 %v856, %v1083
        %v1085 = vpop.f32.mrf.mxu0
        %v1086 = vpop.f32.mrf.mxu0
        %v1087 = vadd.f32 %v856, %v1086
        %v1088 = vpop.f32.mrf.mxu0
        %1089 = vdwg.mxu0
        %v1090 = vmul.f32 %v1025, %v547
        %v1091 = vmul.f32 %v1029, %v548
        %v1092 = vmul.f32 %v1035, %v549
        %v1093 = vmul.f32 %v1039, %v550
        %v1094 = vmul.f32 %v1025, %v551
        %v1095 = vmul.f32 %v1029, %v552
        %v1096 = vmul.f32 %v1035, %v553
        %v1097 = vmul.f32 %v1039, %v554
        %v1098 = vmul.f32 %v1025, %v555
        %v1099 = vmul.f32 %v1029, %v556
        %v1100 = vmul.f32 %v1035, %v557
        %v1101 = vmul.f32 %v1039, %v558
        %v1102 = vmul.f32 %v1025, %v559
        %v1103 = vmul.f32 %v1029, %v560
        %v1104 = vmul.f32 %v1035, %v561
        %v1105 = vmul.f32 %v1039, %v562
        %1106 = vmatprep.subr.mxu0 0.0
        %1107 = vmatpush1.xpose.msra.mxu0 %v1105
        %1108 = vmatprep.subr.mxu0 0.0
        %1109 = vmatpush1.xpose.msra.mxu0 %v1104
        %1110 = vmatprep.subr.mxu0 0.0
        %1111 = vmatpush1.xpose.msra.mxu0 %v1103
        %1112 = vmatprep.subr.mxu0 0.0
        %1113 = vmatpush1.xpose.msra.mxu0 %v1102
        %1114 = vmatprep.subr.mxu0 0.0
        %1115 = vmatpush1.xpose.msra.mxu0 %v1101
        %1116 = vmatprep.subr.mxu0 0.0
        %1117 = vmatpush1.xpose.msra.mxu0 %v1100
        %1118 = vmatprep.subr.mxu0 0.0
        %1119 = vmatpush1.xpose.msra.mxu0 %v1099
        %1120 = vmatprep.subr.mxu0 0.0
        %1121 = vmatpush1.xpose.msra.mxu0 %v1098
        %1122 = vmatprep.subr.mxu0 0.0
        %1123 = vmatpush1.xpose.msra.mxu0 %v1097
        %1124 = vmatprep.subr.mxu0 0.0
        %1125 = vmatpush1.xpose.msra.mxu0 %v1096
        %1126 = vmatprep.subr.mxu0 0.0
        %1127 = vmatpush1.xpose.msra.mxu0 %v1095
        %1128 = vmatprep.subr.mxu0 0.0
        %1129 = vmatpush1.xpose.msra.mxu0 %v1094
        %1130 = vmatprep.subr.mxu0 0.0
        %1131 = vmatpush1.xpose.msra.mxu0 %v1093
        %1132 = vmatprep.subr.mxu0 0.0
        %1133 = vmatpush1.xpose.msra.mxu0 %v1092
        %1134 = vmatprep.subr.mxu0 0.0
        %1135 = vmatpush1.xpose.msra.mxu0 %v1091
        %1136 = vmatprep.subr.mxu0 0.0
        %1137 = vmatpush1.xpose.msra.mxu0 %v1090
        %1138 = vmatprep.subr.mxu0 0.0
        %1139 = vmatpush2.xpose.msra.mxu0 0.0
        %1140 = vmatprep.subr.mxu0 0.0
        %1141 = vmatpush2.xpose.msra.mxu0 0.0
        %1142 = vmatprep.subr.mxu0 0.0
        %1143 = vmatpush2.xpose.msra.mxu0 0.0
        %1144 = vmatprep.subr.mxu0 0.0
        %1145 = vmatpush2.xpose.msra.mxu0 0.0
        %1146 = vmatprep.subr.mxu0 0.0
        %1147 = vmatpush2.xpose.msra.mxu0 0.0
        %1148 = vmatprep.subr.mxu0 0.0
        %1149 = vmatpush2.xpose.msra.mxu0 0.0
        %1150 = vmatprep.subr.mxu0 0.0
        %1151 = vmatpush2.xpose.msra.mxu0 0.0
        %1152 = vmatprep.subr.mxu0 0.0
        %1153 = vmatpush2.xpose.msra.mxu0 0.0
        %1154 = vmatprep.subr.mxu0 0.0
        %1155 = vmatpush2.xpose.msra.mxu0 0.0
        %1156 = vmatprep.subr.mxu0 0.0
        %1157 = vmatpush2.xpose.msra.mxu0 0.0
        %1158 = vmatprep.subr.mxu0 0.0
        %1159 = vmatpush2.xpose.msra.mxu0 0.0
        %1160 = vmatprep.subr.mxu0 0.0
        %1161 = vmatpush2.xpose.msra.mxu0 0.0
        %1162 = vmatprep.subr.mxu0 0.0
        %1163 = vmatpush2.xpose.msra.mxu0 0.0
        %1164 = vmatprep.subr.mxu0 0.0
        %1165 = vmatpush2.xpose.msra.mxu0 0.0
        %1166 = vmatprep.subr.mxu0 0.0
        %1167 = vmatpush2.xpose.msra.mxu0 0.0
        %1168 = vmatprep.subr.mxu0 0.0
        %1169 = vmatpush2.xpose.msra.mxu0 0.0
        %1170 = vmatprep.mubr.f32.mxu0 0.0
        %1171 = vmatmul.mubr.f32.gmra.mxu0 %v1023
        %v1172 = vpop.f32.mrf.mxu0
        %v1173 = vadd.f32 0.0, %v1172
        %v1174 = vpop.f32.mrf.mxu0
        %1175 = vmatprep.mubr.f32.mxu0 0.0
        %1176 = vmatmul.mubr.f32.gmra.mxu0 %v1027
        %v1177 = vpop.f32.mrf.mxu0
        %v1178 = vadd.f32 0.0, %v1177
        %v1179 = vpop.f32.mrf.mxu0
        %1180 = vmatprep.mubr.f32.mxu0 0.0
        %1181 = vmatmul.mubr.f32.gmra.mxu0 %v1033
        %v1182 = vpop.f32.mrf.mxu0
        %v1183 = vadd.f32 0.0, %v1182
        %v1184 = vpop.f32.mrf.mxu0
        %1185 = vmatprep.mubr.f32.mxu0 0.0
        %1186 = vmatmul.mubr.f32.gmra.mxu0 %v1037
        %v1187 = vpop.f32.mrf.mxu0
        %v1188 = vadd.f32 0.0, %v1187
        %v1189 = vpop.f32.mrf.mxu0
        %1190 = vdwg.mxu0
        %v1191 = vmul.f32 %v1173, 0.17677669
        %v1192 = vmul.f32 %v1178, 0.17677669
        %v1193 = vmul.f32 %v1183, 0.17677669
        %v1194 = vmul.f32 %v1188, 0.17677669
        %v1195 = vld [vmem:[%s5] sm:$0xff]
        %v1196 = vld [vmem:[%s5 + $0x8] sm:$0xff]
        %v1197 = vld [vmem:[%s5 + $0x10] sm:$0xff]
        %v1198 = vld [vmem:[%s5 + $0x18] sm:$0xff]
        %v1199 = vadd.f32 %v1191, %v1195
        %v1200 = vadd.f32 %v1192, %v1196
        %v1201 = vadd.f32 %v1193, %v1197
        %v1202 = vadd.f32 %v1194, %v1198
        %1203 = vmax.xlane.f32.xlu0 %v1199
        %v1204 = vpop.xlane.xlu0 %1203
        %1205 = vmax.xlane.f32.xlu0 %v1200
        %v1206 = vpop.xlane.xlu0 %1205
        %1207 = vmax.xlane.f32.xlu0 %v1201
        %v1208 = vpop.xlane.xlu0 %1207
        %1209 = vmax.xlane.f32.xlu0 %v1202
        %v1210 = vpop.xlane.xlu0 %1209
        %v1211 = vsub.f32 %v1199, %v1204
        %v1212 = vsub.f32 %v1200, %v1206
        %v1213 = vsub.f32 %v1201, %v1208
        %v1214 = vsub.f32 %v1202, %v1210
        %v1215 = vmul.f32 %v1211, 1.442695
        %v1216 = vpow.pop %v1215
        %v1217 = vmul.f32 %v1212, 1.442695
        %v1218 = vpow.pop %v1217
        %v1219 = vmul.f32 %v1213, 1.442695
        %v1220 = vpow.pop %v1219
        %v1221 = vmul.f32 %v1214, 1.442695
        %v1222 = vpow.pop %v1221
        %v1223 = vmul.f32 %v1076, %v547
        %v1224 = vmul.f32 %v1079, %v548
        %v1225 = vmul.f32 %v1084, %v549
        %v1226 = vmul.f32 %v1087, %v550
        %v1227 = vmul.f32 %v1076, %v551
        %v1228 = vmul.f32 %v1079, %v552
        %v1229 = vmul.f32 %v1084, %v553
        %v1230 = vmul.f32 %v1087, %v554
        %v1231 = vmul.f32 %v1076, %v555
        %v1232 = vmul.f32 %v1079, %v556
        %v1233 = vmul.f32 %v1084, %v557
        %v1234 = vmul.f32 %v1087, %v558
        %v1235 = vmul.f32 %v1076, %v559
        %v1236 = vmul.f32 %v1079, %v560
        %v1237 = vmul.f32 %v1084, %v561
        %v1238 = vmul.f32 %v1087, %v562
        %1239 = vmatprep.subr.mxu0 0.0
        %1240 = vmatpush1.msra.mxu0 %v1238
        %1241 = vmatprep.subr.mxu0 0.0
        %1242 = vmatpush1.msra.mxu0 %v1237
        %1243 = vmatprep.subr.mxu0 0.0
        %1244 = vmatpush1.msra.mxu0 %v1236
        %1245 = vmatprep.subr.mxu0 0.0
        %1246 = vmatpush1.msra.mxu0 %v1235
        %1247 = vmatprep.subr.mxu0 0.0
        %1248 = vmatpush1.msra.mxu0 %v1234
        %1249 = vmatprep.subr.mxu0 0.0
        %1250 = vmatpush1.msra.mxu0 %v1233
        %1251 = vmatprep.subr.mxu0 0.0
        %1252 = vmatpush1.msra.mxu0 %v1232
        %1253 = vmatprep.subr.mxu0 0.0
        %1254 = vmatpush1.msra.mxu0 %v1231
        %1255 = vmatprep.subr.mxu0 0.0
        %1256 = vmatpush1.msra.mxu0 %v1230
        %1257 = vmatprep.subr.mxu0 0.0
        %1258 = vmatpush1.msra.mxu0 %v1229
        %1259 = vmatprep.subr.mxu0 0.0
        %1260 = vmatpush1.msra.mxu0 %v1228
        %1261 = vmatprep.subr.mxu0 0.0
        %1262 = vmatpush1.msra.mxu0 %v1227
        %1263 = vmatprep.subr.mxu0 0.0
        %1264 = vmatpush1.msra.mxu0 %v1226
        %1265 = vmatprep.subr.mxu0 0.0
        %1266 = vmatpush1.msra.mxu0 %v1225
        %1267 = vmatprep.subr.mxu0 0.0
        %1268 = vmatpush1.msra.mxu0 %v1224
        %1269 = vmatprep.subr.mxu0 0.0
        %1270 = vmatpush1.msra.mxu0 %v1223
        %1271 = vmatprep.subr.mxu0 0.0
        %1272 = vmatpush2.msra.mxu0 0.0
        %1273 = vmatprep.subr.mxu0 0.0
        %1274 = vmatpush2.msra.mxu0 0.0
        %1275 = vmatprep.subr.mxu0 0.0
        %1276 = vmatpush2.msra.mxu0 0.0
        %1277 = vmatprep.subr.mxu0 0.0
        %1278 = vmatpush2.msra.mxu0 0.0
        %1279 = vmatprep.subr.mxu0 0.0
        %1280 = vmatpush2.msra.mxu0 0.0
        %1281 = vmatprep.subr.mxu0 0.0
        %1282 = vmatpush2.msra.mxu0 0.0
        %1283 = vmatprep.subr.mxu0 0.0
        %1284 = vmatpush2.msra.mxu0 0.0
        %1285 = vmatprep.subr.mxu0 0.0
        %1286 = vmatpush2.msra.mxu0 0.0
        %1287 = vmatprep.subr.mxu0 0.0
        %1288 = vmatpush2.msra.mxu0 0.0
        %1289 = vmatprep.subr.mxu0 0.0
        %1290 = vmatpush2.msra.mxu0 0.0
        %1291 = vmatprep.subr.mxu0 0.0
        %1292 = vmatpush2.msra.mxu0 0.0
        %1293 = vmatprep.subr.mxu0 0.0
        %1294 = vmatpush2.msra.mxu0 0.0
        %1295 = vmatprep.subr.mxu0 0.0
        %1296 = vmatpush2.msra.mxu0 0.0
        %1297 = vmatprep.subr.mxu0 0.0
        %1298 = vmatpush2.msra.mxu0 0.0
        %1299 = vmatprep.subr.mxu0 0.0
        %1300 = vmatpush2.msra.mxu0 0.0
        %1301 = vmatprep.subr.mxu0 0.0
        %1302 = vmatpush2.msra.mxu0 0.0
        %1303 = vmatprep.mubr.f32.mxu0 0.0
        %1304 = vmatmul.mubr.f32.gmra.mxu0 %v1216
        %v1305 = vpop.f32.mrf.mxu0
        %v1306 = vadd.f32 0.0, %v1305
        %v1307 = vpop.f32.mrf.mxu0
        %1308 = vmatprep.mubr.f32.mxu0 0.0
        %1309 = vmatmul.mubr.f32.gmra.mxu0 %v1218
        %v1310 = vpop.f32.mrf.mxu0
        %v1311 = vadd.f32 0.0, %v1310
        %v1312 = vpop.f32.mrf.mxu0
        %1313 = vmatprep.mubr.f32.mxu0 0.0
        %1314 = vmatmul.mubr.f32.gmra.mxu0 %v1220
        %v1315 = vpop.f32.mrf.mxu0
        %v1316 = vadd.f32 0.0, %v1315
        %v1317 = vpop.f32.mrf.mxu0
        %1318 = vmatprep.mubr.f32.mxu0 0.0
        %1319 = vmatmul.mubr.f32.gmra.mxu0 %v1222
        %v1320 = vpop.f32.mrf.mxu0
        %v1321 = vadd.f32 0.0, %v1320
        %v1322 = vpop.f32.mrf.mxu0
        %1323 = vdwg.mxu0
        %1324 = vmatprep.subr.mxu0 0.0
        %1325 = vmatpush1.msra.mxu0 %v562
        %1326 = vmatprep.subr.mxu0 0.0
        %1327 = vmatpush1.msra.mxu0 %v561
        %1328 = vmatprep.subr.mxu0 0.0
        %1329 = vmatpush1.msra.mxu0 %v560
        %1330 = vmatprep.subr.mxu0 0.0
        %1331 = vmatpush1.msra.mxu0 %v559
        %1332 = vmatprep.subr.mxu0 0.0
        %1333 = vmatpush1.msra.mxu0 %v558
        %1334 = vmatprep.subr.mxu0 0.0
        %1335 = vmatpush1.msra.mxu0 %v557
        %1336 = vmatprep.subr.mxu0 0.0
        %1337 = vmatpush1.msra.mxu0 %v556
        %1338 = vmatprep.subr.mxu0 0.0
        %1339 = vmatpush1.msra.mxu0 %v555
        %1340 = vmatprep.subr.mxu0 0.0
        %1341 = vmatpush1.msra.mxu0 %v554
        %1342 = vmatprep.subr.mxu0 0.0
        %1343 = vmatpush1.msra.mxu0 %v553
        %1344 = vmatprep.subr.mxu0 0.0
        %1345 = vmatpush1.msra.mxu0 %v552
        %1346 = vmatprep.subr.mxu0 0.0
        %1347 = vmatpush1.msra.mxu0 %v551
        %1348 = vmatprep.subr.mxu0 0.0
        %1349 = vmatpush1.msra.mxu0 %v550
        %1350 = vmatprep.subr.mxu0 0.0
        %1351 = vmatpush1.msra.mxu0 %v549
        %1352 = vmatprep.subr.mxu0 0.0
        %1353 = vmatpush1.msra.mxu0 %v548
        %1354 = vmatprep.subr.mxu0 0.0
        %1355 = vmatpush1.msra.mxu0 %v547
        %1356 = vmatprep.subr.mxu0 0.0
        %1357 = vmatpush2.msra.mxu0 0.0
        %1358 = vmatprep.subr.mxu0 0.0
        %1359 = vmatpush2.msra.mxu0 0.0
        %1360 = vmatprep.subr.mxu0 0.0
        %1361 = vmatpush2.msra.mxu0 0.0
        %1362 = vmatprep.subr.mxu0 0.0
        %1363 = vmatpush2.msra.mxu0 0.0
        %1364 = vmatprep.subr.mxu0 0.0
        %1365 = vmatpush2.msra.mxu0 0.0
        %1366 = vmatprep.subr.mxu0 0.0
        %1367 = vmatpush2.msra.mxu0 0.0
        %1368 = vmatprep.subr.mxu0 0.0
        %1369 = vmatpush2.msra.mxu0 0.0
        %1370 = vmatprep.subr.mxu0 0.0
        %1371 = vmatpush2.msra.mxu0 0.0
        %1372 = vmatprep.subr.mxu0 0.0
        %1373 = vmatpush2.msra.mxu0 0.0
        %1374 = vmatprep.subr.mxu0 0.0
        %1375 = vmatpush2.msra.mxu0 0.0
        %1376 = vmatprep.subr.mxu0 0.0
        %1377 = vmatpush2.msra.mxu0 0.0
        %1378 = vmatprep.subr.mxu0 0.0
        %1379 = vmatpush2.msra.mxu0 0.0
        %1380 = vmatprep.subr.mxu0 0.0
        %1381 = vmatpush2.msra.mxu0 0.0
        %1382 = vmatprep.subr.mxu0 0.0
        %1383 = vmatpush2.msra.mxu0 0.0
        %1384 = vmatprep.subr.mxu0 0.0
        %1385 = vmatpush2.msra.mxu0 0.0
        %1386 = vmatprep.subr.mxu0 0.0
        %1387 = vmatpush2.msra.mxu0 0.0
        %1388 = vmatprep.mubr.f32.mxu0 0.0
        %1389 = vmatmul.mubr.f32.gmra.mxu0 %v1216
        %v1390 = vpop.f32.mrf.mxu0
        %v1391 = vadd.f32 0.0, %v1390
        %v1392 = vpop.f32.mrf.mxu0
        %1393 = vmatprep.mubr.f32.mxu0 0.0
        %1394 = vmatmul.mubr.f32.gmra.mxu0 %v1218
        %v1395 = vpop.f32.mrf.mxu0
        %v1396 = vadd.f32 0.0, %v1395
        %v1397 = vpop.f32.mrf.mxu0
        %1398 = vmatprep.mubr.f32.mxu0 0.0
        %1399 = vmatmul.mubr.f32.gmra.mxu0 %v1220
        %v1400 = vpop.f32.mrf.mxu0
        %v1401 = vadd.f32 0.0, %v1400
        %v1402 = vpop.f32.mrf.mxu0
        %1403 = vmatprep.mubr.f32.mxu0 0.0
        %1404 = vmatmul.mubr.f32.gmra.mxu0 %v1222
        %v1405 = vpop.f32.mrf.mxu0
        %v1406 = vadd.f32 0.0, %v1405
        %v1407 = vpop.f32.mrf.mxu0
        %1408 = vdwg.mxu0
        %v1409 = vrcp.pop %v1391
        %v1410 = vrcp.pop %v1396
        %v1411 = vrcp.pop %v1401
        %v1412 = vrcp.pop %v1406
        %v1413 = vmul.f32 %v1306, %v1409
        %v1414 = vmul.f32 %v1311, %v1410
        %v1415 = vmul.f32 %v1316, %v1411
        %v1416 = vmul.f32 %v1321, %v1412
        %v1417 = vpack.c.bf16 %v1414, %v1413
        %v1418 = vpack.c.bf16 %v1416, %v1415
        %v1419 = vld [vmem:[%s7] sm:$0xf]
        %v1420 = vld [vmem:[%s7 + $0x4] sm:$0xf]
        %v1421 = vld [vmem:[%s7 + $0x8] sm:$0xf]
        %v1422 = vld [vmem:[%s7 + $0xc] sm:$0xf]
        %v1423 = vld [vmem:[%s7 + $0x10] sm:$0xf]
        %v1424 = vld [vmem:[%s7 + $0x14] sm:$0xf]
        %v1425 = vld [vmem:[%s7 + $0x18] sm:$0xf]
        %v1426 = vld [vmem:[%s7 + $0x1c] sm:$0xf]
        %v1427 = vld [vmem:[%s7 + $0x20] sm:$0xf]
        %v1428 = vld [vmem:[%s7 + $0x24] sm:$0xf]
        %v1429 = vld [vmem:[%s7 + $0x28] sm:$0xf]
        %v1430 = vld [vmem:[%s7 + $0x2c] sm:$0xf]
        %v1431 = vld [vmem:[%s7 + $0x30] sm:$0xf]
        %v1432 = vld [vmem:[%s7 + $0x34] sm:$0xf]
        %v1433 = vld [vmem:[%s7 + $0x38] sm:$0xf]
        %v1434 = vld [vmem:[%s7 + $0x3c] sm:$0xf]
        %v1451 = vunpack.c.l.b16 %v1419
        %v1452 = vunpack.c.l.b16 %v1420
        %v1453 = vunpack.c.l.b16 %v1421
        %v1454 = vunpack.c.l.b16 %v1422
        %v1455 = vunpack.c.l.b16 %v1423
        %v1456 = vunpack.c.l.b16 %v1424
        %v1457 = vunpack.c.l.b16 %v1425
        %v1458 = vunpack.c.l.b16 %v1426
        %v1459 = vunpack.c.l.b16 %v1427
        %v1460 = vunpack.c.l.b16 %v1428
        %v1461 = vunpack.c.l.b16 %v1429
        %v1462 = vunpack.c.l.b16 %v1430
        %v1463 = vunpack.c.l.b16 %v1431
        %v1464 = vunpack.c.l.b16 %v1432
        %v1465 = vunpack.c.l.b16 %v1433
        %v1466 = vunpack.c.l.b16 %v1434
        %v1467 = vpack.c.b16 %v1452, %v1451
        %v1468 = vpack.c.b16 %v1454, %v1453
        %v1469 = vpack.c.b16 %v1456, %v1455
        %v1470 = vpack.c.b16 %v1458, %v1457
        %v1471 = vpack.c.b16 %v1460, %v1459
        %v1472 = vpack.c.b16 %v1462, %v1461
        %v1473 = vpack.c.b16 %v1464, %v1463
        %v1474 = vpack.c.b16 %v1466, %v1465
        %1483 = vmatprep.subr.bf16.mxu0 0
        %1484 = vmatpush1.bf16.msra.mxu0 %v1474
        %1485 = vmatprep.subr.bf16.mxu0 0
        %1486 = vmatpush1.bf16.msra.mxu0 %v1473
        %1487 = vmatprep.subr.bf16.mxu0 0
        %1488 = vmatpush1.bf16.msra.mxu0 %v1472
        %1489 = vmatprep.subr.bf16.mxu0 0
        %1490 = vmatpush1.bf16.msra.mxu0 %v1471
        %1491 = vmatprep.subr.bf16.mxu0 0
        %1492 = vmatpush1.bf16.msra.mxu0 %v1470
        %1493 = vmatprep.subr.bf16.mxu0 0
        %1494 = vmatpush1.bf16.msra.mxu0 %v1469
        %1495 = vmatprep.subr.bf16.mxu0 0
        %1496 = vmatpush1.bf16.msra.mxu0 %v1468
        %1497 = vmatprep.subr.bf16.mxu0 0
        %1498 = vmatpush1.bf16.msra.mxu0 %v1467
        %1499 = vmatprep.subr.bf16.mxu0 0
        %1500 = vmatpush2.bf16.msra.mxu0 0
        %1501 = vmatprep.subr.bf16.mxu0 0
        %1502 = vmatpush2.bf16.msra.mxu0 0
        %1503 = vmatprep.subr.bf16.mxu0 0
        %1504 = vmatpush2.bf16.msra.mxu0 0
        %1505 = vmatprep.subr.bf16.mxu0 0
        %1506 = vmatpush2.bf16.msra.mxu0 0
        %1507 = vmatprep.subr.bf16.mxu0 0
        %1508 = vmatpush2.bf16.msra.mxu0 0
        %1509 = vmatprep.subr.bf16.mxu0 0
        %1510 = vmatpush2.bf16.msra.mxu0 0
        %1511 = vmatprep.subr.bf16.mxu0 0
        %1512 = vmatpush2.bf16.msra.mxu0 0
        %1513 = vmatprep.subr.bf16.mxu0 0
        %1514 = vmatpush2.bf16.msra.mxu0 0
        %1515 = vmatprep.mubr.bf16.mxu0 0
        %1516 = vmatmul.mubr.bf16.gmra.mxu0 %v1417
        %v1517 = vpop.f32.mrf.mxu0
        %v1518 = vadd.f32 0.0, %v1517
        %v1519 = vpop.f32.mrf.mxu0
        %v1520 = vpop.f32.mrf.mxu0
        %v1521 = vadd.f32 0.0, %v1520
        %v1522 = vpop.f32.mrf.mxu0
        %1523 = vmatprep.mubr.bf16.mxu0 0
        %1524 = vmatmul.mubr.bf16.gmra.mxu0 %v1418
        %v1525 = vpop.f32.mrf.mxu0
        %v1526 = vadd.f32 0.0, %v1525
        %v1527 = vpop.f32.mrf.mxu0
        %v1528 = vpop.f32.mrf.mxu0
        %v1529 = vadd.f32 0.0, %v1528
        %v1530 = vpop.f32.mrf.mxu0
        %1531 = vdwg.mxu0
        %v1532 = vadd.f32 %v744, %v1518
        %v1533 = vadd.f32 %v745, %v1521
        %v1534 = vadd.f32 %v746, %v1526
        %v1535 = vadd.f32 %v747, %v1529
        %v1536 = vlaneseq
        %v1537 = vshrl.u32 %v1536, 7
        %v1538 = vsub.s32 2, %v1537
        %v1539 = vrot.slane %v748, %v1538
        %v1540 = vadd.f32 %v1532, %v1539
        %v1541 = vadd.f32 %v1533, %v1539
        %v1542 = vadd.f32 %v1534, %v1539
        %v1543 = vadd.f32 %v1535, %v1539
        %1544 = vadd.xlane.f32.xlu0 %v1540
        %v1545 = vpop.xlane.xlu0 %1544
        %1546 = vadd.xlane.f32.xlu0 %v1541
        %v1547 = vpop.xlane.xlu0 %1546
        %1548 = vadd.xlane.f32.xlu0 %v1542
        %v1549 = vpop.xlane.xlu0 %1548
        %1550 = vadd.xlane.f32.xlu0 %v1543
        %v1551 = vpop.xlane.xlu0 %1550
        %v1552 = vmul.f32 %v1545, %v695
        %v1553 = vmul.f32 %v1547, %v695
        %v1554 = vmul.f32 %v1549, %v695
        %v1555 = vmul.f32 %v1551, %v695
        %v1556 = vsub.f32 %v1540, %v1552
        %v1557 = vsub.f32 %v1541, %v1553
        %v1558 = vsub.f32 %v1542, %v1554
        %v1559 = vsub.f32 %v1543, %v1555
        %v1560 = vmul.f32 %v1556, %v1556
        %v1561 = vmul.f32 %v1557, %v1557
        %v1562 = vmul.f32 %v1558, %v1558
        %v1563 = vmul.f32 %v1559, %v1559
        %1564 = vadd.xlane.f32.xlu0 %v1560
        %v1565 = vpop.xlane.xlu0 %1564
        %1566 = vadd.xlane.f32.xlu0 %v1561
        %v1567 = vpop.xlane.xlu0 %1566
        %1568 = vadd.xlane.f32.xlu0 %v1562
        %v1569 = vpop.xlane.xlu0 %1568
        %1570 = vadd.xlane.f32.xlu0 %v1563
        %v1571 = vpop.xlane.xlu0 %1570
        %v1572 = vmul.f32 %v1565, %v695
        %v1573 = vmul.f32 %v1567, %v695
        %v1574 = vmul.f32 %v1569, %v695
        %v1575 = vmul.f32 %v1571, %v695
        %v1576 = vadd.f32 %v1572, 1e-05
        %v1577 = vadd.f32 %v1573, 1e-05
        %v1578 = vadd.f32 %v1574, 1e-05
        %v1579 = vadd.f32 %v1575, 1e-05
        %v1580 = vrsqrt.pop %v1576
        %v1581 = vrsqrt.pop %v1577
        %v1582 = vrsqrt.pop %v1578
        %v1583 = vrsqrt.pop %v1579
        %v1584 = vmul.f32 %v1556, %v1580
        %v1585 = vmul.f32 %v1557, %v1581
        %v1586 = vmul.f32 %v1558, %v1582
        %v1587 = vmul.f32 %v1559, %v1583
        %v1588 = vlaneseq
        %v1589 = vshrl.u32 %v1588, 7
        %v1590 = vsub.s32 3, %v1589
        %v1591 = vrot.slane %v748, %v1590
        %v1592 = vmul.f32 %v1584, %v1591
        %v1593 = vmul.f32 %v1585, %v1591
        %v1594 = vmul.f32 %v1586, %v1591
        %v1595 = vmul.f32 %v1587, %v1591
        %v1596 = vlaneseq
        %v1597 = vshrl.u32 %v1596, 7
        %v1598 = vsub.s32 4, %v1597
        %v1599 = vrot.slane %v748, %v1598
        %v1600 = vadd.f32 %v1592, %v1599
        %v1601 = vadd.f32 %v1593, %v1599
        %v1602 = vadd.f32 %v1594, %v1599
        %v1603 = vadd.f32 %v1595, %v1599
        %v1604 = vpack.c.bf16 %v1601, %v1600
        %v1605 = vpack.c.bf16 %v1603, %v1602
        %v1606 = vld [vmem:[%s8] sm:$0xff]
        %v1607 = vld [vmem:[%s8 + $0x8] sm:$0xff]
        %v1608 = vld [vmem:[%s8 + $0x10] sm:$0xff]
        %v1609 = vld [vmem:[%s8 + $0x18] sm:$0xff]
        %v1610 = vld [vmem:[%s8 + $0x20] sm:$0xff]
        %v1611 = vld [vmem:[%s8 + $0x28] sm:$0xff]
        %v1612 = vld [vmem:[%s8 + $0x30] sm:$0xff]
        %v1613 = vld [vmem:[%s8 + $0x38] sm:$0xff]
        %v1614 = vld [vmem:[%s8 + $0x40] sm:$0xff]
        %v1615 = vld [vmem:[%s8 + $0x48] sm:$0xff]
        %v1616 = vld [vmem:[%s8 + $0x50] sm:$0xff]
        %v1617 = vld [vmem:[%s8 + $0x58] sm:$0xff]
        %v1618 = vld [vmem:[%s8 + $0x60] sm:$0xff]
        %v1619 = vld [vmem:[%s8 + $0x68] sm:$0xff]
        %v1620 = vld [vmem:[%s8 + $0x70] sm:$0xff]
        %v1621 = vld [vmem:[%s8 + $0x78] sm:$0xff]
        %v1622 = vld [vmem:[%s8 + $0x80] sm:$0xff]
        %v1623 = vld [vmem:[%s8 + $0x88] sm:$0xff]
        %v1624 = vld [vmem:[%s8 + $0x90] sm:$0xff]
        %v1625 = vld [vmem:[%s8 + $0x98] sm:$0xff]
        %v1626 = vld [vmem:[%s8 + $0xa0] sm:$0xff]
        %v1627 = vld [vmem:[%s8 + $0xa8] sm:$0xff]
        %v1628 = vld [vmem:[%s8 + $0xb0] sm:$0xff]
        %v1629 = vld [vmem:[%s8 + $0xb8] sm:$0xff]
        %v1630 = vld [vmem:[%s8 + $0xc0] sm:$0xff]
        %v1631 = vld [vmem:[%s8 + $0xc8] sm:$0xff]
        %v1632 = vld [vmem:[%s8 + $0xd0] sm:$0xff]
        %v1633 = vld [vmem:[%s8 + $0xd8] sm:$0xff]
        %v1634 = vld [vmem:[%s8 + $0xe0] sm:$0xff]
        %v1635 = vld [vmem:[%s8 + $0xe8] sm:$0xff]
        %v1636 = vld [vmem:[%s8 + $0xf0] sm:$0xff]
        %v1637 = vld [vmem:[%s8 + $0xf8] sm:$0xff]
        %v1638 = vld [vmem:[%s9] sm:$0xf]
        %v1640 = vlaneseq
        %v1641 = vshrl.u32 %v1640, 7
        %v1642 = vsub.s32 0, %v1641
        %v1643 = vrot.slane %v1638, %v1642
        %v1644 = vlaneseq
        %v1645 = vshrl.u32 %v1644, 7
        %v1646 = vsub.s32 1, %v1645
        %v1647 = vrot.slane %v1638, %v1646
        %v1648 = vlaneseq
        %v1649 = vshrl.u32 %v1648, 7
        %v1650 = vsub.s32 2, %v1649
        %v1651 = vrot.slane %v1638, %v1650
        %v1652 = vlaneseq
        %v1653 = vshrl.u32 %v1652, 7
        %v1654 = vsub.s32 3, %v1653
        %v1655 = vrot.slane %v1638, %v1654
        %v1692 = vunpack.c.l.b16 %v1606
        %v1693 = vunpack.c.h.b16 %v1606
        %v1694 = vunpack.c.l.b16 %v1607
        %v1695 = vunpack.c.h.b16 %v1607
        %v1696 = vunpack.c.l.b16 %v1608
        %v1697 = vunpack.c.h.b16 %v1608
        %v1698 = vunpack.c.l.b16 %v1609
        %v1699 = vunpack.c.h.b16 %v1609
        %v1700 = vunpack.c.l.b16 %v1610
        %v1701 = vunpack.c.h.b16 %v1610
        %v1702 = vunpack.c.l.b16 %v1611
        %v1703 = vunpack.c.h.b16 %v1611
        %v1704 = vunpack.c.l.b16 %v1612
        %v1705 = vunpack.c.h.b16 %v1612
        %v1706 = vunpack.c.l.b16 %v1613
        %v1707 = vunpack.c.h.b16 %v1613
        %v1708 = vunpack.c.l.b16 %v1614
        %v1709 = vunpack.c.h.b16 %v1614
        %v1710 = vunpack.c.l.b16 %v1615
        %v1711 = vunpack.c.h.b16 %v1615
        %v1712 = vunpack.c.l.b16 %v1616
        %v1713 = vunpack.c.h.b16 %v1616
        %v1714 = vunpack.c.l.b16 %v1617
        %v1715 = vunpack.c.h.b16 %v1617
        %v1716 = vunpack.c.l.b16 %v1618
        %v1717 = vunpack.c.h.b16 %v1618
        %v1718 = vunpack.c.l.b16 %v1619
        %v1719 = vunpack.c.h.b16 %v1619
        %v1720 = vunpack.c.l.b16 %v1620
        %v1721 = vunpack.c.h.b16 %v1620
        %v1722 = vunpack.c.l.b16 %v1621
        %v1723 = vunpack.c.h.b16 %v1621
        %v1724 = vunpack.c.l.b16 %v1622
        %v1725 = vunpack.c.h.b16 %v1622
        %v1726 = vunpack.c.l.b16 %v1623
        %v1727 = vunpack.c.h.b16 %v1623
        %v1728 = vunpack.c.l.b16 %v1624
        %v1729 = vunpack.c.h.b16 %v1624
        %v1730 = vunpack.c.l.b16 %v1625
        %v1731 = vunpack.c.h.b16 %v1625
        %v1732 = vunpack.c.l.b16 %v1626
        %v1733 = vunpack.c.h.b16 %v1626
        %v1734 = vunpack.c.l.b16 %v1627
        %v1735 = vunpack.c.h.b16 %v1627
        %v1736 = vunpack.c.l.b16 %v1628
        %v1737 = vunpack.c.h.b16 %v1628
        %v1738 = vunpack.c.l.b16 %v1629
        %v1739 = vunpack.c.h.b16 %v1629
        %v1740 = vunpack.c.l.b16 %v1630
        %v1741 = vunpack.c.h.b16 %v1630
        %v1742 = vunpack.c.l.b16 %v1631
        %v1743 = vunpack.c.h.b16 %v1631
        %v1744 = vunpack.c.l.b16 %v1632
        %v1745 = vunpack.c.h.b16 %v1632
        %v1746 = vunpack.c.l.b16 %v1633
        %v1747 = vunpack.c.h.b16 %v1633
        %v1748 = vunpack.c.l.b16 %v1634
        %v1749 = vunpack.c.h.b16 %v1634
        %v1750 = vunpack.c.l.b16 %v1635
        %v1751 = vunpack.c.h.b16 %v1635
        %v1752 = vunpack.c.l.b16 %v1636
        %v1753 = vunpack.c.h.b16 %v1636
        %v1754 = vunpack.c.l.b16 %v1637
        %v1755 = vunpack.c.h.b16 %v1637
        %v1756 = vpack.c.b16 %v1696, %v1692
        %v1757 = vpack.c.b16 %v1697, %v1693
        %v1758 = vpack.c.b16 %v1698, %v1694
        %v1759 = vpack.c.b16 %v1699, %v1695
        %v1760 = vpack.c.b16 %v1704, %v1700
        %v1761 = vpack.c.b16 %v1705, %v1701
        %v1762 = vpack.c.b16 %v1706, %v1702
        %v1763 = vpack.c.b16 %v1707, %v1703
        %v1764 = vpack.c.b16 %v1712, %v1708
        %v1765 = vpack.c.b16 %v1713, %v1709
        %v1766 = vpack.c.b16 %v1714, %v1710
        %v1767 = vpack.c.b16 %v1715, %v1711
        %v1768 = vpack.c.b16 %v1720, %v1716
        %v1769 = vpack.c.b16 %v1721, %v1717
        %v1770 = vpack.c.b16 %v1722, %v1718
        %v1771 = vpack.c.b16 %v1723, %v1719
        %v1772 = vpack.c.b16 %v1728, %v1724
        %v1773 = vpack.c.b16 %v1729, %v1725
        %v1774 = vpack.c.b16 %v1730, %v1726
        %v1775 = vpack.c.b16 %v1731, %v1727
        %v1776 = vpack.c.b16 %v1736, %v1732
        %v1777 = vpack.c.b16 %v1737, %v1733
        %v1778 = vpack.c.b16 %v1738, %v1734
        %v1779 = vpack.c.b16 %v1739, %v1735
        %v1780 = vpack.c.b16 %v1744, %v1740
        %v1781 = vpack.c.b16 %v1745, %v1741
        %v1782 = vpack.c.b16 %v1746, %v1742
        %v1783 = vpack.c.b16 %v1747, %v1743
        %v1784 = vpack.c.b16 %v1752, %v1748
        %v1785 = vpack.c.b16 %v1753, %v1749
        %v1786 = vpack.c.b16 %v1754, %v1750
        %v1787 = vpack.c.b16 %v1755, %v1751
        %1820 = vmatprep.subr.bf16.mxu0 %v1785
        %1821 = vmatpush1.bf16.msra.mxu0 %v1784
        %1822 = vmatprep.subr.bf16.mxu0 %v1781
        %1823 = vmatpush1.bf16.msra.mxu0 %v1780
        %1824 = vmatprep.subr.bf16.mxu0 %v1777
        %1825 = vmatpush1.bf16.msra.mxu0 %v1776
        %1826 = vmatprep.subr.bf16.mxu0 %v1773
        %1827 = vmatpush1.bf16.msra.mxu0 %v1772
        %1828 = vmatprep.subr.bf16.mxu0 %v1769
        %1829 = vmatpush1.bf16.msra.mxu0 %v1768
        %1830 = vmatprep.subr.bf16.mxu0 %v1765
        %1831 = vmatpush1.bf16.msra.mxu0 %v1764
        %1832 = vmatprep.subr.bf16.mxu0 %v1761
        %1833 = vmatpush1.bf16.msra.mxu0 %v1760
        %1834 = vmatprep.subr.bf16.mxu0 %v1757
        %1835 = vmatpush1.bf16.msra.mxu0 %v1756
        %1836 = vmatprep.subr.bf16.mxu0 0
        %1837 = vmatpush2.bf16.msra.mxu0 0
        %1838 = vmatprep.subr.bf16.mxu0 0
        %1839 = vmatpush2.bf16.msra.mxu0 0
        %1840 = vmatprep.subr.bf16.mxu0 0
        %1841 = vmatpush2.bf16.msra.mxu0 0
        %1842 = vmatprep.subr.bf16.mxu0 0
        %1843 = vmatpush2.bf16.msra.mxu0 0
        %1844 = vmatprep.subr.bf16.mxu0 0
        %1845 = vmatpush2.bf16.msra.mxu0 0
        %1846 = vmatprep.subr.bf16.mxu0 0
        %1847 = vmatpush2.bf16.msra.mxu0 0
        %1848 = vmatprep.subr.bf16.mxu0 0
        %1849 = vmatpush2.bf16.msra.mxu0 0
        %1850 = vmatprep.subr.bf16.mxu0 0
        %1851 = vmatpush2.bf16.msra.mxu0 0
        %1852 = vmatprep.mubr.bf16.mxu0 0
        %1853 = vmatmul.mubr.bf16.gmra.mxu0 %v1604
        %v1854 = vpop.f32.mrf.mxu0
        %v1855 = vadd.f32 %v1643, %v1854
        %v1856 = vpop.f32.mrf.mxu0
        %v1857 = vadd.f32 %v1647, %v1856
        %v1858 = vpop.f32.mrf.mxu0
        %v1859 = vadd.f32 %v1643, %v1858
        %v1860 = vpop.f32.mrf.mxu0
        %v1861 = vadd.f32 %v1647, %v1860
        %1862 = vmatprep.mubr.bf16.mxu0 0
        %1863 = vmatmul.mubr.bf16.gmra.mxu0 %v1605
        %v1864 = vpop.f32.mrf.mxu0
        %v1865 = vadd.f32 %v1643, %v1864
        %v1866 = vpop.f32.mrf.mxu0
        %v1867 = vadd.f32 %v1647, %v1866
        %v1868 = vpop.f32.mrf.mxu0
        %v1869 = vadd.f32 %v1643, %v1868
        %v1870 = vpop.f32.mrf.mxu0
        %v1871 = vadd.f32 %v1647, %v1870
        %1872 = vdwg.mxu0
        %1873 = vmatprep.subr.bf16.mxu0 %v1787
        %1874 = vmatpush1.bf16.msra.mxu0 %v1786
        %1875 = vmatprep.subr.bf16.mxu0 %v1783
        %1876 = vmatpush1.bf16.msra.mxu0 %v1782
        %1877 = vmatprep.subr.bf16.mxu0 %v1779
        %1878 = vmatpush1.bf16.msra.mxu0 %v1778
        %1879 = vmatprep.subr.bf16.mxu0 %v1775
        %1880 = vmatpush1.bf16.msra.mxu0 %v1774
        %1881 = vmatprep.subr.bf16.mxu0 %v1771
        %1882 = vmatpush1.bf16.msra.mxu0 %v1770
        %1883 = vmatprep.subr.bf16.mxu0 %v1767
        %1884 = vmatpush1.bf16.msra.mxu0 %v1766
        %1885 = vmatprep.subr.bf16.mxu0 %v1763
        %1886 = vmatpush1.bf16.msra.mxu0 %v1762
        %1887 = vmatprep.subr.bf16.mxu0 %v1759
        %1888 = vmatpush1.bf16.msra.mxu0 %v1758
        %1889 = vmatprep.subr.bf16.mxu0 0
        %1890 = vmatpush2.bf16.msra.mxu0 0
        %1891 = vmatprep.subr.bf16.mxu0 0
        %1892 = vmatpush2.bf16.msra.mxu0 0
        %1893 = vmatprep.subr.bf16.mxu0 0
        %1894 = vmatpush2.bf16.msra.mxu0 0
        %1895 = vmatprep.subr.bf16.mxu0 0
        %1896 = vmatpush2.bf16.msra.mxu0 0
        %1897 = vmatprep.subr.bf16.mxu0 0
        %1898 = vmatpush2.bf16.msra.mxu0 0
        %1899 = vmatprep.subr.bf16.mxu0 0
        %1900 = vmatpush2.bf16.msra.mxu0 0
        %1901 = vmatprep.subr.bf16.mxu0 0
        %1902 = vmatpush2.bf16.msra.mxu0 0
        %1903 = vmatprep.subr.bf16.mxu0 0
        %1904 = vmatpush2.bf16.msra.mxu0 0
        %1905 = vmatprep.mubr.bf16.mxu0 0
        %1906 = vmatmul.mubr.bf16.gmra.mxu0 %v1604
        %v1907 = vpop.f32.mrf.mxu0
        %v1908 = vadd.f32 %v1651, %v1907
        %v1909 = vpop.f32.mrf.mxu0
        %v1910 = vadd.f32 %v1655, %v1909
        %v1911 = vpop.f32.mrf.mxu0
        %v1912 = vadd.f32 %v1651, %v1911
        %v1913 = vpop.f32.mrf.mxu0
        %v1914 = vadd.f32 %v1655, %v1913
        %1915 = vmatprep.mubr.bf16.mxu0 0
        %1916 = vmatmul.mubr.bf16.gmra.mxu0 %v1605
        %v1917 = vpop.f32.mrf.mxu0
        %v1918 = vadd.f32 %v1651, %v1917
        %v1919 = vpop.f32.mrf.mxu0
        %v1920 = vadd.f32 %v1655, %v1919
        %v1921 = vpop.f32.mrf.mxu0
        %v1922 = vadd.f32 %v1651, %v1921
        %v1923 = vpop.f32.mrf.mxu0
        %v1924 = vadd.f32 %v1655, %v1923
        %1925 = vdwg.mxu0
        %v1926 = vmul.f32 %v1855, 0.5
        %v1927 = vmul.f32 %v1857, 0.5
        %v1928 = vmul.f32 %v1908, 0.5
        %v1929 = vmul.f32 %v1910, 0.5
        %v1930 = vmul.f32 %v1859, 0.5
        %v1931 = vmul.f32 %v1861, 0.5
        %v1932 = vmul.f32 %v1912, 0.5
        %v1933 = vmul.f32 %v1914, 0.5
        %v1934 = vmul.f32 %v1865, 0.5
        %v1935 = vmul.f32 %v1867, 0.5
        %v1936 = vmul.f32 %v1918, 0.5
        %v1937 = vmul.f32 %v1920, 0.5
        %v1938 = vmul.f32 %v1869, 0.5
        %v1939 = vmul.f32 %v1871, 0.5
        %v1940 = vmul.f32 %v1922, 0.5
        %v1941 = vmul.f32 %v1924, 0.5
        %v1942 = vmul.f32 %v1855, 0.044715
        %v1943 = vmul.f32 %v1857, 0.044715
        %v1944 = vmul.f32 %v1908, 0.044715
        %v1945 = vmul.f32 %v1910, 0.044715
        %v1946 = vmul.f32 %v1859, 0.044715
        %v1947 = vmul.f32 %v1861, 0.044715
        %v1948 = vmul.f32 %v1912, 0.044715
        %v1949 = vmul.f32 %v1914, 0.044715
        %v1950 = vmul.f32 %v1865, 0.044715
        %v1951 = vmul.f32 %v1867, 0.044715
        %v1952 = vmul.f32 %v1918, 0.044715
        %v1953 = vmul.f32 %v1920, 0.044715
        %v1954 = vmul.f32 %v1869, 0.044715
        %v1955 = vmul.f32 %v1871, 0.044715
        %v1956 = vmul.f32 %v1922, 0.044715
        %v1957 = vmul.f32 %v1924, 0.044715
        %v1958 = vmul.f32 %v1942, %v1855
        %v1959 = vmul.f32 %v1943, %v1857
        %v1960 = vmul.f32 %v1944, %v1908
        %v1961 = vmul.f32 %v1945, %v1910
        %v1962 = vmul.f32 %v1946, %v1859
        %v1963 = vmul.f32 %v1947, %v1861
        %v1964 = vmul.f32 %v1948, %v1912
        %v1965 = vmul.f32 %v1949, %v1914
        %v1966 = vmul.f32 %v1950, %v1865
        %v1967 = vmul.f32 %v1951, %v1867
        %v1968 = vmul.f32 %v1952, %v1918
        %v1969 = vmul.f32 %v1953, %v1920
        %v1970 = vmul.f32 %v1954, %v1869
        %v1971 = vmul.f32 %v1955, %v1871
        %v1972 = vmul.f32 %v1956, %v1922
        %v1973 = vmul.f32 %v1957, %v1924
        %v1974 = vmul.f32 %v1958, %v1855
        %v1975 = vmul.f32 %v1959, %v1857
        %v1976 = vmul.f32 %v1960, %v1908
        %v1977 = vmul.f32 %v1961, %v1910
        %v1978 = vmul.f32 %v1962, %v1859
        %v1979 = vmul.f32 %v1963, %v1861
        %v1980 = vmul.f32 %v1964, %v1912
        %v1981 = vmul.f32 %v1965, %v1914
        %v1982 = vmul.f32 %v1966, %v1865
        %v1983 = vmul.f32 %v1967, %v1867
        %v1984 = vmul.f32 %v1968, %v1918
        %v1985 = vmul.f32 %v1969, %v1920
        %v1986 = vmul.f32 %v1970, %v1869
        %v1987 = vmul.f32 %v1971, %v1871
        %v1988 = vmul.f32 %v1972, %v1922
        %v1989 = vmul.f32 %v1973, %v1924
        %v1990 = vadd.f32 %v1855, %v1974
        %v1991 = vadd.f32 %v1857, %v1975
        %v1992 = vadd.f32 %v1908, %v1976
        %v1993 = vadd.f32 %v1910, %v1977
        %v1994 = vadd.f32 %v1859, %v1978
        %v1995 = vadd.f32 %v1861, %v1979
        %v1996 = vadd.f32 %v1912, %v1980
        %v1997 = vadd.f32 %v1914, %v1981
        %v1998 = vadd.f32 %v1865, %v1982
        %v1999 = vadd.f32 %v1867, %v1983
        %v2000 = vadd.f32 %v1918, %v1984
        %v2001 = vadd.f32 %v1920, %v1985
        %v2002 = vadd.f32 %v1869, %v1986
        %v2003 = vadd.f32 %v1871, %v1987
        %v2004 = vadd.f32 %v1922, %v1988
        %v2005 = vadd.f32 %v1924, %v1989
        %v2006 = vmul.f32 %v1990, 0.7978846
        %v2007 = vmul.f32 %v1991, 0.7978846
        %v2008 = vmul.f32 %v1992, 0.7978846
        %v2009 = vmul.f32 %v1993, 0.7978846
        %v2010 = vmul.f32 %v1994, 0.7978846
        %v2011 = vmul.f32 %v1995, 0.7978846
        %v2012 = vmul.f32 %v1996, 0.7978846
        %v2013 = vmul.f32 %v1997, 0.7978846
        %v2014 = vmul.f32 %v1998, 0.7978846
        %v2015 = vmul.f32 %v1999, 0.7978846
        %v2016 = vmul.f32 %v2000, 0.7978846
        %v2017 = vmul.f32 %v2001, 0.7978846
        %v2018 = vmul.f32 %v2002, 0.7978846
        %v2019 = vmul.f32 %v2003, 0.7978846
        %v2020 = vmul.f32 %v2004, 0.7978846
        %v2021 = vmul.f32 %v2005, 0.7978846
        %v2022 = vtanh.pop %v2006
        %v2023 = vtanh.pop %v2007
        %v2024 = vtanh.pop %v2008
        %v2025 = vtanh.pop %v2009
        %v2026 = vtanh.pop %v2010
        %v2027 = vtanh.pop %v2011
        %v2028 = vtanh.pop %v2012
        %v2029 = vtanh.pop %v2013
        %v2030 = vtanh.pop %v2014
        %v2031 = vtanh.pop %v2015
        %v2032 = vtanh.pop %v2016
        %v2033 = vtanh.pop %v2017
        %v2034 = vtanh.pop %v2018
        %v2035 = vtanh.pop %v2019
        %v2036 = vtanh.pop %v2020
        %v2037 = vtanh.pop %v2021
        %v2038 = vadd.f32 %v2022, 1.0
        %v2039 = vadd.f32 %v2023, 1.0
        %v2040 = vadd.f32 %v2024, 1.0
        %v2041 = vadd.f32 %v2025, 1.0
        %v2042 = vadd.f32 %v2026, 1.0
        %v2043 = vadd.f32 %v2027, 1.0
        %v2044 = vadd.f32 %v2028, 1.0
        %v2045 = vadd.f32 %v2029, 1.0
        %v2046 = vadd.f32 %v2030, 1.0
        %v2047 = vadd.f32 %v2031, 1.0
        %v2048 = vadd.f32 %v2032, 1.0
        %v2049 = vadd.f32 %v2033, 1.0
        %v2050 = vadd.f32 %v2034, 1.0
        %v2051 = vadd.f32 %v2035, 1.0
        %v2052 = vadd.f32 %v2036, 1.0
        %v2053 = vadd.f32 %v2037, 1.0
        %v2054 = vmul.f32 %v1926, %v2038
        %v2055 = vmul.f32 %v1927, %v2039
        %v2056 = vmul.f32 %v1928, %v2040
        %v2057 = vmul.f32 %v1929, %v2041
        %v2058 = vmul.f32 %v1930, %v2042
        %v2059 = vmul.f32 %v1931, %v2043
        %v2060 = vmul.f32 %v1932, %v2044
        %v2061 = vmul.f32 %v1933, %v2045
        %v2062 = vmul.f32 %v1934, %v2046
        %v2063 = vmul.f32 %v1935, %v2047
        %v2064 = vmul.f32 %v1936, %v2048
        %v2065 = vmul.f32 %v1937, %v2049
        %v2066 = vmul.f32 %v1938, %v2050
        %v2067 = vmul.f32 %v1939, %v2051
        %v2068 = vmul.f32 %v1940, %v2052
        %v2069 = vmul.f32 %v1941, %v2053
        %v2070 = vpack.c.bf16 %v2058, %v2054
        %v2071 = vpack.c.bf16 %v2059, %v2055
        %v2072 = vpack.c.bf16 %v2060, %v2056
        %v2073 = vpack.c.bf16 %v2061, %v2057
        %v2074 = vpack.c.bf16 %v2066, %v2062
        %v2075 = vpack.c.bf16 %v2067, %v2063
        %v2076 = vpack.c.bf16 %v2068, %v2064
        %v2077 = vpack.c.bf16 %v2069, %v2065
        %v2078 = vld [vmem:[%s10] sm:$0xf]
        %v2079 = vld [vmem:[%s10 + $0x4] sm:$0xf]
        %v2080 = vld [vmem:[%s10 + $0x8] sm:$0xf]
        %v2081 = vld [vmem:[%s10 + $0xc] sm:$0xf]
        %v2082 = vld [vmem:[%s10 + $0x10] sm:$0xf]
        %v2083 = vld [vmem:[%s10 + $0x14] sm:$0xf]
        %v2084 = vld [vmem:[%s10 + $0x18] sm:$0xf]
        %v2085 = vld [vmem:[%s10 + $0x1c] sm:$0xf]
        %v2086 = vld [vmem:[%s10 + $0x20] sm:$0xf]
        %v2087 = vld [vmem:[%s10 + $0x24] sm:$0xf]
        %v2088 = vld [vmem:[%s10 + $0x28] sm:$0xf]
        %v2089 = vld [vmem:[%s10 + $0x2c] sm:$0xf]
        %v2090 = vld [vmem:[%s10 + $0x30] sm:$0xf]
        %v2091 = vld [vmem:[%s10 + $0x34] sm:$0xf]
        %v2092 = vld [vmem:[%s10 + $0x38] sm:$0xf]
        %v2093 = vld [vmem:[%s10 + $0x3c] sm:$0xf]
        %v2094 = vld [vmem:[%s10 + $0x40] sm:$0xf]
        %v2095 = vld [vmem:[%s10 + $0x44] sm:$0xf]
        %v2096 = vld [vmem:[%s10 + $0x48] sm:$0xf]
        %v2097 = vld [vmem:[%s10 + $0x4c] sm:$0xf]
        %v2098 = vld [vmem:[%s10 + $0x50] sm:$0xf]
        %v2099 = vld [vmem:[%s10 + $0x54] sm:$0xf]
        %v2100 = vld [vmem:[%s10 + $0x58] sm:$0xf]
        %v2101 = vld [vmem:[%s10 + $0x5c] sm:$0xf]
        %v2102 = vld [vmem:[%s10 + $0x60] sm:$0xf]
        %v2103 = vld [vmem:[%s10 + $0x64] sm:$0xf]
        %v2104 = vld [vmem:[%s10 + $0x68] sm:$0xf]
        %v2105 = vld [vmem:[%s10 + $0x6c] sm:$0xf]
        %v2106 = vld [vmem:[%s10 + $0x70] sm:$0xf]
        %v2107 = vld [vmem:[%s10 + $0x74] sm:$0xf]
        %v2108 = vld [vmem:[%s10 + $0x78] sm:$0xf]
        %v2109 = vld [vmem:[%s10 + $0x7c] sm:$0xf]
        %v2110 = vld [vmem:[%s10 + $0x80] sm:$0xf]
        %v2111 = vld [vmem:[%s10 + $0x84] sm:$0xf]
        %v2112 = vld [vmem:[%s10 + $0x88] sm:$0xf]
        %v2113 = vld [vmem:[%s10 + $0x8c] sm:$0xf]
        %v2114 = vld [vmem:[%s10 + $0x90] sm:$0xf]
        %v2115 = vld [vmem:[%s10 + $0x94] sm:$0xf]
        %v2116 = vld [vmem:[%s10 + $0x98] sm:$0xf]
        %v2117 = vld [vmem:[%s10 + $0x9c] sm:$0xf]
        %v2118 = vld [vmem:[%s10 + $0xa0] sm:$0xf]
        %v2119 = vld [vmem:[%s10 + $0xa4] sm:$0xf]
        %v2120 = vld [vmem:[%s10 + $0xa8] sm:$0xf]
        %v2121 = vld [vmem:[%s10 + $0xac] sm:$0xf]
        %v2122 = vld [vmem:[%s10 + $0xb0] sm:$0xf]
        %v2123 = vld [vmem:[%s10 + $0xb4] sm:$0xf]
        %v2124 = vld [vmem:[%s10 + $0xb8] sm:$0xf]
        %v2125 = vld [vmem:[%s10 + $0xbc] sm:$0xf]
        %v2126 = vld [vmem:[%s10 + $0xc0] sm:$0xf]
        %v2127 = vld [vmem:[%s10 + $0xc4] sm:$0xf]
        %v2128 = vld [vmem:[%s10 + $0xc8] sm:$0xf]
        %v2129 = vld [vmem:[%s10 + $0xcc] sm:$0xf]
        %v2130 = vld [vmem:[%s10 + $0xd0] sm:$0xf]
        %v2131 = vld [vmem:[%s10 + $0xd4] sm:$0xf]
        %v2132 = vld [vmem:[%s10 + $0xd8] sm:$0xf]
        %v2133 = vld [vmem:[%s10 + $0xdc] sm:$0xf]
        %v2134 = vld [vmem:[%s10 + $0xe0] sm:$0xf]
        %v2135 = vld [vmem:[%s10 + $0xe4] sm:$0xf]
        %v2136 = vld [vmem:[%s10 + $0xe8] sm:$0xf]
        %v2137 = vld [vmem:[%s10 + $0xec] sm:$0xf]
        %v2138 = vld [vmem:[%s10 + $0xf0] sm:$0xf]
        %v2139 = vld [vmem:[%s10 + $0xf4] sm:$0xf]
        %v2140 = vld [vmem:[%s10 + $0xf8] sm:$0xf]
        %v2141 = vld [vmem:[%s10 + $0xfc] sm:$0xf]
        %v2142 = vlaneseq
        %v2143 = vshrl.u32 %v2142, 7
        %v2144 = vsub.s32 5, %v2143
        %v2145 = vrot.slane %v748, %v2144
        %v2210 = vunpack.c.l.b16 %v2078
        %v2211 = vunpack.c.l.b16 %v2079
        %v2212 = vunpack.c.l.b16 %v2080
        %v2213 = vunpack.c.l.b16 %v2081
        %v2214 = vunpack.c.l.b16 %v2082
        %v2215 = vunpack.c.l.b16 %v2083
        %v2216 = vunpack.c.l.b16 %v2084
        %v2217 = vunpack.c.l.b16 %v2085
        %v2218 = vunpack.c.l.b16 %v2086
        %v2219 = vunpack.c.l.b16 %v2087
        %v2220 = vunpack.c.l.b16 %v2088
        %v2221 = vunpack.c.l.b16 %v2089
        %v2222 = vunpack.c.l.b16 %v2090
        %v2223 = vunpack.c.l.b16 %v2091
        %v2224 = vunpack.c.l.b16 %v2092
        %v2225 = vunpack.c.l.b16 %v2093
        %v2226 = vunpack.c.l.b16 %v2094
        %v2227 = vunpack.c.l.b16 %v2095
        %v2228 = vunpack.c.l.b16 %v2096
        %v2229 = vunpack.c.l.b16 %v2097
        %v2230 = vunpack.c.l.b16 %v2098
        %v2231 = vunpack.c.l.b16 %v2099
        %v2232 = vunpack.c.l.b16 %v2100
        %v2233 = vunpack.c.l.b16 %v2101
        %v2234 = vunpack.c.l.b16 %v2102
        %v2235 = vunpack.c.l.b16 %v2103
        %v2236 = vunpack.c.l.b16 %v2104
        %v2237 = vunpack.c.l.b16 %v2105
        %v2238 = vunpack.c.l.b16 %v2106
        %v2239 = vunpack.c.l.b16 %v2107
        %v2240 = vunpack.c.l.b16 %v2108
        %v2241 = vunpack.c.l.b16 %v2109
        %v2242 = vunpack.c.l.b16 %v2110
        %v2243 = vunpack.c.l.b16 %v2111
        %v2244 = vunpack.c.l.b16 %v2112
        %v2245 = vunpack.c.l.b16 %v2113
        %v2246 = vunpack.c.l.b16 %v2114
        %v2247 = vunpack.c.l.b16 %v2115
        %v2248 = vunpack.c.l.b16 %v2116
        %v2249 = vunpack.c.l.b16 %v2117
        %v2250 = vunpack.c.l.b16 %v2118
        %v2251 = vunpack.c.l.b16 %v2119
        %v2252 = vunpack.c.l.b16 %v2120
        %v2253 = vunpack.c.l.b16 %v2121
        %v2254 = vunpack.c.l.b16 %v2122
        %v2255 = vunpack.c.l.b16 %v2123
        %v2256 = vunpack.c.l.b16 %v2124
        %v2257 = vunpack.c.l.b16 %v2125
        %v2258 = vunpack.c.l.b16 %v2126
        %v2259 = vunpack.c.l.b16 %v2127
        %v2260 = vunpack.c.l.b16 %v2128
        %v2261 = vunpack.c.l.b16 %v2129
        %v2262 = vunpack.c.l.b16 %v2130
        %v2263 = vunpack.c.l.b16 %v2131
        %v2264 = vunpack.c.l.b16 %v2132
        %v2265 = vunpack.c.l.b16 %v2133
        %v2266 = vunpack.c.l.b16 %v2134
        %v2267 = vunpack.c.l.b16 %v2135
        %v2268 = vunpack.c.l.b16 %v2136
        %v2269 = vunpack.c.l.b16 %v2137
        %v2270 = vunpack.c.l.b16 %v2138
        %v2271 = vunpack.c.l.b16 %v2139
        %v2272 = vunpack.c.l.b16 %v2140
        %v2273 = vunpack.c.l.b16 %v2141
        %v2274 = vpack.c.b16 %v2211, %v2210
        %v2275 = vpack.c.b16 %v2213, %v2212
        %v2276 = vpack.c.b16 %v2215, %v2214
        %v2277 = vpack.c.b16 %v2217, %v2216
        %v2278 = vpack.c.b16 %v2219, %v2218
        %v2279 = vpack.c.b16 %v2221, %v2220
        %v2280 = vpack.c.b16 %v2223, %v2222
        %v2281 = vpack.c.b16 %v2225, %v2224
        %v2282 = vpack.c.b16 %v2227, %v2226
        %v2283 = vpack.c.b16 %v2229, %v2228
        %v2284 = vpack.c.b16 %v2231, %v2230
        %v2285 = vpack.c.b16 %v2233, %v2232
        %v2286 = vpack.c.b16 %v2235, %v2234
        %v2287 = vpack.c.b16 %v2237, %v2236
        %v2288 = vpack.c.b16 %v2239, %v2238
        %v2289 = vpack.c.b16 %v2241, %v2240
        %v2290 = vpack.c.b16 %v2243, %v2242
        %v2291 = vpack.c.b16 %v2245, %v2244
        %v2292 = vpack.c.b16 %v2247, %v2246
        %v2293 = vpack.c.b16 %v2249, %v2248
        %v2294 = vpack.c.b16 %v2251, %v2250
        %v2295 = vpack.c.b16 %v2253, %v2252
        %v2296 = vpack.c.b16 %v2255, %v2254
        %v2297 = vpack.c.b16 %v2257, %v2256
        %v2298 = vpack.c.b16 %v2259, %v2258
        %v2299 = vpack.c.b16 %v2261, %v2260
        %v2300 = vpack.c.b16 %v2263, %v2262
        %v2301 = vpack.c.b16 %v2265, %v2264
        %v2302 = vpack.c.b16 %v2267, %v2266
        %v2303 = vpack.c.b16 %v2269, %v2268
        %v2304 = vpack.c.b16 %v2271, %v2270
        %v2305 = vpack.c.b16 %v2273, %v2272
        %2338 = vmatprep.subr.bf16.mxu0 0
        %2339 = vmatpush1.bf16.msra.mxu0 %v2281
        %2340 = vmatprep.subr.bf16.mxu0 0
        %2341 = vmatpush1.bf16.msra.mxu0 %v2280
        %2342 = vmatprep.subr.bf16.mxu0 0
        %2343 = vmatpush1.bf16.msra.mxu0 %v2279
        %2344 = vmatprep.subr.bf16.mxu0 0
        %2345 = vmatpush1.bf16.msra.mxu0 %v2278
        %2346 = vmatprep.subr.bf16.mxu0 0
        %2347 = vmatpush1.bf16.msra.mxu0 %v2277
        %2348 = vmatprep.subr.bf16.mxu0 0
        %2349 = vmatpush1.bf16.msra.mxu0 %v2276
        %2350 = vmatprep.subr.bf16.mxu0 0
        %2351 = vmatpush1.bf16.msra.mxu0 %v2275
        %2352 = vmatprep.subr.bf16.mxu0 0
        %2353 = vmatpush1.bf16.msra.mxu0 %v2274
        %2354 = vmatprep.subr.bf16.mxu0 0
        %2355 = vmatpush2.bf16.msra.mxu0 %v2289
        %2356 = vmatprep.subr.bf16.mxu0 0
        %2357 = vmatpush2.bf16.msra.mxu0 %v2288
        %2358 = vmatprep.subr.bf16.mxu0 0
        %2359 = vmatpush2.bf16.msra.mxu0 %v2287
        %2360 = vmatprep.subr.bf16.mxu0 0
        %2361 = vmatpush2.bf16.msra.mxu0 %v2286
        %2362 = vmatprep.subr.bf16.mxu0 0
        %2363 = vmatpush2.bf16.msra.mxu0 %v2285
        %2364 = vmatprep.subr.bf16.mxu0 0
        %2365 = vmatpush2.bf16.msra.mxu0 %v2284
        %2366 = vmatprep.subr.bf16.mxu0 0
        %2367 = vmatpush2.bf16.msra.mxu0 %v2283
        %2368 = vmatprep.subr.bf16.mxu0 0
        %2369 = vmatpush2.bf16.msra.mxu0 %v2282
        %2370 = vmatprep.mubr.bf16.mxu0 %v2071
        %2371 = vmatmul.mubr.bf16.gmra.mxu0 %v2070
        %v2372 = vpop.f32.mrf.mxu0
        %v2373 = vadd.f32 %v2145, %v2372
        %v2374 = vpop.f32.mrf.mxu0
        %v2375 = vpop.f32.mrf.mxu0
        %v2376 = vadd.f32 %v2145, %v2375
        %v2377 = vpop.f32.mrf.mxu0
        %2378 = vmatprep.mubr.bf16.mxu0 %v2075
        %2379 = vmatmul.mubr.bf16.gmra.mxu0 %v2074
        %v2380 = vpop.f32.mrf.mxu0
        %v2381 = vadd.f32 %v2145, %v2380
        %v2382 = vpop.f32.mrf.mxu0
        %v2383 = vpop.f32.mrf.mxu0
        %v2384 = vadd.f32 %v2145, %v2383
        %v2385 = vpop.f32.mrf.mxu0
        %2386 = vdwg.mxu0
        %2387 = vmatprep.subr.bf16.mxu0 0
        %2388 = vmatpush1.bf16.msra.mxu0 %v2297
        %2389 = vmatprep.subr.bf16.mxu0 0
        %2390 = vmatpush1.bf16.msra.mxu0 %v2296
        %2391 = vmatprep.subr.bf16.mxu0 0
        %2392 = vmatpush1.bf16.msra.mxu0 %v2295
        %2393 = vmatprep.subr.bf16.mxu0 0
        %2394 = vmatpush1.bf16.msra.mxu0 %v2294
        %2395 = vmatprep.subr.bf16.mxu0 0
        %2396 = vmatpush1.bf16.msra.mxu0 %v2293
        %2397 = vmatprep.subr.bf16.mxu0 0
        %2398 = vmatpush1.bf16.msra.mxu0 %v2292
        %2399 = vmatprep.subr.bf16.mxu0 0
        %2400 = vmatpush1.bf16.msra.mxu0 %v2291
        %2401 = vmatprep.subr.bf16.mxu0 0
        %2402 = vmatpush1.bf16.msra.mxu0 %v2290
        %2403 = vmatprep.subr.bf16.mxu0 0
        %2404 = vmatpush2.bf16.msra.mxu0 %v2305
        %2405 = vmatprep.subr.bf16.mxu0 0
        %2406 = vmatpush2.bf16.msra.mxu0 %v2304
        %2407 = vmatprep.subr.bf16.mxu0 0
        %2408 = vmatpush2.bf16.msra.mxu0 %v2303
        %2409 = vmatprep.subr.bf16.mxu0 0
        %2410 = vmatpush2.bf16.msra.mxu0 %v2302
        %2411 = vmatprep.subr.bf16.mxu0 0
        %2412 = vmatpush2.bf16.msra.mxu0 %v2301
        %2413 = vmatprep.subr.bf16.mxu0 0
        %2414 = vmatpush2.bf16.msra.mxu0 %v2300
        %2415 = vmatprep.subr.bf16.mxu0 0
        %2416 = vmatpush2.bf16.msra.mxu0 %v2299
        %2417 = vmatprep.subr.bf16.mxu0 0
        %2418 = vmatpush2.bf16.msra.mxu0 %v2298
        %2419 = vmatprep.mubr.bf16.mxu0 %v2073
        %2420 = vmatmul.mubr.bf16.gmra.mxu0 %v2072
        %v2421 = vpop.f32.mrf.mxu0
        %v2422 = vadd.f32 %v2373, %v2421
        %v2423 = vpop.f32.mrf.mxu0
        %v2424 = vpop.f32.mrf.mxu0
        %v2425 = vadd.f32 %v2376, %v2424
        %v2426 = vpop.f32.mrf.mxu0
        %2427 = vmatprep.mubr.bf16.mxu0 %v2077
        %2428 = vmatmul.mubr.bf16.gmra.mxu0 %v2076
        %v2429 = vpop.f32.mrf.mxu0
        %v2430 = vadd.f32 %v2381, %v2429
        %v2431 = vpop.f32.mrf.mxu0
        %v2432 = vpop.f32.mrf.mxu0
        %v2433 = vadd.f32 %v2384, %v2432
        %v2434 = vpop.f32.mrf.mxu0
        %2435 = vdwg.mxu0
        %v2436 = vadd.f32 %v1540, %v2422
        %v2437 = vadd.f32 %v1541, %v2425
        %v2438 = vadd.f32 %v1542, %v2430
        %v2439 = vadd.f32 %v1543, %v2433
        %s2440 = scalar_lea.vmem %s11, 8
        %v2441 = vld [vmem:[%s2440] sm:$0x3f]
        %2442 = vadd.xlane.f32.xlu0 %v2436
        %v2443 = vpop.xlane.xlu0 %2442
        %2444 = vadd.xlane.f32.xlu0 %v2437
        %v2445 = vpop.xlane.xlu0 %2444
        %2446 = vadd.xlane.f32.xlu0 %v2438
        %v2447 = vpop.xlane.xlu0 %2446
        %2448 = vadd.xlane.f32.xlu0 %v2439
        %v2449 = vpop.xlane.xlu0 %2448
        %v2450 = vmul.f32 %v2443, %v695
        %v2451 = vmul.f32 %v2445, %v695
        %v2452 = vmul.f32 %v2447, %v695
        %v2453 = vmul.f32 %v2449, %v695
        %v2454 = vsub.f32 %v2436, %v2450
        %v2455 = vsub.f32 %v2437, %v2451
        %v2456 = vsub.f32 %v2438, %v2452
        %v2457 = vsub.f32 %v2439, %v2453
        %v2458 = vmul.f32 %v2454, %v2454
        %v2459 = vmul.f32 %v2455, %v2455
        %v2460 = vmul.f32 %v2456, %v2456
        %v2461 = vmul.f32 %v2457, %v2457
        %2462 = vadd.xlane.f32.xlu0 %v2458
        %v2463 = vpop.xlane.xlu0 %2462
        %2464 = vadd.xlane.f32.xlu0 %v2459
        %v2465 = vpop.xlane.xlu0 %2464
        %2466 = vadd.xlane.f32.xlu0 %v2460
        %v2467 = vpop.xlane.xlu0 %2466
        %2468 = vadd.xlane.f32.xlu0 %v2461
        %v2469 = vpop.xlane.xlu0 %2468
        %v2470 = vmul.f32 %v2463, %v695
        %v2471 = vmul.f32 %v2465, %v695
        %v2472 = vmul.f32 %v2467, %v695
        %v2473 = vmul.f32 %v2469, %v695
        %v2474 = vadd.f32 %v2470, 1e-05
        %v2475 = vadd.f32 %v2471, 1e-05
        %v2476 = vadd.f32 %v2472, 1e-05
        %v2477 = vadd.f32 %v2473, 1e-05
        %v2478 = vrsqrt.pop %v2474
        %v2479 = vrsqrt.pop %v2475
        %v2480 = vrsqrt.pop %v2476
        %v2481 = vrsqrt.pop %v2477
        %v2482 = vmul.f32 %v2454, %v2478
        %v2483 = vmul.f32 %v2455, %v2479
        %v2484 = vmul.f32 %v2456, %v2480
        %v2485 = vmul.f32 %v2457, %v2481
        %v2486 = vlaneseq
        %v2487 = vshrl.u32 %v2486, 7
        %v2488 = vsub.s32 0, %v2487
        %v2489 = vrot.slane %v2441, %v2488
        %v2490 = vmul.f32 %v2482, %v2489
        %v2491 = vmul.f32 %v2483, %v2489
        %v2492 = vmul.f32 %v2484, %v2489
        %v2493 = vmul.f32 %v2485, %v2489
        %v2494 = vlaneseq
        %v2495 = vshrl.u32 %v2494, 7
        %v2496 = vsub.s32 1, %v2495
        %v2497 = vrot.slane %v2441, %v2496
        %v2498 = vadd.f32 %v2490, %v2497
        %v2499 = vadd.f32 %v2491, %v2497
        %v2500 = vadd.f32 %v2492, %v2497
        %v2501 = vadd.f32 %v2493, %v2497
        %v2502 = vpack.c.bf16 %v2499, %v2498
        %v2503 = vpack.c.bf16 %v2501, %v2500
        %s2504 = scalar_lea.vmem %s3, 192
        %v2505 = vld [vmem:[%s2504] sm:$0xff]
        %v2506 = vld [vmem:[%s2504 + $0x8] sm:$0xf]
        %v2507 = vld [vmem:[%s2504 + $0xc] sm:$0xff]
        %v2508 = vld [vmem:[%s2504 + $0x14] sm:$0xf]
        %v2509 = vld [vmem:[%s2504 + $0x18] sm:$0xff]
        %v2510 = vld [vmem:[%s2504 + $0x20] sm:$0xf]
        %v2511 = vld [vmem:[%s2504 + $0x24] sm:$0xff]
        %v2512 = vld [vmem:[%s2504 + $0x2c] sm:$0xf]
        %v2513 = vld [vmem:[%s2504 + $0x30] sm:$0xff]
        %v2514 = vld [vmem:[%s2504 + $0x38] sm:$0xf]
        %v2515 = vld [vmem:[%s2504 + $0x3c] sm:$0xff]
        %v2516 = vld [vmem:[%s2504 + $0x44] sm:$0xf]
        %v2517 = vld [vmem:[%s2504 + $0x48] sm:$0xff]
        %v2518 = vld [vmem:[%s2504 + $0x50] sm:$0xf]
        %v2519 = vld [vmem:[%s2504 + $0x54] sm:$0xff]
        %v2520 = vld [vmem:[%s2504 + $0x5c] sm:$0xf]
        %v2521 = vld [vmem:[%s2504 + $0x60] sm:$0xff]
        %v2522 = vld [vmem:[%s2504 + $0x68] sm:$0xf]
        %v2523 = vld [vmem:[%s2504 + $0x6c] sm:$0xff]
        %v2524 = vld [vmem:[%s2504 + $0x74] sm:$0xf]
        %v2525 = vld [vmem:[%s2504 + $0x78] sm:$0xff]
        %v2526 = vld [vmem:[%s2504 + $0x80] sm:$0xf]
        %v2527 = vld [vmem:[%s2504 + $0x84] sm:$0xff]
        %v2528 = vld [vmem:[%s2504 + $0x8c] sm:$0xf]
        %v2529 = vld [vmem:[%s2504 + $0x90] sm:$0xff]
        %v2530 = vld [vmem:[%s2504 + $0x98] sm:$0xf]
        %v2531 = vld [vmem:[%s2504 + $0x9c] sm:$0xff]
        %v2532 = vld [vmem:[%s2504 + $0xa4] sm:$0xf]
        %v2533 = vld [vmem:[%s2504 + $0xa8] sm:$0xff]
        %v2534 = vld [vmem:[%s2504 + $0xb0] sm:$0xf]
        %v2535 = vld [vmem:[%s2504 + $0xb4] sm:$0xff]
        %v2536 = vld [vmem:[%s2504 + $0xbc] sm:$0xf]
        %s2537 = scalar_lea.vmem %s4, 3
        %v2538 = vld [vmem:[%s2537] sm:$0x7]
        %v2540 = vlaneseq
        %v2541 = vshrl.u32 %v2540, 7
        %v2542 = vsub.s32 0, %v2541
        %v2543 = vrot.slane %v2538, %v2542
        %v2544 = vlaneseq
        %v2545 = vshrl.u32 %v2544, 7
        %v2546 = vsub.s32 1, %v2545
        %v2547 = vrot.slane %v2538, %v2546
        %v2548 = vlaneseq
        %v2549 = vshrl.u32 %v2548, 7
        %v2550 = vsub.s32 2, %v2549
        %v2551 = vrot.slane %v2538, %v2550
        %v2587 = vunpack.c.l.b16 %v2505
        %v2588 = vunpack.c.h.b16 %v2505
        %v2589 = vunpack.c.l.b16 %v2506
        %v2590 = vunpack.c.l.b16 %v2507
        %v2591 = vunpack.c.h.b16 %v2507
        %v2592 = vunpack.c.l.b16 %v2508
        %v2593 = vunpack.c.l.b16 %v2509
        %v2594 = vunpack.c.h.b16 %v2509
        %v2595 = vunpack.c.l.b16 %v2510
        %v2596 = vunpack.c.l.b16 %v2511
        %v2597 = vunpack.c.h.b16 %v2511
        %v2598 = vunpack.c.l.b16 %v2512
        %v2599 = vunpack.c.l.b16 %v2513
        %v2600 = vunpack.c.h.b16 %v2513
        %v2601 = vunpack.c.l.b16 %v2514
        %v2602 = vunpack.c.l.b16 %v2515
        %v2603 = vunpack.c.h.b16 %v2515
        %v2604 = vunpack.c.l.b16 %v2516
        %v2605 = vunpack.c.l.b16 %v2517
        %v2606 = vunpack.c.h.b16 %v2517
        %v2607 = vunpack.c.l.b16 %v2518
        %v2608 = vunpack.c.l.b16 %v2519
        %v2609 = vunpack.c.h.b16 %v2519
        %v2610 = vunpack.c.l.b16 %v2520
        %v2611 = vunpack.c.l.b16 %v2521
        %v2612 = vunpack.c.h.b16 %v2521
        %v2613 = vunpack.c.l.b16 %v2522
        %v2614 = vunpack.c.l.b16 %v2523
        %v2615 = vunpack.c.h.b16 %v2523
        %v2616 = vunpack.c.l.b16 %v2524
        %v2617 = vunpack.c.l.b16 %v2525
        %v2618 = vunpack.c.h.b16 %v2525
        %v2619 = vunpack.c.l.b16 %v2526
        %v2620 = vunpack.c.l.b16 %v2527
        %v2621 = vunpack.c.h.b16 %v2527
        %v2622 = vunpack.c.l.b16 %v2528
        %v2623 = vunpack.c.l.b16 %v2529
        %v2624 = vunpack.c.h.b16 %v2529
        %v2625 = vunpack.c.l.b16 %v2530
        %v2626 = vunpack.c.l.b16 %v2531
        %v2627 = vunpack.c.h.b16 %v2531
        %v2628 = vunpack.c.l.b16 %v2532
        %v2629 = vunpack.c.l.b16 %v2533
        %v2630 = vunpack.c.h.b16 %v2533
        %v2631 = vunpack.c.l.b16 %v2534
        %v2632 = vunpack.c.l.b16 %v2535
        %v2633 = vunpack.c.h.b16 %v2535
        %v2634 = vunpack.c.l.b16 %v2536
        %v2635 = vpack.c.b16 %v2590, %v2587
        %v2636 = vpack.c.b16 %v2591, %v2588
        %v2637 = vpack.c.b16 %v2592, %v2589
        %v2638 = vpack.c.b16 %v2596, %v2593
        %v2639 = vpack.c.b16 %v2597, %v2594
        %v2640 = vpack.c.b16 %v2598, %v2595
        %v2641 = vpack.c.b16 %v2602, %v2599
        %v2642 = vpack.c.b16 %v2603, %v2600
        %v2643 = vpack.c.b16 %v2604, %v2601
        %v2644 = vpack.c.b16 %v2608, %v2605
        %v2645 = vpack.c.b16 %v2609, %v2606
        %v2646 = vpack.c.b16 %v2610, %v2607
        %v2647 = vpack.c.b16 %v2614, %v2611
        %v2648 = vpack.c.b16 %v2615, %v2612
        %v2649 = vpack.c.b16 %v2616, %v2613
        %v2650 = vpack.c.b16 %v2620, %v2617
        %v2651 = vpack.c.b16 %v2621, %v2618
        %v2652 = vpack.c.b16 %v2622, %v2619
        %v2653 = vpack.c.b16 %v2626, %v2623
        %v2654 = vpack.c.b16 %v2627, %v2624
        %v2655 = vpack.c.b16 %v2628, %v2625
        %v2656 = vpack.c.b16 %v2632, %v2629
        %v2657 = vpack.c.b16 %v2633, %v2630
        %v2658 = vpack.c.b16 %v2634, %v2631
        %2683 = vmatprep.subr.bf16.mxu0 %v2657
        %2684 = vmatpush1.bf16.msra.mxu0 %v2656
        %2685 = vmatprep.subr.bf16.mxu0 %v2654
        %2686 = vmatpush1.bf16.msra.mxu0 %v2653
        %2687 = vmatprep.subr.bf16.mxu0 %v2651
        %2688 = vmatpush1.bf16.msra.mxu0 %v2650
        %2689 = vmatprep.subr.bf16.mxu0 %v2648
        %2690 = vmatpush1.bf16.msra.mxu0 %v2647
        %2691 = vmatprep.subr.bf16.mxu0 %v2645
        %2692 = vmatpush1.bf16.msra.mxu0 %v2644
        %2693 = vmatprep.subr.bf16.mxu0 %v2642
        %2694 = vmatpush1.bf16.msra.mxu0 %v2641
        %2695 = vmatprep.subr.bf16.mxu0 %v2639
        %2696 = vmatpush1.bf16.msra.mxu0 %v2638
        %2697 = vmatprep.subr.bf16.mxu0 %v2636
        %2698 = vmatpush1.bf16.msra.mxu0 %v2635
        %2699 = vmatprep.subr.bf16.mxu0 0
        %2700 = vmatpush2.bf16.msra.mxu0 0
        %2701 = vmatprep.subr.bf16.mxu0 0
        %2702 = vmatpush2.bf16.msra.mxu0 0
        %2703 = vmatprep.subr.bf16.mxu0 0
        %2704 = vmatpush2.bf16.msra.mxu0 0
        %2705 = vmatprep.subr.bf16.mxu0 0
        %2706 = vmatpush2.bf16.msra.mxu0 0
        %2707 = vmatprep.subr.bf16.mxu0 0
        %2708 = vmatpush2.bf16.msra.mxu0 0
        %2709 = vmatprep.subr.bf16.mxu0 0
        %2710 = vmatpush2.bf16.msra.mxu0 0
        %2711 = vmatprep.subr.bf16.mxu0 0
        %2712 = vmatpush2.bf16.msra.mxu0 0
        %2713 = vmatprep.subr.bf16.mxu0 0
        %2714 = vmatpush2.bf16.msra.mxu0 0
        %2715 = vmatprep.mubr.bf16.mxu0 0
        %2716 = vmatmul.mubr.bf16.gmra.mxu0 %v2502
        %v2717 = vpop.f32.mrf.mxu0
        %v2718 = vadd.f32 %v2543, %v2717
        %v2719 = vpop.f32.mrf.mxu0
        %v2720 = vadd.f32 %v2547, %v2719
        %v2721 = vpop.f32.mrf.mxu0
        %v2722 = vadd.f32 %v2543, %v2721
        %v2723 = vpop.f32.mrf.mxu0
        %v2724 = vadd.f32 %v2547, %v2723
        %2725 = vmatprep.mubr.bf16.mxu0 0
        %2726 = vmatmul.mubr.bf16.gmra.mxu0 %v2503
        %v2727 = vpop.f32.mrf.mxu0
        %v2728 = vadd.f32 %v2543, %v2727
        %v2729 = vpop.f32.mrf.mxu0
        %v2730 = vadd.f32 %v2547, %v2729
        %v2731 = vpop.f32.mrf.mxu0
        %v2732 = vadd.f32 %v2543, %v2731
        %v2733 = vpop.f32.mrf.mxu0
        %v2734 = vadd.f32 %v2547, %v2733
        %2735 = vdwg.mxu0
        %2736 = vmatprep.subr.bf16.mxu0 0
        %2737 = vmatpush1.bf16.msra.mxu0 %v2658
        %2738 = vmatprep.subr.bf16.mxu0 0
        %2739 = vmatpush1.bf16.msra.mxu0 %v2655
        %2740 = vmatprep.subr.bf16.mxu0 0
        %2741 = vmatpush1.bf16.msra.mxu0 %v2652
        %2742 = vmatprep.subr.bf16.mxu0 0
        %2743 = vmatpush1.bf16.msra.mxu0 %v2649
        %2744 = vmatprep.subr.bf16.mxu0 0
        %2745 = vmatpush1.bf16.msra.mxu0 %v2646
        %2746 = vmatprep.subr.bf16.mxu0 0
        %2747 = vmatpush1.bf16.msra.mxu0 %v2643
        %2748 = vmatprep.subr.bf16.mxu0 0
        %2749 = vmatpush1.bf16.msra.mxu0 %v2640
        %2750 = vmatprep.subr.bf16.mxu0 0
        %2751 = vmatpush1.bf16.msra.mxu0 %v2637
        %2752 = vmatprep.subr.bf16.mxu0 0
        %2753 = vmatpush2.bf16.msra.mxu0 0
        %2754 = vmatprep.subr.bf16.mxu0 0
        %2755 = vmatpush2.bf16.msra.mxu0 0
        %2756 = vmatprep.subr.bf16.mxu0 0
        %2757 = vmatpush2.bf16.msra.mxu0 0
        %2758 = vmatprep.subr.bf16.mxu0 0
        %2759 = vmatpush2.bf16.msra.mxu0 0
        %2760 = vmatprep.subr.bf16.mxu0 0
        %2761 = vmatpush2.bf16.msra.mxu0 0
        %2762 = vmatprep.subr.bf16.mxu0 0
        %2763 = vmatpush2.bf16.msra.mxu0 0
        %2764 = vmatprep.subr.bf16.mxu0 0
        %2765 = vmatpush2.bf16.msra.mxu0 0
        %2766 = vmatprep.subr.bf16.mxu0 0
        %2767 = vmatpush2.bf16.msra.mxu0 0
        %2768 = vmatprep.mubr.bf16.mxu0 0
        %2769 = vmatmul.mubr.bf16.gmra.mxu0 %v2502
        %v2770 = vpop.f32.mrf.mxu0
        %v2771 = vadd.f32 %v2551, %v2770
        %v2772 = vpop.f32.mrf.mxu0
        %v2773 = vpop.f32.mrf.mxu0
        %v2774 = vadd.f32 %v2551, %v2773
        %v2775 = vpop.f32.mrf.mxu0
        %2776 = vmatprep.mubr.bf16.mxu0 0
        %2777 = vmatmul.mubr.bf16.gmra.mxu0 %v2503
        %v2778 = vpop.f32.mrf.mxu0
        %v2779 = vadd.f32 %v2551, %v2778
        %v2780 = vpop.f32.mrf.mxu0
        %v2781 = vpop.f32.mrf.mxu0
        %v2782 = vadd.f32 %v2551, %v2781
        %v2783 = vpop.f32.mrf.mxu0
        %2784 = vdwg.mxu0
        %v2785 = vmul.f32 %v2720, %v547
        %v2786 = vmul.f32 %v2724, %v548
        %v2787 = vmul.f32 %v2730, %v549
        %v2788 = vmul.f32 %v2734, %v550
        %v2789 = vmul.f32 %v2720, %v551
        %v2790 = vmul.f32 %v2724, %v552
        %v2791 = vmul.f32 %v2730, %v553
        %v2792 = vmul.f32 %v2734, %v554
        %v2793 = vmul.f32 %v2720, %v555
        %v2794 = vmul.f32 %v2724, %v556
        %v2795 = vmul.f32 %v2730, %v557
        %v2796 = vmul.f32 %v2734, %v558
        %v2797 = vmul.f32 %v2720, %v559
        %v2798 = vmul.f32 %v2724, %v560
        %v2799 = vmul.f32 %v2730, %v561
        %v2800 = vmul.f32 %v2734, %v562
        %2801 = vmatprep.subr.mxu0 0.0
        %2802 = vmatpush1.xpose.msra.mxu0 %v2800
        %2803 = vmatprep.subr.mxu0 0.0
        %2804 = vmatpush1.xpose.msra.mxu0 %v2799
        %2805 = vmatprep.subr.mxu0 0.0
        %2806 = vmatpush1.xpose.msra.mxu0 %v2798
        %2807 = vmatprep.subr.mxu0 0.0
        %2808 = vmatpush1.xpose.msra.mxu0 %v2797
        %2809 = vmatprep.subr.mxu0 0.0
        %2810 = vmatpush1.xpose.msra.mxu0 %v2796
        %2811 = vmatprep.subr.mxu0 0.0
        %2812 = vmatpush1.xpose.msra.mxu0 %v2795
        %2813 = vmatprep.subr.mxu0 0.0
        %2814 = vmatpush1.xpose.msra.mxu0 %v2794
        %2815 = vmatprep.subr.mxu0 0.0
        %2816 = vmatpush1.xpose.msra.mxu0 %v2793
        %2817 = vmatprep.subr.mxu0 0.0
        %2818 = vmatpush1.xpose.msra.mxu0 %v2792
        %2819 = vmatprep.subr.mxu0 0.0
        %2820 = vmatpush1.xpose.msra.mxu0 %v2791
        %2821 = vmatprep.subr.mxu0 0.0
        %2822 = vmatpush1.xpose.msra.mxu0 %v2790
        %2823 = vmatprep.subr.mxu0 0.0
        %2824 = vmatpush1.xpose.msra.mxu0 %v2789
        %2825 = vmatprep.subr.mxu0 0.0
        %2826 = vmatpush1.xpose.msra.mxu0 %v2788
        %2827 = vmatprep.subr.mxu0 0.0
        %2828 = vmatpush1.xpose.msra.mxu0 %v2787
        %2829 = vmatprep.subr.mxu0 0.0
        %2830 = vmatpush1.xpose.msra.mxu0 %v2786
        %2831 = vmatprep.subr.mxu0 0.0
        %2832 = vmatpush1.xpose.msra.mxu0 %v2785
        %2833 = vmatprep.subr.mxu0 0.0
        %2834 = vmatpush2.xpose.msra.mxu0 0.0
        %2835 = vmatprep.subr.mxu0 0.0
        %2836 = vmatpush2.xpose.msra.mxu0 0.0
        %2837 = vmatprep.subr.mxu0 0.0
        %2838 = vmatpush2.xpose.msra.mxu0 0.0
        %2839 = vmatprep.subr.mxu0 0.0
        %2840 = vmatpush2.xpose.msra.mxu0 0.0
        %2841 = vmatprep.subr.mxu0 0.0
        %2842 = vmatpush2.xpose.msra.mxu0 0.0
        %2843 = vmatprep.subr.mxu0 0.0
        %2844 = vmatpush2.xpose.msra.mxu0 0.0
        %2845 = vmatprep.subr.mxu0 0.0
        %2846 = vmatpush2.xpose.msra.mxu0 0.0
        %2847 = vmatprep.subr.mxu0 0.0
        %2848 = vmatpush2.xpose.msra.mxu0 0.0
        %2849 = vmatprep.subr.mxu0 0.0
        %2850 = vmatpush2.xpose.msra.mxu0 0.0
        %2851 = vmatprep.subr.mxu0 0.0
        %2852 = vmatpush2.xpose.msra.mxu0 0.0
        %2853 = vmatprep.subr.mxu0 0.0
        %2854 = vmatpush2.xpose.msra.mxu0 0.0
        %2855 = vmatprep.subr.mxu0 0.0
        %2856 = vmatpush2.xpose.msra.mxu0 0.0
        %2857 = vmatprep.subr.mxu0 0.0
        %2858 = vmatpush2.xpose.msra.mxu0 0.0
        %2859 = vmatprep.subr.mxu0 0.0
        %2860 = vmatpush2.xpose.msra.mxu0 0.0
        %2861 = vmatprep.subr.mxu0 0.0
        %2862 = vmatpush2.xpose.msra.mxu0 0.0
        %2863 = vmatprep.subr.mxu0 0.0
        %2864 = vmatpush2.xpose.msra.mxu0 0.0
        %2865 = vmatprep.mubr.f32.mxu0 0.0
        %2866 = vmatmul.mubr.f32.gmra.mxu0 %v2718
        %v2867 = vpop.f32.mrf.mxu0
        %v2868 = vadd.f32 0.0, %v2867
        %v2869 = vpop.f32.mrf.mxu0
        %2870 = vmatprep.mubr.f32.mxu0 0.0
        %2871 = vmatmul.mubr.f32.gmra.mxu0 %v2722
        %v2872 = vpop.f32.mrf.mxu0
        %v2873 = vadd.f32 0.0, %v2872
        %v2874 = vpop.f32.mrf.mxu0
        %2875 = vmatprep.mubr.f32.mxu0 0.0
        %2876 = vmatmul.mubr.f32.gmra.mxu0 %v2728
        %v2877 = vpop.f32.mrf.mxu0
        %v2878 = vadd.f32 0.0, %v2877
        %v2879 = vpop.f32.mrf.mxu0
        %2880 = vmatprep.mubr.f32.mxu0 0.0
        %2881 = vmatmul.mubr.f32.gmra.mxu0 %v2732
        %v2882 = vpop.f32.mrf.mxu0
        %v2883 = vadd.f32 0.0, %v2882
        %v2884 = vpop.f32.mrf.mxu0
        %2885 = vdwg.mxu0
        %v2886 = vmul.f32 %v2868, 0.17677669
        %v2887 = vmul.f32 %v2873, 0.17677669
        %v2888 = vmul.f32 %v2878, 0.17677669
        %v2889 = vmul.f32 %v2883, 0.17677669
        %s2890 = scalar_lea.vmem %s5, 32
        %v2891 = vld [vmem:[%s2890] sm:$0xff]
        %v2892 = vld [vmem:[%s2890 + $0x8] sm:$0xff]
        %v2893 = vld [vmem:[%s2890 + $0x10] sm:$0xff]
        %v2894 = vld [vmem:[%s2890 + $0x18] sm:$0xff]
        %v2895 = vadd.f32 %v2886, %v2891
        %v2896 = vadd.f32 %v2887, %v2892
        %v2897 = vadd.f32 %v2888, %v2893
        %v2898 = vadd.f32 %v2889, %v2894
        %2899 = vmax.xlane.f32.xlu0 %v2895
        %v2900 = vpop.xlane.xlu0 %2899
        %2901 = vmax.xlane.f32.xlu0 %v2896
        %v2902 = vpop.xlane.xlu0 %2901
        %2903 = vmax.xlane.f32.xlu0 %v2897
        %v2904 = vpop.xlane.xlu0 %2903
        %2905 = vmax.xlane.f32.xlu0 %v2898
        %v2906 = vpop.xlane.xlu0 %2905
        %v2907 = vsub.f32 %v2895, %v2900
        %v2908 = vsub.f32 %v2896, %v2902
        %v2909 = vsub.f32 %v2897, %v2904
        %v2910 = vsub.f32 %v2898, %v2906
        %v2911 = vmul.f32 %v2907, 1.442695
        %v2912 = vpow.pop %v2911
        %v2913 = vmul.f32 %v2908, 1.442695
        %v2914 = vpow.pop %v2913
        %v2915 = vmul.f32 %v2909, 1.442695
        %v2916 = vpow.pop %v2915
        %v2917 = vmul.f32 %v2910, 1.442695
        %v2918 = vpow.pop %v2917
        %v2919 = vmul.f32 %v2771, %v547
        %v2920 = vmul.f32 %v2774, %v548
        %v2921 = vmul.f32 %v2779, %v549
        %v2922 = vmul.f32 %v2782, %v550
        %v2923 = vmul.f32 %v2771, %v551
        %v2924 = vmul.f32 %v2774, %v552
        %v2925 = vmul.f32 %v2779, %v553
        %v2926 = vmul.f32 %v2782, %v554
        %v2927 = vmul.f32 %v2771, %v555
        %v2928 = vmul.f32 %v2774, %v556
        %v2929 = vmul.f32 %v2779, %v557
        %v2930 = vmul.f32 %v2782, %v558
        %v2931 = vmul.f32 %v2771, %v559
        %v2932 = vmul.f32 %v2774, %v560
        %v2933 = vmul.f32 %v2779, %v561
        %v2934 = vmul.f32 %v2782, %v562
        %2935 = vmatprep.subr.mxu0 0.0
        %2936 = vmatpush1.msra.mxu0 %v2934
        %2937 = vmatprep.subr.mxu0 0.0
        %2938 = vmatpush1.msra.mxu0 %v2933
        %2939 = vmatprep.subr.mxu0 0.0
        %2940 = vmatpush1.msra.mxu0 %v2932
        %2941 = vmatprep.subr.mxu0 0.0
        %2942 = vmatpush1.msra.mxu0 %v2931
        %2943 = vmatprep.subr.mxu0 0.0
        %2944 = vmatpush1.msra.mxu0 %v2930
        %2945 = vmatprep.subr.mxu0 0.0
        %2946 = vmatpush1.msra.mxu0 %v2929
        %2947 = vmatprep.subr.mxu0 0.0
        %2948 = vmatpush1.msra.mxu0 %v2928
        %2949 = vmatprep.subr.mxu0 0.0
        %2950 = vmatpush1.msra.mxu0 %v2927
        %2951 = vmatprep.subr.mxu0 0.0
        %2952 = vmatpush1.msra.mxu0 %v2926
        %2953 = vmatprep.subr.mxu0 0.0
        %2954 = vmatpush1.msra.mxu0 %v2925
        %2955 = vmatprep.subr.mxu0 0.0
        %2956 = vmatpush1.msra.mxu0 %v2924
        %2957 = vmatprep.subr.mxu0 0.0
        %2958 = vmatpush1.msra.mxu0 %v2923
        %2959 = vmatprep.subr.mxu0 0.0
        %2960 = vmatpush1.msra.mxu0 %v2922
        %2961 = vmatprep.subr.mxu0 0.0
        %2962 = vmatpush1.msra.mxu0 %v2921
        %2963 = vmatprep.subr.mxu0 0.0
        %2964 = vmatpush1.msra.mxu0 %v2920
        %2965 = vmatprep.subr.mxu0 0.0
        %2966 = vmatpush1.msra.mxu0 %v2919
        %2967 = vmatprep.subr.mxu0 0.0
        %2968 = vmatpush2.msra.mxu0 0.0
        %2969 = vmatprep.subr.mxu0 0.0
        %2970 = vmatpush2.msra.mxu0 0.0
        %2971 = vmatprep.subr.mxu0 0.0
        %2972 = vmatpush2.msra.mxu0 0.0
        %2973 = vmatprep.subr.mxu0 0.0
        %2974 = vmatpush2.msra.mxu0 0.0
        %2975 = vmatprep.subr.mxu0 0.0
        %2976 = vmatpush2.msra.mxu0 0.0
        %2977 = vmatprep.subr.mxu0 0.0
        %2978 = vmatpush2.msra.mxu0 0.0
        %2979 = vmatprep.subr.mxu0 0.0
        %2980 = vmatpush2.msra.mxu0 0.0
        %2981 = vmatprep.subr.mxu0 0.0
        %2982 = vmatpush2.msra.mxu0 0.0
        %2983 = vmatprep.subr.mxu0 0.0
        %2984 = vmatpush2.msra.mxu0 0.0
        %2985 = vmatprep.subr.mxu0 0.0
        %2986 = vmatpush2.msra.mxu0 0.0
        %2987 = vmatprep.subr.mxu0 0.0
        %2988 = vmatpush2.msra.mxu0 0.0
        %2989 = vmatprep.subr.mxu0 0.0
        %2990 = vmatpush2.msra.mxu0 0.0
        %2991 = vmatprep.subr.mxu0 0.0
        %2992 = vmatpush2.msra.mxu0 0.0
        %2993 = vmatprep.subr.mxu0 0.0
        %2994 = vmatpush2.msra.mxu0 0.0
        %2995 = vmatprep.subr.mxu0 0.0
        %2996 = vmatpush2.msra.mxu0 0.0
        %2997 = vmatprep.subr.mxu0 0.0
        %2998 = vmatpush2.msra.mxu0 0.0
        %2999 = vmatprep.mubr.f32.mxu0 0.0
        %3000 = vmatmul.mubr.f32.gmra.mxu0 %v2912
        %v3001 = vpop.f32.mrf.mxu0
        %v3002 = vadd.f32 0.0, %v3001
        %v3003 = vpop.f32.mrf.mxu0
        %3004 = vmatprep.mubr.f32.mxu0 0.0
        %3005 = vmatmul.mubr.f32.gmra.mxu0 %v2914
        %v3006 = vpop.f32.mrf.mxu0
        %v3007 = vadd.f32 0.0, %v3006
        %v3008 = vpop.f32.mrf.mxu0
        %3009 = vmatprep.mubr.f32.mxu0 0.0
        %3010 = vmatmul.mubr.f32.gmra.mxu0 %v2916
        %v3011 = vpop.f32.mrf.mxu0
        %v3012 = vadd.f32 0.0, %v3011
        %v3013 = vpop.f32.mrf.mxu0
        %3014 = vmatprep.mubr.f32.mxu0 0.0
        %3015 = vmatmul.mubr.f32.gmra.mxu0 %v2918
        %v3016 = vpop.f32.mrf.mxu0
        %v3017 = vadd.f32 0.0, %v3016
        %v3018 = vpop.f32.mrf.mxu0
        %3019 = vdwg.mxu0
        %3020 = vmatprep.subr.mxu0 0.0
        %3021 = vmatpush1.msra.mxu0 %v562
        %3022 = vmatprep.subr.mxu0 0.0
        %3023 = vmatpush1.msra.mxu0 %v561
        %3024 = vmatprep.subr.mxu0 0.0
        %3025 = vmatpush1.msra.mxu0 %v560
        %3026 = vmatprep.subr.mxu0 0.0
        %3027 = vmatpush1.msra.mxu0 %v559
        %3028 = vmatprep.subr.mxu0 0.0
        %3029 = vmatpush1.msra.mxu0 %v558
        %3030 = vmatprep.subr.mxu0 0.0
        %3031 = vmatpush1.msra.mxu0 %v557
        %3032 = vmatprep.subr.mxu0 0.0
        %3033 = vmatpush1.msra.mxu0 %v556
        %3034 = vmatprep.subr.mxu0 0.0
        %3035 = vmatpush1.msra.mxu0 %v555
        %3036 = vmatprep.subr.mxu0 0.0
        %3037 = vmatpush1.msra.mxu0 %v554
        %3038 = vmatprep.subr.mxu0 0.0
        %3039 = vmatpush1.msra.mxu0 %v553
        %3040 = vmatprep.subr.mxu0 0.0
        %3041 = vmatpush1.msra.mxu0 %v552
        %3042 = vmatprep.subr.mxu0 0.0
        %3043 = vmatpush1.msra.mxu0 %v551
        %3044 = vmatprep.subr.mxu0 0.0
        %3045 = vmatpush1.msra.mxu0 %v550
        %3046 = vmatprep.subr.mxu0 0.0
        %3047 = vmatpush1.msra.mxu0 %v549
        %3048 = vmatprep.subr.mxu0 0.0
        %3049 = vmatpush1.msra.mxu0 %v548
        %3050 = vmatprep.subr.mxu0 0.0
        %3051 = vmatpush1.msra.mxu0 %v547
        %3052 = vmatprep.subr.mxu0 0.0
        %3053 = vmatpush2.msra.mxu0 0.0
        %3054 = vmatprep.subr.mxu0 0.0
        %3055 = vmatpush2.msra.mxu0 0.0
        %3056 = vmatprep.subr.mxu0 0.0
        %3057 = vmatpush2.msra.mxu0 0.0
        %3058 = vmatprep.subr.mxu0 0.0
        %3059 = vmatpush2.msra.mxu0 0.0
        %3060 = vmatprep.subr.mxu0 0.0
        %3061 = vmatpush2.msra.mxu0 0.0
        %3062 = vmatprep.subr.mxu0 0.0
        %3063 = vmatpush2.msra.mxu0 0.0
        %3064 = vmatprep.subr.mxu0 0.0
        %3065 = vmatpush2.msra.mxu0 0.0
        %3066 = vmatprep.subr.mxu0 0.0
        %3067 = vmatpush2.msra.mxu0 0.0
        %3068 = vmatprep.subr.mxu0 0.0
        %3069 = vmatpush2.msra.mxu0 0.0
        %3070 = vmatprep.subr.mxu0 0.0
        %3071 = vmatpush2.msra.mxu0 0.0
        %3072 = vmatprep.subr.mxu0 0.0
        %3073 = vmatpush2.msra.mxu0 0.0
        %3074 = vmatprep.subr.mxu0 0.0
        %3075 = vmatpush2.msra.mxu0 0.0
        %3076 = vmatprep.subr.mxu0 0.0
        %3077 = vmatpush2.msra.mxu0 0.0
        %3078 = vmatprep.subr.mxu0 0.0
        %3079 = vmatpush2.msra.mxu0 0.0
        %3080 = vmatprep.subr.mxu0 0.0
        %3081 = vmatpush2.msra.mxu0 0.0
        %3082 = vmatprep.subr.mxu0 0.0
        %3083 = vmatpush2.msra.mxu0 0.0
        %3084 = vmatprep.mubr.f32.mxu0 0.0
        %3085 = vmatmul.mubr.f32.gmra.mxu0 %v2912
        %v3086 = vpop.f32.mrf.mxu0
        %v3087 = vadd.f32 0.0, %v3086
        %v3088 = vpop.f32.mrf.mxu0
        %3089 = vmatprep.mubr.f32.mxu0 0.0
        %3090 = vmatmul.mubr.f32.gmra.mxu0 %v2914
        %v3091 = vpop.f32.mrf.mxu0
        %v3092 = vadd.f32 0.0, %v3091
        %v3093 = vpop.f32.mrf.mxu0
        %3094 = vmatprep.mubr.f32.mxu0 0.0
        %3095 = vmatmul.mubr.f32.gmra.mxu0 %v2916
        %v3096 = vpop.f32.mrf.mxu0
        %v3097 = vadd.f32 0.0, %v3096
        %v3098 = vpop.f32.mrf.mxu0
        %3099 = vmatprep.mubr.f32.mxu0 0.0
        %3100 = vmatmul.mubr.f32.gmra.mxu0 %v2918
        %v3101 = vpop.f32.mrf.mxu0
        %v3102 = vadd.f32 0.0, %v3101
        %v3103 = vpop.f32.mrf.mxu0
        %3104 = vdwg.mxu0
        %v3105 = vrcp.pop %v3087
        %v3106 = vrcp.pop %v3092
        %v3107 = vrcp.pop %v3097
        %v3108 = vrcp.pop %v3102
        %v3109 = vmul.f32 %v3002, %v3105
        %v3110 = vmul.f32 %v3007, %v3106
        %v3111 = vmul.f32 %v3012, %v3107
        %v3112 = vmul.f32 %v3017, %v3108
        %v3113 = vpack.c.bf16 %v3110, %v3109
        %v3114 = vpack.c.bf16 %v3112, %v3111
        %s3115 = scalar_lea.vmem %s7, 64
        %v3116 = vld [vmem:[%s3115] sm:$0xf]
        %v3117 = vld [vmem:[%s3115 + $0x4] sm:$0xf]
        %v3118 = vld [vmem:[%s3115 + $0x8] sm:$0xf]
        %v3119 = vld [vmem:[%s3115 + $0xc] sm:$0xf]
        %v3120 = vld [vmem:[%s3115 + $0x10] sm:$0xf]
        %v3121 = vld [vmem:[%s3115 + $0x14] sm:$0xf]
        %v3122 = vld [vmem:[%s3115 + $0x18] sm:$0xf]
        %v3123 = vld [vmem:[%s3115 + $0x1c] sm:$0xf]
        %v3124 = vld [vmem:[%s3115 + $0x20] sm:$0xf]
        %v3125 = vld [vmem:[%s3115 + $0x24] sm:$0xf]
        %v3126 = vld [vmem:[%s3115 + $0x28] sm:$0xf]
        %v3127 = vld [vmem:[%s3115 + $0x2c] sm:$0xf]
        %v3128 = vld [vmem:[%s3115 + $0x30] sm:$0xf]
        %v3129 = vld [vmem:[%s3115 + $0x34] sm:$0xf]
        %v3130 = vld [vmem:[%s3115 + $0x38] sm:$0xf]
        %v3131 = vld [vmem:[%s3115 + $0x3c] sm:$0xf]
        %v3148 = vunpack.c.l.b16 %v3116
        %v3149 = vunpack.c.l.b16 %v3117
        %v3150 = vunpack.c.l.b16 %v3118
        %v3151 = vunpack.c.l.b16 %v3119
        %v3152 = vunpack.c.l.b16 %v3120
        %v3153 = vunpack.c.l.b16 %v3121
        %v3154 = vunpack.c.l.b16 %v3122
        %v3155 = vunpack.c.l.b16 %v3123
        %v3156 = vunpack.c.l.b16 %v3124
        %v3157 = vunpack.c.l.b16 %v3125
        %v3158 = vunpack.c.l.b16 %v3126
        %v3159 = vunpack.c.l.b16 %v3127
        %v3160 = vunpack.c.l.b16 %v3128
        %v3161 = vunpack.c.l.b16 %v3129
        %v3162 = vunpack.c.l.b16 %v3130
        %v3163 = vunpack.c.l.b16 %v3131
        %v3164 = vpack.c.b16 %v3149, %v3148
        %v3165 = vpack.c.b16 %v3151, %v3150
        %v3166 = vpack.c.b16 %v3153, %v3152
        %v3167 = vpack.c.b16 %v3155, %v3154
        %v3168 = vpack.c.b16 %v3157, %v3156
        %v3169 = vpack.c.b16 %v3159, %v3158
        %v3170 = vpack.c.b16 %v3161, %v3160
        %v3171 = vpack.c.b16 %v3163, %v3162
        %3180 = vmatprep.subr.bf16.mxu0 0
        %3181 = vmatpush1.bf16.msra.mxu0 %v3171
        %3182 = vmatprep.subr.bf16.mxu0 0
        %3183 = vmatpush1.bf16.msra.mxu0 %v3170
        %3184 = vmatprep.subr.bf16.mxu0 0
        %3185 = vmatpush1.bf16.msra.mxu0 %v3169
        %3186 = vmatprep.subr.bf16.mxu0 0
        %3187 = vmatpush1.bf16.msra.mxu0 %v3168
        %3188 = vmatprep.subr.bf16.mxu0 0
        %3189 = vmatpush1.bf16.msra.mxu0 %v3167
        %3190 = vmatprep.subr.bf16.mxu0 0
        %3191 = vmatpush1.bf16.msra.mxu0 %v3166
        %3192 = vmatprep.subr.bf16.mxu0 0
        %3193 = vmatpush1.bf16.msra.mxu0 %v3165
        %3194 = vmatprep.subr.bf16.mxu0 0
        %3195 = vmatpush1.bf16.msra.mxu0 %v3164
        %3196 = vmatprep.subr.bf16.mxu0 0
        %3197 = vmatpush2.bf16.msra.mxu0 0
        %3198 = vmatprep.subr.bf16.mxu0 0
        %3199 = vmatpush2.bf16.msra.mxu0 0
        %3200 = vmatprep.subr.bf16.mxu0 0
        %3201 = vmatpush2.bf16.msra.mxu0 0
        %3202 = vmatprep.subr.bf16.mxu0 0
        %3203 = vmatpush2.bf16.msra.mxu0 0
        %3204 = vmatprep.subr.bf16.mxu0 0
        %3205 = vmatpush2.bf16.msra.mxu0 0
        %3206 = vmatprep.subr.bf16.mxu0 0
        %3207 = vmatpush2.bf16.msra.mxu0 0
        %3208 = vmatprep.subr.bf16.mxu0 0
        %3209 = vmatpush2.bf16.msra.mxu0 0
        %3210 = vmatprep.subr.bf16.mxu0 0
        %3211 = vmatpush2.bf16.msra.mxu0 0
        %3212 = vmatprep.mubr.bf16.mxu0 0
        %3213 = vmatmul.mubr.bf16.gmra.mxu0 %v3113
        %v3214 = vpop.f32.mrf.mxu0
        %v3215 = vadd.f32 0.0, %v3214
        %v3216 = vpop.f32.mrf.mxu0
        %v3217 = vpop.f32.mrf.mxu0
        %v3218 = vadd.f32 0.0, %v3217
        %v3219 = vpop.f32.mrf.mxu0
        %3220 = vmatprep.mubr.bf16.mxu0 0
        %3221 = vmatmul.mubr.bf16.gmra.mxu0 %v3114
        %v3222 = vpop.f32.mrf.mxu0
        %v3223 = vadd.f32 0.0, %v3222
        %v3224 = vpop.f32.mrf.mxu0
        %v3225 = vpop.f32.mrf.mxu0
        %v3226 = vadd.f32 0.0, %v3225
        %v3227 = vpop.f32.mrf.mxu0
        %3228 = vdwg.mxu0
        %v3229 = vadd.f32 %v2436, %v3215
        %v3230 = vadd.f32 %v2437, %v3218
        %v3231 = vadd.f32 %v2438, %v3223
        %v3232 = vadd.f32 %v2439, %v3226
        %v3233 = vlaneseq
        %v3234 = vshrl.u32 %v3233, 7
        %v3235 = vsub.s32 2, %v3234
        %v3236 = vrot.slane %v2441, %v3235
        %v3237 = vadd.f32 %v3229, %v3236
        %v3238 = vadd.f32 %v3230, %v3236
        %v3239 = vadd.f32 %v3231, %v3236
        %v3240 = vadd.f32 %v3232, %v3236
        %3241 = vadd.xlane.f32.xlu0 %v3237
        %v3242 = vpop.xlane.xlu0 %3241
        %3243 = vadd.xlane.f32.xlu0 %v3238
        %v3244 = vpop.xlane.xlu0 %3243
        %3245 = vadd.xlane.f32.xlu0 %v3239
        %v3246 = vpop.xlane.xlu0 %3245
        %3247 = vadd.xlane.f32.xlu0 %v3240
        %v3248 = vpop.xlane.xlu0 %3247
        %v3249 = vmul.f32 %v3242, %v695
        %v3250 = vmul.f32 %v3244, %v695
        %v3251 = vmul.f32 %v3246, %v695
        %v3252 = vmul.f32 %v3248, %v695
        %v3253 = vsub.f32 %v3237, %v3249
        %v3254 = vsub.f32 %v3238, %v3250
        %v3255 = vsub.f32 %v3239, %v3251
        %v3256 = vsub.f32 %v3240, %v3252
        %v3257 = vmul.f32 %v3253, %v3253
        %v3258 = vmul.f32 %v3254, %v3254
        %v3259 = vmul.f32 %v3255, %v3255
        %v3260 = vmul.f32 %v3256, %v3256
        %3261 = vadd.xlane.f32.xlu0 %v3257
        %v3262 = vpop.xlane.xlu0 %3261
        %3263 = vadd.xlane.f32.xlu0 %v3258
        %v3264 = vpop.xlane.xlu0 %3263
        %3265 = vadd.xlane.f32.xlu0 %v3259
        %v3266 = vpop.xlane.xlu0 %3265
        %3267 = vadd.xlane.f32.xlu0 %v3260
        %v3268 = vpop.xlane.xlu0 %3267
        %v3269 = vmul.f32 %v3262, %v695
        %v3270 = vmul.f32 %v3264, %v695
        %v3271 = vmul.f32 %v3266, %v695
        %v3272 = vmul.f32 %v3268, %v695
        %v3273 = vadd.f32 %v3269, 1e-05
        %v3274 = vadd.f32 %v3270, 1e-05
        %v3275 = vadd.f32 %v3271, 1e-05
        %v3276 = vadd.f32 %v3272, 1e-05
        %v3277 = vrsqrt.pop %v3273
        %v3278 = vrsqrt.pop %v3274
        %v3279 = vrsqrt.pop %v3275
        %v3280 = vrsqrt.pop %v3276
        %v3281 = vmul.f32 %v3253, %v3277
        %v3282 = vmul.f32 %v3254, %v3278
        %v3283 = vmul.f32 %v3255, %v3279
        %v3284 = vmul.f32 %v3256, %v3280
        %v3285 = vlaneseq
        %v3286 = vshrl.u32 %v3285, 7
        %v3287 = vsub.s32 3, %v3286
        %v3288 = vrot.slane %v2441, %v3287
        %v3289 = vmul.f32 %v3281, %v3288
        %v3290 = vmul.f32 %v3282, %v3288
        %v3291 = vmul.f32 %v3283, %v3288
        %v3292 = vmul.f32 %v3284, %v3288
        %v3293 = vlaneseq
        %v3294 = vshrl.u32 %v3293, 7
        %v3295 = vsub.s32 4, %v3294
        %v3296 = vrot.slane %v2441, %v3295
        %v3297 = vadd.f32 %v3289, %v3296
        %v3298 = vadd.f32 %v3290, %v3296
        %v3299 = vadd.f32 %v3291, %v3296
        %v3300 = vadd.f32 %v3292, %v3296
        %v3301 = vpack.c.bf16 %v3298, %v3297
        %v3302 = vpack.c.bf16 %v3300, %v3299
        %s3303 = scalar_lea.vmem %s8, 256
        %v3304 = vld [vmem:[%s3303] sm:$0xff]
        %v3305 = vld [vmem:[%s3303 + $0x8] sm:$0xff]
        %v3306 = vld [vmem:[%s3303 + $0x10] sm:$0xff]
        %v3307 = vld [vmem:[%s3303 + $0x18] sm:$0xff]
        %v3308 = vld [vmem:[%s3303 + $0x20] sm:$0xff]
        %v3309 = vld [vmem:[%s3303 + $0x28] sm:$0xff]
        %v3310 = vld [vmem:[%s3303 + $0x30] sm:$0xff]
        %v3311 = vld [vmem:[%s3303 + $0x38] sm:$0xff]
        %v3312 = vld [vmem:[%s3303 + $0x40] sm:$0xff]
        %v3313 = vld [vmem:[%s3303 + $0x48] sm:$0xff]
        %v3314 = vld [vmem:[%s3303 + $0x50] sm:$0xff]
        %v3315 = vld [vmem:[%s3303 + $0x58] sm:$0xff]
        %v3316 = vld [vmem:[%s3303 + $0x60] sm:$0xff]
        %v3317 = vld [vmem:[%s3303 + $0x68] sm:$0xff]
        %v3318 = vld [vmem:[%s3303 + $0x70] sm:$0xff]
        %v3319 = vld [vmem:[%s3303 + $0x78] sm:$0xff]
        %v3320 = vld [vmem:[%s3303 + $0x80] sm:$0xff]
        %v3321 = vld [vmem:[%s3303 + $0x88] sm:$0xff]
        %v3322 = vld [vmem:[%s3303 + $0x90] sm:$0xff]
        %v3323 = vld [vmem:[%s3303 + $0x98] sm:$0xff]
        %v3324 = vld [vmem:[%s3303 + $0xa0] sm:$0xff]
        %v3325 = vld [vmem:[%s3303 + $0xa8] sm:$0xff]
        %v3326 = vld [vmem:[%s3303 + $0xb0] sm:$0xff]
        %v3327 = vld [vmem:[%s3303 + $0xb8] sm:$0xff]
        %v3328 = vld [vmem:[%s3303 + $0xc0] sm:$0xff]
        %v3329 = vld [vmem:[%s3303 + $0xc8] sm:$0xff]
        %v3330 = vld [vmem:[%s3303 + $0xd0] sm:$0xff]
        %v3331 = vld [vmem:[%s3303 + $0xd8] sm:$0xff]
        %v3332 = vld [vmem:[%s3303 + $0xe0] sm:$0xff]
        %v3333 = vld [vmem:[%s3303 + $0xe8] sm:$0xff]
        %v3334 = vld [vmem:[%s3303 + $0xf0] sm:$0xff]
        %v3335 = vld [vmem:[%s3303 + $0xf8] sm:$0xff]
        %s3336 = scalar_lea.vmem %s9, 4
        %v3337 = vld [vmem:[%s3336] sm:$0xf]
        %v3339 = vlaneseq
        %v3340 = vshrl.u32 %v3339, 7
        %v3341 = vsub.s32 0, %v3340
        %v3342 = vrot.slane %v3337, %v3341
        %v3343 = vlaneseq
        %v3344 = vshrl.u32 %v3343, 7
        %v3345 = vsub.s32 1, %v3344
        %v3346 = vrot.slane %v3337, %v3345
        %v3347 = vlaneseq
        %v3348 = vshrl.u32 %v3347, 7
        %v3349 = vsub.s32 2, %v3348
        %v3350 = vrot.slane %v3337, %v3349
        %v3351 = vlaneseq
        %v3352 = vshrl.u32 %v3351, 7
        %v3353 = vsub.s32 3, %v3352
        %v3354 = vrot.slane %v3337, %v3353
        %v3391 = vunpack.c.l.b16 %v3304
        %v3392 = vunpack.c.h.b16 %v3304
        %v3393 = vunpack.c.l.b16 %v3305
        %v3394 = vunpack.c.h.b16 %v3305
        %v3395 = vunpack.c.l.b16 %v3306
        %v3396 = vunpack.c.h.b16 %v3306
        %v3397 = vunpack.c.l.b16 %v3307
        %v3398 = vunpack.c.h.b16 %v3307
        %v3399 = vunpack.c.l.b16 %v3308
        %v3400 = vunpack.c.h.b16 %v3308
        %v3401 = vunpack.c.l.b16 %v3309
        %v3402 = vunpack.c.h.b16 %v3309
        %v3403 = vunpack.c.l.b16 %v3310
        %v3404 = vunpack.c.h.b16 %v3310
        %v3405 = vunpack.c.l.b16 %v3311
        %v3406 = vunpack.c.h.b16 %v3311
        %v3407 = vunpack.c.l.b16 %v3312
        %v3408 = vunpack.c.h.b16 %v3312
        %v3409 = vunpack.c.l.b16 %v3313
        %v3410 = vunpack.c.h.b16 %v3313
        %v3411 = vunpack.c.l.b16 %v3314
        %v3412 = vunpack.c.h.b16 %v3314
        %v3413 = vunpack.c.l.b16 %v3315
        %v3414 = vunpack.c.h.b16 %v3315
        %v3415 = vunpack.c.l.b16 %v3316
        %v3416 = vunpack.c.h.b16 %v3316
        %v3417 = vunpack.c.l.b16 %v3317
        %v3418 = vunpack.c.h.b16 %v3317
        %v3419 = vunpack.c.l.b16 %v3318
        %v3420 = vunpack.c.h.b16 %v3318
        %v3421 = vunpack.c.l.b16 %v3319
        %v3422 = vunpack.c.h.b16 %v3319
        %v3423 = vunpack.c.l.b16 %v3320
        %v3424 = vunpack.c.h.b16 %v3320
        %v3425 = vunpack.c.l.b16 %v3321
        %v3426 = vunpack.c.h.b16 %v3321
        %v3427 = vunpack.c.l.b16 %v3322
        %v3428 = vunpack.c.h.b16 %v3322
        %v3429 = vunpack.c.l.b16 %v3323
        %v3430 = vunpack.c.h.b16 %v3323
        %v3431 = vunpack.c.l.b16 %v3324
        %v3432 = vunpack.c.h.b16 %v3324
        %v3433 = vunpack.c.l.b16 %v3325
        %v3434 = vunpack.c.h.b16 %v3325
        %v3435 = vunpack.c.l.b16 %v3326
        %v3436 = vunpack.c.h.b16 %v3326
        %v3437 = vunpack.c.l.b16 %v3327
        %v3438 = vunpack.c.h.b16 %v3327
        %v3439 = vunpack.c.l.b16 %v3328
        %v3440 = vunpack.c.h.b16 %v3328
        %v3441 = vunpack.c.l.b16 %v3329
        %v3442 = vunpack.c.h.b16 %v3329
        %v3443 = vunpack.c.l.b16 %v3330
        %v3444 = vunpack.c.h.b16 %v3330
        %v3445 = vunpack.c.l.b16 %v3331
        %v3446 = vunpack.c.h.b16 %v3331
        %v3447 = vunpack.c.l.b16 %v3332
        %v3448 = vunpack.c.h.b16 %v3332
        %v3449 = vunpack.c.l.b16 %v3333
        %v3450 = vunpack.c.h.b16 %v3333
        %v3451 = vunpack.c.l.b16 %v3334
        %v3452 = vunpack.c.h.b16 %v3334
        %v3453 = vunpack.c.l.b16 %v3335
        %v3454 = vunpack.c.h.b16 %v3335
        %v3455 = vpack.c.b16 %v3395, %v3391
        %v3456 = vpack.c.b16 %v3396, %v3392
        %v3457 = vpack.c.b16 %v3397, %v3393
        %v3458 = vpack.c.b16 %v3398, %v3394
        %v3459 = vpack.c.b16 %v3403, %v3399
        %v3460 = vpack.c.b16 %v3404, %v3400
        %v3461 = vpack.c.b16 %v3405, %v3401
        %v3462 = vpack.c.b16 %v3406, %v3402
        %v3463 = vpack.c.b16 %v3411, %v3407
        %v3464 = vpack.c.b16 %v3412, %v3408
        %v3465 = vpack.c.b16 %v3413, %v3409
        %v3466 = vpack.c.b16 %v3414, %v3410
        %v3467 = vpack.c.b16 %v3419, %v3415
        %v3468 = vpack.c.b16 %v3420, %v3416
        %v3469 = vpack.c.b16 %v3421, %v3417
        %v3470 = vpack.c.b16 %v3422, %v3418
        %v3471 = vpack.c.b16 %v3427, %v3423
        %v3472 = vpack.c.b16 %v3428, %v3424
        %v3473 = vpack.c.b16 %v3429, %v3425
        %v3474 = vpack.c.b16 %v3430, %v3426
        %v3475 = vpack.c.b16 %v3435, %v3431
        %v3476 = vpack.c.b16 %v3436, %v3432
        %v3477 = vpack.c.b16 %v3437, %v3433
        %v3478 = vpack.c.b16 %v3438, %v3434
        %v3479 = vpack.c.b16 %v3443, %v3439
        %v3480 = vpack.c.b16 %v3444, %v3440
        %v3481 = vpack.c.b16 %v3445, %v3441
        %v3482 = vpack.c.b16 %v3446, %v3442
        %v3483 = vpack.c.b16 %v3451, %v3447
        %v3484 = vpack.c.b16 %v3452, %v3448
        %v3485 = vpack.c.b16 %v3453, %v3449
        %v3486 = vpack.c.b16 %v3454, %v3450
        %3519 = vmatprep.subr.bf16.mxu0 %v3484
        %3520 = vmatpush1.bf16.msra.mxu0 %v3483
        %3521 = vmatprep.subr.bf16.mxu0 %v3480
        %3522 = vmatpush1.bf16.msra.mxu0 %v3479
        %3523 = vmatprep.subr.bf16.mxu0 %v3476
        %3524 = vmatpush1.bf16.msra.mxu0 %v3475
        %3525 = vmatprep.subr.bf16.mxu0 %v3472
        %3526 = vmatpush1.bf16.msra.mxu0 %v3471
        %3527 = vmatprep.subr.bf16.mxu0 %v3468
        %3528 = vmatpush1.bf16.msra.mxu0 %v3467
        %3529 = vmatprep.subr.bf16.mxu0 %v3464
        %3530 = vmatpush1.bf16.msra.mxu0 %v3463
        %3531 = vmatprep.subr.bf16.mxu0 %v3460
        %3532 = vmatpush1.bf16.msra.mxu0 %v3459
        %3533 = vmatprep.subr.bf16.mxu0 %v3456
        %3534 = vmatpush1.bf16.msra.mxu0 %v3455
        %3535 = vmatprep.subr.bf16.mxu0 0
        %3536 = vmatpush2.bf16.msra.mxu0 0
        %3537 = vmatprep.subr.bf16.mxu0 0
        %3538 = vmatpush2.bf16.msra.mxu0 0
        %3539 = vmatprep.subr.bf16.mxu0 0
        %3540 = vmatpush2.bf16.msra.mxu0 0
        %3541 = vmatprep.subr.bf16.mxu0 0
        %3542 = vmatpush2.bf16.msra.mxu0 0
        %3543 = vmatprep.subr.bf16.mxu0 0
        %3544 = vmatpush2.bf16.msra.mxu0 0
        %3545 = vmatprep.subr.bf16.mxu0 0
        %3546 = vmatpush2.bf16.msra.mxu0 0
        %3547 = vmatprep.subr.bf16.mxu0 0
        %3548 = vmatpush2.bf16.msra.mxu0 0
        %3549 = vmatprep.subr.bf16.mxu0 0
        %3550 = vmatpush2.bf16.msra.mxu0 0
        %3551 = vmatprep.mubr.bf16.mxu0 0
        %3552 = vmatmul.mubr.bf16.gmra.mxu0 %v3301
        %v3553 = vpop.f32.mrf.mxu0
        %v3554 = vadd.f32 %v3342, %v3553
        %v3555 = vpop.f32.mrf.mxu0
        %v3556 = vadd.f32 %v3346, %v3555
        %v3557 = vpop.f32.mrf.mxu0
        %v3558 = vadd.f32 %v3342, %v3557
        %v3559 = vpop.f32.mrf.mxu0
        %v3560 = vadd.f32 %v3346, %v3559
        %3561 = vmatprep.mubr.bf16.mxu0 0
        %3562 = vmatmul.mubr.bf16.gmra.mxu0 %v3302
        %v3563 = vpop.f32.mrf.mxu0
        %v3564 = vadd.f32 %v3342, %v3563
        %v3565 = vpop.f32.mrf.mxu0
        %v3566 = vadd.f32 %v3346, %v3565
        %v3567 = vpop.f32.mrf.mxu0
        %v3568 = vadd.f32 %v3342, %v3567
        %v3569 = vpop.f32.mrf.mxu0
        %v3570 = vadd.f32 %v3346, %v3569
        %3571 = vdwg.mxu0
        %3572 = vmatprep.subr.bf16.mxu0 %v3486
        %3573 = vmatpush1.bf16.msra.mxu0 %v3485
        %3574 = vmatprep.subr.bf16.mxu0 %v3482
        %3575 = vmatpush1.bf16.msra.mxu0 %v3481
        %3576 = vmatprep.subr.bf16.mxu0 %v3478
        %3577 = vmatpush1.bf16.msra.mxu0 %v3477
        %3578 = vmatprep.subr.bf16.mxu0 %v3474
        %3579 = vmatpush1.bf16.msra.mxu0 %v3473
        %3580 = vmatprep.subr.bf16.mxu0 %v3470
        %3581 = vmatpush1.bf16.msra.mxu0 %v3469
        %3582 = vmatprep.subr.bf16.mxu0 %v3466
        %3583 = vmatpush1.bf16.msra.mxu0 %v3465
        %3584 = vmatprep.subr.bf16.mxu0 %v3462
        %3585 = vmatpush1.bf16.msra.mxu0 %v3461
        %3586 = vmatprep.subr.bf16.mxu0 %v3458
        %3587 = vmatpush1.bf16.msra.mxu0 %v3457
        %3588 = vmatprep.subr.bf16.mxu0 0
        %3589 = vmatpush2.bf16.msra.mxu0 0
        %3590 = vmatprep.subr.bf16.mxu0 0
        %3591 = vmatpush2.bf16.msra.mxu0 0
        %3592 = vmatprep.subr.bf16.mxu0 0
        %3593 = vmatpush2.bf16.msra.mxu0 0
        %3594 = vmatprep.subr.bf16.mxu0 0
        %3595 = vmatpush2.bf16.msra.mxu0 0
        %3596 = vmatprep.subr.bf16.mxu0 0
        %3597 = vmatpush2.bf16.msra.mxu0 0
        %3598 = vmatprep.subr.bf16.mxu0 0
        %3599 = vmatpush2.bf16.msra.mxu0 0
        %3600 = vmatprep.subr.bf16.mxu0 0
        %3601 = vmatpush2.bf16.msra.mxu0 0
        %3602 = vmatprep.subr.bf16.mxu0 0
        %3603 = vmatpush2.bf16.msra.mxu0 0
        %3604 = vmatprep.mubr.bf16.mxu0 0
        %3605 = vmatmul.mubr.bf16.gmra.mxu0 %v3301
        %v3606 = vpop.f32.mrf.mxu0
        %v3607 = vadd.f32 %v3350, %v3606
        %v3608 = vpop.f32.mrf.mxu0
        %v3609 = vadd.f32 %v3354, %v3608
        %v3610 = vpop.f32.mrf.mxu0
        %v3611 = vadd.f32 %v3350, %v3610
        %v3612 = vpop.f32.mrf.mxu0
        %v3613 = vadd.f32 %v3354, %v3612
        %3614 = vmatprep.mubr.bf16.mxu0 0
        %3615 = vmatmul.mubr.bf16.gmra.mxu0 %v3302
        %v3616 = vpop.f32.mrf.mxu0
        %v3617 = vadd.f32 %v3350, %v3616
        %v3618 = vpop.f32.mrf.mxu0
        %v3619 = vadd.f32 %v3354, %v3618
        %v3620 = vpop.f32.mrf.mxu0
        %v3621 = vadd.f32 %v3350, %v3620
        %v3622 = vpop.f32.mrf.mxu0
        %v3623 = vadd.f32 %v3354, %v3622
        %3624 = vdwg.mxu0
        %v3625 = vmul.f32 %v3554, 0.5
        %v3626 = vmul.f32 %v3556, 0.5
        %v3627 = vmul.f32 %v3607, 0.5
        %v3628 = vmul.f32 %v3609, 0.5
        %v3629 = vmul.f32 %v3558, 0.5
        %v3630 = vmul.f32 %v3560, 0.5
        %v3631 = vmul.f32 %v3611, 0.5
        %v3632 = vmul.f32 %v3613, 0.5
        %v3633 = vmul.f32 %v3564, 0.5
        %v3634 = vmul.f32 %v3566, 0.5
        %v3635 = vmul.f32 %v3617, 0.5
        %v3636 = vmul.f32 %v3619, 0.5
        %v3637 = vmul.f32 %v3568, 0.5
        %v3638 = vmul.f32 %v3570, 0.5
        %v3639 = vmul.f32 %v3621, 0.5
        %v3640 = vmul.f32 %v3623, 0.5
        %v3641 = vmul.f32 %v3554, 0.044715
        %v3642 = vmul.f32 %v3556, 0.044715
        %v3643 = vmul.f32 %v3607, 0.044715
        %v3644 = vmul.f32 %v3609, 0.044715
        %v3645 = vmul.f32 %v3558, 0.044715
        %v3646 = vmul.f32 %v3560, 0.044715
        %v3647 = vmul.f32 %v3611, 0.044715
        %v3648 = vmul.f32 %v3613, 0.044715
        %v3649 = vmul.f32 %v3564, 0.044715
        %v3650 = vmul.f32 %v3566, 0.044715
        %v3651 = vmul.f32 %v3617, 0.044715
        %v3652 = vmul.f32 %v3619, 0.044715
        %v3653 = vmul.f32 %v3568, 0.044715
        %v3654 = vmul.f32 %v3570, 0.044715
        %v3655 = vmul.f32 %v3621, 0.044715
        %v3656 = vmul.f32 %v3623, 0.044715
        %v3657 = vmul.f32 %v3641, %v3554
        %v3658 = vmul.f32 %v3642, %v3556
        %v3659 = vmul.f32 %v3643, %v3607
        %v3660 = vmul.f32 %v3644, %v3609
        %v3661 = vmul.f32 %v3645, %v3558
        %v3662 = vmul.f32 %v3646, %v3560
        %v3663 = vmul.f32 %v3647, %v3611
        %v3664 = vmul.f32 %v3648, %v3613
        %v3665 = vmul.f32 %v3649, %v3564
        %v3666 = vmul.f32 %v3650, %v3566
        %v3667 = vmul.f32 %v3651, %v3617
        %v3668 = vmul.f32 %v3652, %v3619
        %v3669 = vmul.f32 %v3653, %v3568
        %v3670 = vmul.f32 %v3654, %v3570
        %v3671 = vmul.f32 %v3655, %v3621
        %v3672 = vmul.f32 %v3656, %v3623
        %v3673 = vmul.f32 %v3657, %v3554
        %v3674 = vmul.f32 %v3658, %v3556
        %v3675 = vmul.f32 %v3659, %v3607
        %v3676 = vmul.f32 %v3660, %v3609
        %v3677 = vmul.f32 %v3661, %v3558
        %v3678 = vmul.f32 %v3662, %v3560
        %v3679 = vmul.f32 %v3663, %v3611
        %v3680 = vmul.f32 %v3664, %v3613
        %v3681 = vmul.f32 %v3665, %v3564
        %v3682 = vmul.f32 %v3666, %v3566
        %v3683 = vmul.f32 %v3667, %v3617
        %v3684 = vmul.f32 %v3668, %v3619
        %v3685 = vmul.f32 %v3669, %v3568
        %v3686 = vmul.f32 %v3670, %v3570
        %v3687 = vmul.f32 %v3671, %v3621
        %v3688 = vmul.f32 %v3672, %v3623
        %v3689 = vadd.f32 %v3554, %v3673
        %v3690 = vadd.f32 %v3556, %v3674
        %v3691 = vadd.f32 %v3607, %v3675
        %v3692 = vadd.f32 %v3609, %v3676
        %v3693 = vadd.f32 %v3558, %v3677
        %v3694 = vadd.f32 %v3560, %v3678
        %v3695 = vadd.f32 %v3611, %v3679
        %v3696 = vadd.f32 %v3613, %v3680
        %v3697 = vadd.f32 %v3564, %v3681
        %v3698 = vadd.f32 %v3566, %v3682
        %v3699 = vadd.f32 %v3617, %v3683
        %v3700 = vadd.f32 %v3619, %v3684
        %v3701 = vadd.f32 %v3568, %v3685
        %v3702 = vadd.f32 %v3570, %v3686
        %v3703 = vadd.f32 %v3621, %v3687
        %v3704 = vadd.f32 %v3623, %v3688
        %v3705 = vmul.f32 %v3689, 0.7978846
        %v3706 = vmul.f32 %v3690, 0.7978846
        %v3707 = vmul.f32 %v3691, 0.7978846
        %v3708 = vmul.f32 %v3692, 0.7978846
        %v3709 = vmul.f32 %v3693, 0.7978846
        %v3710 = vmul.f32 %v3694, 0.7978846
        %v3711 = vmul.f32 %v3695, 0.7978846
        %v3712 = vmul.f32 %v3696, 0.7978846
        %v3713 = vmul.f32 %v3697, 0.7978846
        %v3714 = vmul.f32 %v3698, 0.7978846
        %v3715 = vmul.f32 %v3699, 0.7978846
        %v3716 = vmul.f32 %v3700, 0.7978846
        %v3717 = vmul.f32 %v3701, 0.7978846
        %v3718 = vmul.f32 %v3702, 0.7978846
        %v3719 = vmul.f32 %v3703, 0.7978846
        %v3720 = vmul.f32 %v3704, 0.7978846
        %v3721 = vtanh.pop %v3705
        %v3722 = vtanh.pop %v3706
        %v3723 = vtanh.pop %v3707
        %v3724 = vtanh.pop %v3708
        %v3725 = vtanh.pop %v3709
        %v3726 = vtanh.pop %v3710
        %v3727 = vtanh.pop %v3711
        %v3728 = vtanh.pop %v3712
        %v3729 = vtanh.pop %v3713
        %v3730 = vtanh.pop %v3714
        %v3731 = vtanh.pop %v3715
        %v3732 = vtanh.pop %v3716
        %v3733 = vtanh.pop %v3717
        %v3734 = vtanh.pop %v3718
        %v3735 = vtanh.pop %v3719
        %v3736 = vtanh.pop %v3720
        %v3737 = vadd.f32 %v3721, 1.0
        %v3738 = vadd.f32 %v3722, 1.0
        %v3739 = vadd.f32 %v3723, 1.0
        %v3740 = vadd.f32 %v3724, 1.0
        %v3741 = vadd.f32 %v3725, 1.0
        %v3742 = vadd.f32 %v3726, 1.0
        %v3743 = vadd.f32 %v3727, 1.0
        %v3744 = vadd.f32 %v3728, 1.0
        %v3745 = vadd.f32 %v3729, 1.0
        %v3746 = vadd.f32 %v3730, 1.0
        %v3747 = vadd.f32 %v3731, 1.0
        %v3748 = vadd.f32 %v3732, 1.0
        %v3749 = vadd.f32 %v3733, 1.0
        %v3750 = vadd.f32 %v3734, 1.0
        %v3751 = vadd.f32 %v3735, 1.0
        %v3752 = vadd.f32 %v3736, 1.0
        %v3753 = vmul.f32 %v3625, %v3737
        %v3754 = vmul.f32 %v3626, %v3738
        %v3755 = vmul.f32 %v3627, %v3739
        %v3756 = vmul.f32 %v3628, %v3740
        %v3757 = vmul.f32 %v3629, %v3741
        %v3758 = vmul.f32 %v3630, %v3742
        %v3759 = vmul.f32 %v3631, %v3743
        %v3760 = vmul.f32 %v3632, %v3744
        %v3761 = vmul.f32 %v3633, %v3745
        %v3762 = vmul.f32 %v3634, %v3746
        %v3763 = vmul.f32 %v3635, %v3747
        %v3764 = vmul.f32 %v3636, %v3748
        %v3765 = vmul.f32 %v3637, %v3749
        %v3766 = vmul.f32 %v3638, %v3750
        %v3767 = vmul.f32 %v3639, %v3751
        %v3768 = vmul.f32 %v3640, %v3752
        %v3769 = vpack.c.bf16 %v3757, %v3753
        %v3770 = vpack.c.bf16 %v3758, %v3754
        %v3771 = vpack.c.bf16 %v3759, %v3755
        %v3772 = vpack.c.bf16 %v3760, %v3756
        %v3773 = vpack.c.bf16 %v3765, %v3761
        %v3774 = vpack.c.bf16 %v3766, %v3762
        %v3775 = vpack.c.bf16 %v3767, %v3763
        %v3776 = vpack.c.bf16 %v3768, %v3764
        %s3777 = scalar_lea.vmem %s10, 256
        %v3778 = vld [vmem:[%s3777] sm:$0xf]
        %v3779 = vld [vmem:[%s3777 + $0x4] sm:$0xf]
        %v3780 = vld [vmem:[%s3777 + $0x8] sm:$0xf]
        %v3781 = vld [vmem:[%s3777 + $0xc] sm:$0xf]
        %v3782 = vld [vmem:[%s3777 + $0x10] sm:$0xf]
        %v3783 = vld [vmem:[%s3777 + $0x14] sm:$0xf]
        %v3784 = vld [vmem:[%s3777 + $0x18] sm:$0xf]
        %v3785 = vld [vmem:[%s3777 + $0x1c] sm:$0xf]
        %v3786 = vld [vmem:[%s3777 + $0x20] sm:$0xf]
        %v3787 = vld [vmem:[%s3777 + $0x24] sm:$0xf]
        %v3788 = vld [vmem:[%s3777 + $0x28] sm:$0xf]
        %v3789 = vld [vmem:[%s3777 + $0x2c] sm:$0xf]
        %v3790 = vld [vmem:[%s3777 + $0x30] sm:$0xf]
        %v3791 = vld [vmem:[%s3777 + $0x34] sm:$0xf]
        %v3792 = vld [vmem:[%s3777 + $0x38] sm:$0xf]
        %v3793 = vld [vmem:[%s3777 + $0x3c] sm:$0xf]
        %v3794 = vld [vmem:[%s3777 + $0x40] sm:$0xf]
        %v3795 = vld [vmem:[%s3777 + $0x44] sm:$0xf]
        %v3796 = vld [vmem:[%s3777 + $0x48] sm:$0xf]
        %v3797 = vld [vmem:[%s3777 + $0x4c] sm:$0xf]
        %v3798 = vld [vmem:[%s3777 + $0x50] sm:$0xf]
        %v3799 = vld [vmem:[%s3777 + $0x54] sm:$0xf]
        %v3800 = vld [vmem:[%s3777 + $0x58] sm:$0xf]
        %v3801 = vld [vmem:[%s3777 + $0x5c] sm:$0xf]
        %v3802 = vld [vmem:[%s3777 + $0x60] sm:$0xf]
        %v3803 = vld [vmem:[%s3777 + $0x64] sm:$0xf]
        %v3804 = vld [vmem:[%s3777 + $0x68] sm:$0xf]
        %v3805 = vld [vmem:[%s3777 + $0x6c] sm:$0xf]
        %v3806 = vld [vmem:[%s3777 + $0x70] sm:$0xf]
        %v3807 = vld [vmem:[%s3777 + $0x74] sm:$0xf]
        %v3808 = vld [vmem:[%s3777 + $0x78] sm:$0xf]
        %v3809 = vld [vmem:[%s3777 + $0x7c] sm:$0xf]
        %v3810 = vld [vmem:[%s3777 + $0x80] sm:$0xf]
        %v3811 = vld [vmem:[%s3777 + $0x84] sm:$0xf]
        %v3812 = vld [vmem:[%s3777 + $0x88] sm:$0xf]
        %v3813 = vld [vmem:[%s3777 + $0x8c] sm:$0xf]
        %v3814 = vld [vmem:[%s3777 + $0x90] sm:$0xf]
        %v3815 = vld [vmem:[%s3777 + $0x94] sm:$0xf]
        %v3816 = vld [vmem:[%s3777 + $0x98] sm:$0xf]
        %v3817 = vld [vmem:[%s3777 + $0x9c] sm:$0xf]
        %v3818 = vld [vmem:[%s3777 + $0xa0] sm:$0xf]
        %v3819 = vld [vmem:[%s3777 + $0xa4] sm:$0xf]
        %v3820 = vld [vmem:[%s3777 + $0xa8] sm:$0xf]
        %v3821 = vld [vmem:[%s3777 + $0xac] sm:$0xf]
        %v3822 = vld [vmem:[%s3777 + $0xb0] sm:$0xf]
        %v3823 = vld [vmem:[%s3777 + $0xb4] sm:$0xf]
        %v3824 = vld [vmem:[%s3777 + $0xb8] sm:$0xf]
        %v3825 = vld [vmem:[%s3777 + $0xbc] sm:$0xf]
        %v3826 = vld [vmem:[%s3777 + $0xc0] sm:$0xf]
        %v3827 = vld [vmem:[%s3777 + $0xc4] sm:$0xf]
        %v3828 = vld [vmem:[%s3777 + $0xc8] sm:$0xf]
        %v3829 = vld [vmem:[%s3777 + $0xcc] sm:$0xf]
        %v3830 = vld [vmem:[%s3777 + $0xd0] sm:$0xf]
        %v3831 = vld [vmem:[%s3777 + $0xd4] sm:$0xf]
        %v3832 = vld [vmem:[%s3777 + $0xd8] sm:$0xf]
        %v3833 = vld [vmem:[%s3777 + $0xdc] sm:$0xf]
        %v3834 = vld [vmem:[%s3777 + $0xe0] sm:$0xf]
        %v3835 = vld [vmem:[%s3777 + $0xe4] sm:$0xf]
        %v3836 = vld [vmem:[%s3777 + $0xe8] sm:$0xf]
        %v3837 = vld [vmem:[%s3777 + $0xec] sm:$0xf]
        %v3838 = vld [vmem:[%s3777 + $0xf0] sm:$0xf]
        %v3839 = vld [vmem:[%s3777 + $0xf4] sm:$0xf]
        %v3840 = vld [vmem:[%s3777 + $0xf8] sm:$0xf]
        %v3841 = vld [vmem:[%s3777 + $0xfc] sm:$0xf]
        %v3842 = vlaneseq
        %v3843 = vshrl.u32 %v3842, 7
        %v3844 = vsub.s32 5, %v3843
        %v3845 = vrot.slane %v2441, %v3844
        %v3910 = vunpack.c.l.b16 %v3778
        %v3911 = vunpack.c.l.b16 %v3779
        %v3912 = vunpack.c.l.b16 %v3780
        %v3913 = vunpack.c.l.b16 %v3781
        %v3914 = vunpack.c.l.b16 %v3782
        %v3915 = vunpack.c.l.b16 %v3783
        %v3916 = vunpack.c.l.b16 %v3784
        %v3917 = vunpack.c.l.b16 %v3785
        %v3918 = vunpack.c.l.b16 %v3786
        %v3919 = vunpack.c.l.b16 %v3787
        %v3920 = vunpack.c.l.b16 %v3788
        %v3921 = vunpack.c.l.b16 %v3789
        %v3922 = vunpack.c.l.b16 %v3790
        %v3923 = vunpack.c.l.b16 %v3791
        %v3924 = vunpack.c.l.b16 %v3792
        %v3925 = vunpack.c.l.b16 %v3793
        %v3926 = vunpack.c.l.b16 %v3794
        %v3927 = vunpack.c.l.b16 %v3795
        %v3928 = vunpack.c.l.b16 %v3796
        %v3929 = vunpack.c.l.b16 %v3797
        %v3930 = vunpack.c.l.b16 %v3798
        %v3931 = vunpack.c.l.b16 %v3799
        %v3932 = vunpack.c.l.b16 %v3800
        %v3933 = vunpack.c.l.b16 %v3801
        %v3934 = vunpack.c.l.b16 %v3802
        %v3935 = vunpack.c.l.b16 %v3803
        %v3936 = vunpack.c.l.b16 %v3804
        %v3937 = vunpack.c.l.b16 %v3805
        %v3938 = vunpack.c.l.b16 %v3806
        %v3939 = vunpack.c.l.b16 %v3807
        %v3940 = vunpack.c.l.b16 %v3808
        %v3941 = vunpack.c.l.b16 %v3809
        %v3942 = vunpack.c.l.b16 %v3810
        %v3943 = vunpack.c.l.b16 %v3811
        %v3944 = vunpack.c.l.b16 %v3812
        %v3945 = vunpack.c.l.b16 %v3813
        %v3946 = vunpack.c.l.b16 %v3814
        %v3947 = vunpack.c.l.b16 %v3815
        %v3948 = vunpack.c.l.b16 %v3816
        %v3949 = vunpack.c.l.b16 %v3817
        %v3950 = vunpack.c.l.b16 %v3818
        %v3951 = vunpack.c.l.b16 %v3819
        %v3952 = vunpack.c.l.b16 %v3820
        %v3953 = vunpack.c.l.b16 %v3821
        %v3954 = vunpack.c.l.b16 %v3822
        %v3955 = vunpack.c.l.b16 %v3823
        %v3956 = vunpack.c.l.b16 %v3824
        %v3957 = vunpack.c.l.b16 %v3825
        %v3958 = vunpack.c.l.b16 %v3826
        %v3959 = vunpack.c.l.b16 %v3827
        %v3960 = vunpack.c.l.b16 %v3828
        %v3961 = vunpack.c.l.b16 %v3829
        %v3962 = vunpack.c.l.b16 %v3830
        %v3963 = vunpack.c.l.b16 %v3831
        %v3964 = vunpack.c.l.b16 %v3832
        %v3965 = vunpack.c.l.b16 %v3833
        %v3966 = vunpack.c.l.b16 %v3834
        %v3967 = vunpack.c.l.b16 %v3835
        %v3968 = vunpack.c.l.b16 %v3836
        %v3969 = vunpack.c.l.b16 %v3837
        %v3970 = vunpack.c.l.b16 %v3838
        %v3971 = vunpack.c.l.b16 %v3839
        %v3972 = vunpack.c.l.b16 %v3840
        %v3973 = vunpack.c.l.b16 %v3841
        %v3974 = vpack.c.b16 %v3911, %v3910
        %v3975 = vpack.c.b16 %v3913, %v3912
        %v3976 = vpack.c.b16 %v3915, %v3914
        %v3977 = vpack.c.b16 %v3917, %v3916
        %v3978 = vpack.c.b16 %v3919, %v3918
        %v3979 = vpack.c.b16 %v3921, %v3920
        %v3980 = vpack.c.b16 %v3923, %v3922
        %v3981 = vpack.c.b16 %v3925, %v3924
        %v3982 = vpack.c.b16 %v3927, %v3926
        %v3983 = vpack.c.b16 %v3929, %v3928
        %v3984 = vpack.c.b16 %v3931, %v3930
        %v3985 = vpack.c.b16 %v3933, %v3932
        %v3986 = vpack.c.b16 %v3935, %v3934
        %v3987 = vpack.c.b16 %v3937, %v3936
        %v3988 = vpack.c.b16 %v3939, %v3938
        %v3989 = vpack.c.b16 %v3941, %v3940
        %v3990 = vpack.c.b16 %v3943, %v3942
        %v3991 = vpack.c.b16 %v3945, %v3944
        %v3992 = vpack.c.b16 %v3947, %v3946
        %v3993 = vpack.c.b16 %v3949, %v3948
        %v3994 = vpack.c.b16 %v3951, %v3950
        %v3995 = vpack.c.b16 %v3953, %v3952
        %v3996 = vpack.c.b16 %v3955, %v3954
        %v3997 = vpack.c.b16 %v3957, %v3956
        %v3998 = vpack.c.b16 %v3959, %v3958
        %v3999 = vpack.c.b16 %v3961, %v3960
        %v4000 = vpack.c.b16 %v3963, %v3962
        %v4001 = vpack.c.b16 %v3965, %v3964
        %v4002 = vpack.c.b16 %v3967, %v3966
        %v4003 = vpack.c.b16 %v3969, %v3968
        %v4004 = vpack.c.b16 %v3971, %v3970
        %v4005 = vpack.c.b16 %v3973, %v3972
        %4038 = vmatprep.subr.bf16.mxu0 0
        %4039 = vmatpush1.bf16.msra.mxu0 %v3981
        %4040 = vmatprep.subr.bf16.mxu0 0
        %4041 = vmatpush1.bf16.msra.mxu0 %v3980
        %4042 = vmatprep.subr.bf16.mxu0 0
        %4043 = vmatpush1.bf16.msra.mxu0 %v3979
        %4044 = vmatprep.subr.bf16.mxu0 0
        %4045 = vmatpush1.bf16.msra.mxu0 %v3978
        %4046 = vmatprep.subr.bf16.mxu0 0
        %4047 = vmatpush1.bf16.msra.mxu0 %v3977
        %4048 = vmatprep.subr.bf16.mxu0 0
        %4049 = vmatpush1.bf16.msra.mxu0 %v3976
        %4050 = vmatprep.subr.bf16.mxu0 0
        %4051 = vmatpush1.bf16.msra.mxu0 %v3975
        %4052 = vmatprep.subr.bf16.mxu0 0
        %4053 = vmatpush1.bf16.msra.mxu0 %v3974
        %4054 = vmatprep.subr.bf16.mxu0 0
        %4055 = vmatpush2.bf16.msra.mxu0 %v3989
        %4056 = vmatprep.subr.bf16.mxu0 0
        %4057 = vmatpush2.bf16.msra.mxu0 %v3988
        %4058 = vmatprep.subr.bf16.mxu0 0
        %4059 = vmatpush2.bf16.msra.mxu0 %v3987
        %4060 = vmatprep.subr.bf16.mxu0 0
        %4061 = vmatpush2.bf16.msra.mxu0 %v3986
        %4062 = vmatprep.subr.bf16.mxu0 0
        %4063 = vmatpush2.bf16.msra.mxu0 %v3985
        %4064 = vmatprep.subr.bf16.mxu0 0
        %4065 = vmatpush2.bf16.msra.mxu0 %v3984
        %4066 = vmatprep.subr.bf16.mxu0 0
        %4067 = vmatpush2.bf16.msra.mxu0 %v3983
        %4068 = vmatprep.subr.bf16.mxu0 0
        %4069 = vmatpush2.bf16.msra.mxu0 %v3982
        %4070 = vmatprep.mubr.bf16.mxu0 %v3770
        %4071 = vmatmul.mubr.bf16.gmra.mxu0 %v3769
        %v4072 = vpop.f32.mrf.mxu0
        %v4073 = vadd.f32 %v3845, %v4072
        %v4074 = vpop.f32.mrf.mxu0
        %v4075 = vpop.f32.mrf.mxu0
        %v4076 = vadd.f32 %v3845, %v4075
        %v4077 = vpop.f32.mrf.mxu0
        %4078 = vmatprep.mubr.bf16.mxu0 %v3774
        %4079 = vmatmul.mubr.bf16.gmra.mxu0 %v3773
        %v4080 = vpop.f32.mrf.mxu0
        %v4081 = vadd.f32 %v3845, %v4080
        %v4082 = vpop.f32.mrf.mxu0
        %v4083 = vpop.f32.mrf.mxu0
        %v4084 = vadd.f32 %v3845, %v4083
        %v4085 = vpop.f32.mrf.mxu0
        %4086 = vdwg.mxu0
        %4087 = vmatprep.subr.bf16.mxu0 0
        %4088 = vmatpush1.bf16.msra.mxu0 %v3997
        %4089 = vmatprep.subr.bf16.mxu0 0
        %4090 = vmatpush1.bf16.msra.mxu0 %v3996
        %4091 = vmatprep.subr.bf16.mxu0 0
        %4092 = vmatpush1.bf16.msra.mxu0 %v3995
        %4093 = vmatprep.subr.bf16.mxu0 0
        %4094 = vmatpush1.bf16.msra.mxu0 %v3994
        %4095 = vmatprep.subr.bf16.mxu0 0
        %4096 = vmatpush1.bf16.msra.mxu0 %v3993
        %4097 = vmatprep.subr.bf16.mxu0 0
        %4098 = vmatpush1.bf16.msra.mxu0 %v3992
        %4099 = vmatprep.subr.bf16.mxu0 0
        %4100 = vmatpush1.bf16.msra.mxu0 %v3991
        %4101 = vmatprep.subr.bf16.mxu0 0
        %4102 = vmatpush1.bf16.msra.mxu0 %v3990
        %4103 = vmatprep.subr.bf16.mxu0 0
        %4104 = vmatpush2.bf16.msra.mxu0 %v4005
        %4105 = vmatprep.subr.bf16.mxu0 0
        %4106 = vmatpush2.bf16.msra.mxu0 %v4004
        %4107 = vmatprep.subr.bf16.mxu0 0
        %4108 = vmatpush2.bf16.msra.mxu0 %v4003
        %4109 = vmatprep.subr.bf16.mxu0 0
        %4110 = vmatpush2.bf16.msra.mxu0 %v4002
        %4111 = vmatprep.subr.bf16.mxu0 0
        %4112 = vmatpush2.bf16.msra.mxu0 %v4001
        %4113 = vmatprep.subr.bf16.mxu0 0
        %4114 = vmatpush2.bf16.msra.mxu0 %v4000
        %4115 = vmatprep.subr.bf16.mxu0 0
        %4116 = vmatpush2.bf16.msra.mxu0 %v3999
        %4117 = vmatprep.subr.bf16.mxu0 0
        %4118 = vmatpush2.bf16.msra.mxu0 %v3998
        %4119 = vmatprep.mubr.bf16.mxu0 %v3772
        %4120 = vmatmul.mubr.bf16.gmra.mxu0 %v3771
        %v4121 = vpop.f32.mrf.mxu0
        %v4122 = vadd.f32 %v4073, %v4121
        %v4123 = vpop.f32.mrf.mxu0
        %v4124 = vpop.f32.mrf.mxu0
        %v4125 = vadd.f32 %v4076, %v4124
        %v4126 = vpop.f32.mrf.mxu0
        %4127 = vmatprep.mubr.bf16.mxu0 %v3776
        %4128 = vmatmul.mubr.bf16.gmra.mxu0 %v3775
        %v4129 = vpop.f32.mrf.mxu0
        %v4130 = vadd.f32 %v4081, %v4129
        %v4131 = vpop.f32.mrf.mxu0
        %v4132 = vpop.f32.mrf.mxu0
        %v4133 = vadd.f32 %v4084, %v4132
        %v4134 = vpop.f32.mrf.mxu0
        %4135 = vdwg.mxu0
        %v4136 = vadd.f32 %v3237, %v4122
        %v4137 = vadd.f32 %v3238, %v4125
        %v4138 = vadd.f32 %v3239, %v4130
        %v4139 = vadd.f32 %v3240, %v4133
        %v4140 = vld [vmem:[%s12] sm:$0xf]
        %4141 = vadd.xlane.f32.xlu0 %v4136
        %v4142 = vpop.xlane.xlu0 %4141
        %4143 = vadd.xlane.f32.xlu0 %v4137
        %v4144 = vpop.xlane.xlu0 %4143
        %4145 = vadd.xlane.f32.xlu0 %v4138
        %v4146 = vpop.xlane.xlu0 %4145
        %4147 = vadd.xlane.f32.xlu0 %v4139
        %v4148 = vpop.xlane.xlu0 %4147
        %v4149 = vmul.f32 %v4142, %v695
        %v4150 = vmul.f32 %v4144, %v695
        %v4151 = vmul.f32 %v4146, %v695
        %v4152 = vmul.f32 %v4148, %v695
        %v4153 = vsub.f32 %v4136, %v4149
        %v4154 = vsub.f32 %v4137, %v4150
        %v4155 = vsub.f32 %v4138, %v4151
        %v4156 = vsub.f32 %v4139, %v4152
        %v4157 = vmul.f32 %v4153, %v4153
        %v4158 = vmul.f32 %v4154, %v4154
        %v4159 = vmul.f32 %v4155, %v4155
        %v4160 = vmul.f32 %v4156, %v4156
        %4161 = vadd.xlane.f32.xlu0 %v4157
        %v4162 = vpop.xlane.xlu0 %4161
        %4163 = vadd.xlane.f32.xlu0 %v4158
        %v4164 = vpop.xlane.xlu0 %4163
        %4165 = vadd.xlane.f32.xlu0 %v4159
        %v4166 = vpop.xlane.xlu0 %4165
        %4167 = vadd.xlane.f32.xlu0 %v4160
        %v4168 = vpop.xlane.xlu0 %4167
        %v4169 = vmul.f32 %v4162, %v695
        %v4170 = vmul.f32 %v4164, %v695
        %v4171 = vmul.f32 %v4166, %v695
        %v4172 = vmul.f32 %v4168, %v695
        %v4173 = vadd.f32 %v4169, 1e-05
        %v4174 = vadd.f32 %v4170, 1e-05
        %v4175 = vadd.f32 %v4171, 1e-05
        %v4176 = vadd.f32 %v4172, 1e-05
        %v4177 = vrsqrt.pop %v4173
        %v4178 = vrsqrt.pop %v4174
        %v4179 = vrsqrt.pop %v4175
        %v4180 = vrsqrt.pop %v4176
        %v4181 = vmul.f32 %v4153, %v4177
        %v4182 = vmul.f32 %v4154, %v4178
        %v4183 = vmul.f32 %v4155, %v4179
        %v4184 = vmul.f32 %v4156, %v4180
        %v4185 = vlaneseq
        %v4186 = vshrl.u32 %v4185, 7
        %v4187 = vsub.s32 0, %v4186
        %v4188 = vrot.slane %v4140, %v4187
        %v4189 = vmul.f32 %v4181, %v4188
        %v4190 = vmul.f32 %v4182, %v4188
        %v4191 = vmul.f32 %v4183, %v4188
        %v4192 = vmul.f32 %v4184, %v4188
        %v4193 = vlaneseq
        %v4194 = vshrl.u32 %v4193, 7
        %v4195 = vsub.s32 1, %v4194
        %v4196 = vrot.slane %v4140, %v4195
        %v4197 = vadd.f32 %v4189, %v4196
        %v4198 = vadd.f32 %v4190, %v4196
        %v4199 = vadd.f32 %v4191, %v4196
        %v4200 = vadd.f32 %v4192, %v4196
        %v4201 = vadd.f32 %v4197, %v4198
        %v4202 = vadd.f32 %v4201, %v4199
        %v4203 = vadd.f32 %v4202, %v4200
        %v4204 = vrot.slane %v4203, 4
        %v4205 = vadd.f32 %v4203, %v4204
        %v4206 = vrot.slane %v4205, 2
        %v4207 = vadd.f32 %v4205, %v4206
        %v4208 = vrot.slane %v4207, 1
        %v4209 = vadd.f32 %v4207, %v4208
        %v4210 = vrcp.pop 32.0
        %v4211 = vmul.f32 %v4209, %v4210
        %4212 = vadd.xlane.f32.xlu0 %v4211
        %v4213 = vpop.xlane.xlu0 %4212
        %v4214 = vmul.f32 %v4213, %v695
        %v4215 = vsub.f32 %v4211, %v4214
        %v4216 = vmul.f32 %v4215, %v4215
        %4217 = vadd.xlane.f32.xlu0 %v4216
        %v4218 = vpop.xlane.xlu0 %4217
        %v4219 = vmul.f32 %v4218, %v695
        %v4220 = vadd.f32 %v4219, 1e-05
        %v4221 = vrsqrt.pop %v4220
        %v4222 = vmul.f32 %v4215, %v4221
        %v4223 = vmul.f32 %v4222, %v4140
        %v4225 = vrot.slane %v4140, 1
        %v4227 = vadd.f32 %v4223, %v4225
        %v4228 = vld [vmem:[%s13] sm:$0xf]
        %v4229 = vld [vmem:[%s13 + $0x4] sm:$0xf]
        %v4230 = vld [vmem:[%s13 + $0x8] sm:$0xf]
        %v4231 = vld [vmem:[%s13 + $0xc] sm:$0xf]
        %v4232 = vld [vmem:[%s13 + $0x10] sm:$0xf]
        %v4233 = vld [vmem:[%s13 + $0x14] sm:$0xf]
        %v4234 = vld [vmem:[%s13 + $0x18] sm:$0xf]
        %v4235 = vld [vmem:[%s13 + $0x1c] sm:$0xf]
        %v4236 = vld [vmem:[%s13 + $0x20] sm:$0xf]
        %v4237 = vld [vmem:[%s13 + $0x24] sm:$0xf]
        %v4238 = vld [vmem:[%s13 + $0x28] sm:$0xf]
        %v4239 = vld [vmem:[%s13 + $0x2c] sm:$0xf]
        %v4240 = vld [vmem:[%s13 + $0x30] sm:$0xf]
        %v4241 = vld [vmem:[%s13 + $0x34] sm:$0xf]
        %v4242 = vld [vmem:[%s13 + $0x38] sm:$0xf]
        %v4243 = vld [vmem:[%s13 + $0x3c] sm:$0xf]
        %v4244 = vld [vmem:[%s14] sm:$0x1]
        %v4245 = vpack.c.bf16 %v4227, %v4227
        %v4247 = vrot.slane %v4245, 1
        %v4265 = vunpack.c.l.b16 %v4228
        %v4266 = vunpack.c.l.b16 %v4229
        %v4267 = vunpack.c.l.b16 %v4230
        %v4268 = vunpack.c.l.b16 %v4231
        %v4269 = vunpack.c.l.b16 %v4232
        %v4270 = vunpack.c.l.b16 %v4233
        %v4271 = vunpack.c.l.b16 %v4234
        %v4272 = vunpack.c.l.b16 %v4235
        %v4273 = vunpack.c.l.b16 %v4236
        %v4274 = vunpack.c.l.b16 %v4237
        %v4275 = vunpack.c.l.b16 %v4238
        %v4276 = vunpack.c.l.b16 %v4239
        %v4277 = vunpack.c.l.b16 %v4240
        %v4278 = vunpack.c.l.b16 %v4241
        %v4279 = vunpack.c.l.b16 %v4242
        %v4280 = vunpack.c.l.b16 %v4243
        %v4281 = vpack.c.b16 %v4266, %v4265
        %v4282 = vpack.c.b16 %v4268, %v4267
        %v4283 = vpack.c.b16 %v4270, %v4269
        %v4284 = vpack.c.b16 %v4272, %v4271
        %v4285 = vpack.c.b16 %v4274, %v4273
        %v4286 = vpack.c.b16 %v4276, %v4275
        %v4287 = vpack.c.b16 %v4278, %v4277
        %v4288 = vpack.c.b16 %v4280, %v4279
        %4297 = vmatprep.subr.bf16.mxu0 0
        %4298 = vmatpush1.bf16.msra.mxu0 %v4288
        %4299 = vmatprep.subr.bf16.mxu0 0
        %4300 = vmatpush1.bf16.msra.mxu0 %v4287
        %4301 = vmatprep.subr.bf16.mxu0 0
        %4302 = vmatpush1.bf16.msra.mxu0 %v4286
        %4303 = vmatprep.subr.bf16.mxu0 0
        %4304 = vmatpush1.bf16.msra.mxu0 %v4285
        %4305 = vmatprep.subr.bf16.mxu0 0
        %4306 = vmatpush1.bf16.msra.mxu0 %v4284
        %4307 = vmatprep.subr.bf16.mxu0 0
        %4308 = vmatpush1.bf16.msra.mxu0 %v4283
        %4309 = vmatprep.subr.bf16.mxu0 0
        %4310 = vmatpush1.bf16.msra.mxu0 %v4282
        %4311 = vmatprep.subr.bf16.mxu0 0
        %4312 = vmatpush1.bf16.msra.mxu0 %v4281
        %4313 = vmatprep.subr.bf16.mxu0 0
        %4314 = vmatpush2.bf16.msra.mxu0 0
        %4315 = vmatprep.subr.bf16.mxu0 0
        %4316 = vmatpush2.bf16.msra.mxu0 0
        %4317 = vmatprep.subr.bf16.mxu0 0
        %4318 = vmatpush2.bf16.msra.mxu0 0
        %4319 = vmatprep.subr.bf16.mxu0 0
        %4320 = vmatpush2.bf16.msra.mxu0 0
        %4321 = vmatprep.subr.bf16.mxu0 0
        %4322 = vmatpush2.bf16.msra.mxu0 0
        %4323 = vmatprep.subr.bf16.mxu0 0
        %4324 = vmatpush2.bf16.msra.mxu0 0
        %4325 = vmatprep.subr.bf16.mxu0 0
        %4326 = vmatpush2.bf16.msra.mxu0 0
        %4327 = vmatprep.subr.bf16.mxu0 0
        %4328 = vmatpush2.bf16.msra.mxu0 0
        %4329 = vmatprep.mubr.bf16.mxu0 0
        %4330 = vmatmul.mubr.bf16.gmra.mxu0 %v4247
        %v4331 = vpop.f32.mrf.mxu0
        %v4332 = vadd.f32 %v4244, %v4331
        %v4333 = vpop.f32.mrf.mxu0
        %v4334 = vpop.f32.mrf.mxu0
        %v4335 = vpop.f32.mrf.mxu0
        %4336 = vdwg.mxu0
        %v4337 = vmax.f32 %v4332, 0.0
        %v4338 = vld [vmem:[%s15] sm:$0xf]
        %v4339 = vld [vmem:[%s15 + $0x4] sm:$0xf]
        %v4340 = vld [vmem:[%s15 + $0x8] sm:$0xf]
        %v4341 = vld [vmem:[%s15 + $0xc] sm:$0xf]
        %v4342 = vld [vmem:[%s15 + $0x10] sm:$0xf]
        %v4343 = vld [vmem:[%s15 + $0x14] sm:$0xf]
        %v4344 = vld [vmem:[%s15 + $0x18] sm:$0xf]
        %v4345 = vld [vmem:[%s15 + $0x1c] sm:$0xf]
        %v4346 = vld [vmem:[%s15 + $0x20] sm:$0xf]
        %v4347 = vld [vmem:[%s15 + $0x24] sm:$0xf]
        %v4348 = vld [vmem:[%s15 + $0x28] sm:$0xf]
        %v4349 = vld [vmem:[%s15 + $0x2c] sm:$0xf]
        %v4350 = vld [vmem:[%s15 + $0x30] sm:$0xf]
        %v4351 = vld [vmem:[%s15 + $0x34] sm:$0xf]
        %v4352 = vld [vmem:[%s15 + $0x38] sm:$0xf]
        %v4353 = vld [vmem:[%s15 + $0x3c] sm:$0xf]
        %v4354 = vld [vmem:[%s16] sm:$0x1]
        %v4355 = vpack.c.bf16 %v4337, %v4337
        %v4372 = vunpack.c.l.b16 %v4338
        %v4373 = vunpack.c.l.b16 %v4339
        %v4374 = vunpack.c.l.b16 %v4340
        %v4375 = vunpack.c.l.b16 %v4341
        %v4376 = vunpack.c.l.b16 %v4342
        %v4377 = vunpack.c.l.b16 %v4343
        %v4378 = vunpack.c.l.b16 %v4344
        %v4379 = vunpack.c.l.b16 %v4345
        %v4380 = vunpack.c.l.b16 %v4346
        %v4381 = vunpack.c.l.b16 %v4347
        %v4382 = vunpack.c.l.b16 %v4348
        %v4383 = vunpack.c.l.b16 %v4349
        %v4384 = vunpack.c.l.b16 %v4350
        %v4385 = vunpack.c.l.b16 %v4351
        %v4386 = vunpack.c.l.b16 %v4352
        %v4387 = vunpack.c.l.b16 %v4353
        %v4388 = vpack.c.b16 %v4373, %v4372
        %v4389 = vpack.c.b16 %v4375, %v4374
        %v4390 = vpack.c.b16 %v4377, %v4376
        %v4391 = vpack.c.b16 %v4379, %v4378
        %v4392 = vpack.c.b16 %v4381, %v4380
        %v4393 = vpack.c.b16 %v4383, %v4382
        %v4394 = vpack.c.b16 %v4385, %v4384
        %v4395 = vpack.c.b16 %v4387, %v4386
        %4404 = vmatprep.subr.bf16.mxu0 0
        %4405 = vmatpush1.bf16.msra.mxu0 %v4395
        %4406 = vmatprep.subr.bf16.mxu0 0
        %4407 = vmatpush1.bf16.msra.mxu0 %v4394
        %4408 = vmatprep.subr.bf16.mxu0 0
        %4409 = vmatpush1.bf16.msra.mxu0 %v4393
        %4410 = vmatprep.subr.bf16.mxu0 0
        %4411 = vmatpush1.bf16.msra.mxu0 %v4392
        %4412 = vmatprep.subr.bf16.mxu0 0
        %4413 = vmatpush1.bf16.msra.mxu0 %v4391
        %4414 = vmatprep.subr.bf16.mxu0 0
        %4415 = vmatpush1.bf16.msra.mxu0 %v4390
        %4416 = vmatprep.subr.bf16.mxu0 0
        %4417 = vmatpush1.bf16.msra.mxu0 %v4389
        %4418 = vmatprep.subr.bf16.mxu0 0
        %4419 = vmatpush1.bf16.msra.mxu0 %v4388
        %4420 = vmatprep.subr.bf16.mxu0 0
        %4421 = vmatpush2.bf16.msra.mxu0 0
        %4422 = vmatprep.subr.bf16.mxu0 0
        %4423 = vmatpush2.bf16.msra.mxu0 0
        %4424 = vmatprep.subr.bf16.mxu0 0
        %4425 = vmatpush2.bf16.msra.mxu0 0
        %4426 = vmatprep.subr.bf16.mxu0 0
        %4427 = vmatpush2.bf16.msra.mxu0 0
        %4428 = vmatprep.subr.bf16.mxu0 0
        %4429 = vmatpush2.bf16.msra.mxu0 0
        %4430 = vmatprep.subr.bf16.mxu0 0
        %4431 = vmatpush2.bf16.msra.mxu0 0
        %4432 = vmatprep.subr.bf16.mxu0 0
        %4433 = vmatpush2.bf16.msra.mxu0 0
        %4434 = vmatprep.subr.bf16.mxu0 0
        %4435 = vmatpush2.bf16.msra.mxu0 0
        %4436 = vmatprep.mubr.bf16.mxu0 0
        %4437 = vmatmul.mubr.bf16.gmra.mxu0 %v4355
        %v4438 = vpop.f32.mrf.mxu0
        %v4439 = vadd.f32 %v4354, %v4438
        %v4440 = vpop.f32.mrf.mxu0
        %v4441 = vpop.f32.mrf.mxu0
        %v4442 = vpop.f32.mrf.mxu0
        %4443 = vdwg.mxu0
        %4444 = vst [vmem:[%s540] sm:$0x1] %v4439
        %s4445 = sand.u32 %s401, 1
        %s4446 = scalar_lea.sflag [#allocation3], %s4445
        %s4447 = sand.u32 %s401, 1
        %s4448 = scalar_lea.vmem [#allocation2], %s4447
        // Predicated region
        $region89: #{video_encoder_forward.1} parent=87 // pred_check
          %p4449 = pneg %p411
        $region90: #{video_encoder_forward.1} parent=87 // pred_check_branch
          %4451 = sbr.rel (%p4449) target = $region92
        $region91: #{video_encoder_forward.1} parent=87 // pred_region
          %s4453 = ssub.s32 16, 16
          %4454 = vsyncadd %s4446, %s4453
          %s4455 = smul.addr %s31, 16
          %s4456 = scalar_lea.hbm %s17, %s4455
          %s4458 = sshll.u32 %s4448, 4
          %s4459 = int_to_ptr.vmem [resolvable:$true] %s4458
          %4461 = dma.vmem_to_hbm [thread:$0]  %s4459, 16, %s4456, %s4446
        $region92: #{video_encoder_forward.1} parent=87 // pred_fallthru
          _
      $region88: #{video_encoder_forward.1} parent=5 // pred_fallthru
        _
      %p4462 = scmp.le.s32.totalorder 2, %s26
      // Predicated region
      $region93: #{video_encoder_forward.1} parent=5 // pred_check
        %p4463 = pneg %p4462
      $region94: #{video_encoder_forward.1} parent=5 // pred_check_branch
        %4465 = sbr.rel (%p4463) target = $region96
      $region95: #{video_encoder_forward.1} parent=5 // pred_region
        %s4466 = ssub.s32 %s26, 2
        // Predicated region
        $region97: #{video_encoder_forward.1} parent=95 // pred_check
          %p4467 = pneg %p417
        $region98: #{video_encoder_forward.1} parent=95 // pred_check_branch
          %4469 = sbr.rel (%p4467) target = $region100
        $region99: #{video_encoder_forward.1} parent=95 // pred_region
          %s4470 = sand.u32 %s402, 1
          %s4471 = scalar_lea.sflag [#allocation3], %s4470
          %s4472 = sand.u32 %s402, 1
          %s4473 = scalar_lea.vmem [#allocation2], %s4472
          %4474 = dma.done %s4471, 16
        $region100: #{video_encoder_forward.1} parent=95 // pred_fallthru
          _
      $region96: #{video_encoder_forward.1} parent=5 // pred_fallthru
        _
    $region6: #{video_encoder_forward.1} parent=1 // loop_footer
      %s30 = sadd.s32 1, %s26
    $region7: #{video_encoder_forward.1} parent=1 // loop_footer_branch
      %25 = sbr.rel target = $region3
    $region8: #{video_encoder_forward.1} parent=1 // loop_exit
      _
    %4475 = vsyncpa [#allocation3], 1
    %s4476 = scalar_lea.sflag [#allocation3], 1
    %4477 = vsyncpa %s4476, 1

</llo_original>
